<compile_context>
chip_gen: v7x
topology: tpu7x:2x2x1
jax: 0.10.0
libtpu: 0.0.40
codegen_flags: <defaults>
</compile_context>

<pallas_src>
import jax
import jax.numpy as jnp
from jax.experimental import pallas as pl
from jax.experimental.pallas import tpu as pltpu

# Logical (in, out) dims of the 5 Linear layers.
_DIMS = [(784, 640), (640, 16), (16, 256), (256, 640), (640, 784)]
_FEAT = 784
_FEAT_PAD = 896  # 7 * 128 -> lane-dense input loads / output stores
# Padded dims actually seen by the kernel.
_PDIMS = [(_FEAT_PAD, 640), (640, 16), (16, 256), (256, 640), (640, _FEAT_PAD)]


def autoencoder_kernel(
    x_ref,
    w1_ref, b1_ref,   # encoder Linear(784->640)   (padded to 896 in-rows)
    w2_ref, b2_ref,   # encoder Linear(640->16)
    w3_ref, b3_ref,   # decoder Linear(16->256)
    w4_ref, b4_ref,   # decoder Linear(256->640)
    w5_ref, b5_ref,   # decoder Linear(640->784)   (padded to 896 out-cols)
    out_ref,
):
    # bf16 matmul inputs -> native MXU bf16 path; f32 accumulation + f32 bias.
    def dense(h, w_ref, b_ref):
        return jnp.dot(h.astype(jnp.bfloat16), w_ref[...],
                       preferred_element_type=jnp.float32) + b_ref[...]

    x = x_ref[...]

    # --- encoder ---
    h = jnp.maximum(dense(x, w1_ref, b1_ref), 0.0)        # Linear + ReLU
    enc = dense(h, w2_ref, b2_ref)                        # Linear (bottleneck)

    # --- decoder ---
    h = jnp.maximum(dense(enc, w3_ref, b3_ref), 0.0)      # Linear + ReLU
    h = jnp.maximum(dense(h, w4_ref, b4_ref), 0.0)        # Linear + ReLU
    out_ref[...] = jnp.tanh(dense(h, w5_ref, b5_ref))     # Linear + Tanh


def _round_up(n, m):
    return (n + m - 1) // m * m


def autoencoder_forward(x_nchw, params, *, tb=256):
    """x_nchw: (B, 1, 28, 28) float32 -> (B, 1, 28, 28) float32."""
    B = x_nchw.shape[0]
    x_flat = x_nchw.reshape(B, _FEAT).astype(jnp.float32)   # nn.Flatten()

    # Batch tile: at most `tb` rows, multiple of 8 (sublane); pad B up to it.
    TB = min(tb, _round_up(B, 8))
    Bp = _round_up(B, TB)

    # Pad batch to whole tiles and features to 896 lanes; feed bf16 activations
    # (they are cast to bf16 before the first matmul anyway -> halves x bytes).
    x_flat = jnp.pad(
        x_flat, ((0, Bp - B), (0, _FEAT_PAD - _FEAT))).astype(jnp.bfloat16)

    (w1, b1), (w2, b2), (w3, b3), (w4, b4), (w5, b5) = params
    # Zero-pad W1 input rows and W5/b5 output columns to the 896-lane layout.
    w1p = jnp.pad(w1, ((0, _FEAT_PAD - _FEAT), (0, 0)))
    w5p = jnp.pad(w5, ((0, 0), (0, _FEAT_PAD - _FEAT)))
    b5p = jnp.pad(b5, ((0, 0), (0, _FEAT_PAD - _FEAT)))
    padded_params = [(w1p, b1), (w2, b2), (w3, b3), (w4, b4), (w5p, b5p)]

    # Weights in bf16 (halves HBM weight bytes), biases in f32.
    operands = []
    for w, b in padded_params:
        operands.append(w.astype(jnp.bfloat16))
        operands.append(b.astype(jnp.float32))

    # Activation tiles walk the batch grid; weights/biases use a constant
    # index_map -> DMA'd once, resident in VMEM across all grid steps.
    x_spec = pl.BlockSpec((TB, _FEAT_PAD), lambda i: (i, 0))
    wb_specs = []
    for fi, fo in _PDIMS:
        wb_specs.append(pl.BlockSpec((fi, fo), lambda i: (0, 0)))   # weight
        wb_specs.append(pl.BlockSpec((1, fo), lambda i: (0, 0)))    # bias

    flops_per_row = 2 * sum(fi * fo for fi, fo in _PDIMS)           # ~2.6 MFLOP/row
    weight_bytes = sum(fi * fo * 2 + fo * 4 for fi, fo in _PDIMS)   # bf16 W + f32 b
    cost = pl.CostEstimate(
        flops=flops_per_row * Bp,
        transcendentals=_FEAT_PAD * Bp,                              # tanh
        bytes_accessed=weight_bytes + Bp * _FEAT_PAD * (2 + 4),      # bf16 x + f32 out
    )

    out_flat = pl.pallas_call(
        autoencoder_kernel,
        out_shape=jax.ShapeDtypeStruct((Bp, _FEAT_PAD), jnp.float32),
        grid=(Bp // TB,),
        in_specs=[x_spec] + wb_specs,
        out_specs=pl.BlockSpec((TB, _FEAT_PAD), lambda i: (i, 0)),
        compiler_params=pltpu.CompilerParams(
            dimension_semantics=("parallel",),   # shard batch tiles across TCs (v7x)
        ),
        cost_estimate=cost,
    )(x_flat, *operands)

    # Drop padding, un-flatten:  nn.Unflatten(1, (1, 28, 28))
    return out_flat[:B, :_FEAT].reshape(B, 1, 28, 28)


def init_params(key):
    """Deterministic Linear params stored as (in, out) weight + (1, out) bias."""
    params = []
    for i, (fan_in, fan_out) in enumerate(_DIMS):
        kw, kb = jax.random.split(jax.random.fold_in(key, i))
        bound = 1.0 / (fan_in ** 0.5)  # torch.nn.Linear default U(-1/sqrt(in), 1/sqrt(in))
        w = jax.random.uniform(kw, (fan_in, fan_out), jnp.float32, -bound, bound)
        b = jax.random.uniform(kb, (1, fan_out), jnp.float32, -bound, bound)
        params.append((w, b))
    return params


def reference_forward(x_nchw, params):
    """Pure-JAX reference emulating the kernel's bf16-input / f32-accum math."""
    B = x_nchw.shape[0]
    h = x_nchw.reshape(B, _FEAT).astype(jnp.float32)

    def dense(h, w, b):
        return jnp.dot(h.astype(jnp.bfloat16).astype(jnp.float32),
                       w.astype(jnp.bfloat16).astype(jnp.float32),
                       precision=jax.lax.Precision.HIGHEST) + b

    (w1, b1), (w2, b2), (w3, b3), (w4, b4), (w5, b5) = params
    h = jnp.maximum(dense(h, w1, b1), 0.0)
    h = dense(h, w2, b2)
    h = jnp.maximum(dense(h, w3, b3), 0.0)
    h = jnp.maximum(dense(h, w4, b4), 0.0)
    h = jnp.tanh(dense(h, w5, b5))
    return h.reshape(B, 1, 28, 28)


if __name__ == "__main__":
    key = jax.random.PRNGKey(0)
    k_x, k_p = jax.random.split(key)

    B = 8
    x = jax.random.normal(k_x, (B, 1, 28, 28), dtype=jnp.float32)
    params = init_params(k_p)

    out = autoencoder_forward(x, params)
    out = jax.block_until_ready(out)

    ref = reference_forward(x, params)
    assert out.shape == (B, 1, 28, 28)
    # bf16 matmul inputs -> relaxed tolerance vs. the bf16-emulating reference.
    assert jnp.allclose(out, ref, atol=2e-2, rtol=2e-2), float(
        jnp.max(jnp.abs(out - ref)))

    print("KERNEL_OK")
</pallas_src>

<mosaic_0001>
module attributes {stable_mosaic.version = 11 : i64} {
  func.func @autoencoder_kernel(%arg0: i32, %arg1: memref<8x896xbf16, #tpu.memory_space<vmem>>, %arg2: memref<896x640xbf16, #tpu.memory_space<vmem>>, %arg3: memref<1x640xf32, #tpu.memory_space<vmem>>, %arg4: memref<640x16xbf16, #tpu.memory_space<vmem>>, %arg5: memref<1x16xf32, #tpu.memory_space<vmem>>, %arg6: memref<16x256xbf16, #tpu.memory_space<vmem>>, %arg7: memref<1x256xf32, #tpu.memory_space<vmem>>, %arg8: memref<256x640xbf16, #tpu.memory_space<vmem>>, %arg9: memref<1x640xf32, #tpu.memory_space<vmem>>, %arg10: memref<640x896xbf16, #tpu.memory_space<vmem>>, %arg11: memref<1x896xf32, #tpu.memory_space<vmem>>, %arg12: memref<8x896xf32, #tpu.memory_space<vmem>>) attributes {dimension_semantics = [#tpu.dimension_semantics<parallel>], iteration_bounds = array<i64: 1>, scalar_prefetch = 0 : i64, scratch_operands = 0 : i64, tpu.core_type = #tpu.core_type<tc>, window_params = [{transform_indices = @transform_0, window_bounds = array<i64: 8, 896>}, {pipeline_mode = #tpu.pipeline_mode<synchronous>, transform_indices = @transform_1, window_bounds = array<i64: 896, 640>}, {pipeline_mode = #tpu.pipeline_mode<synchronous>, transform_indices = @transform_2, window_bounds = array<i64: 1, 640>}, {pipeline_mode = #tpu.pipeline_mode<synchronous>, transform_indices = @transform_3, window_bounds = array<i64: 640, 16>}, {pipeline_mode = #tpu.pipeline_mode<synchronous>, transform_indices = @transform_4, window_bounds = array<i64: 1, 16>}, {pipeline_mode = #tpu.pipeline_mode<synchronous>, transform_indices = @transform_5, window_bounds = array<i64: 16, 256>}, {pipeline_mode = #tpu.pipeline_mode<synchronous>, transform_indices = @transform_6, window_bounds = array<i64: 1, 256>}, {pipeline_mode = #tpu.pipeline_mode<synchronous>, transform_indices = @transform_7, window_bounds = array<i64: 256, 640>}, {pipeline_mode = #tpu.pipeline_mode<synchronous>, transform_indices = @transform_8, window_bounds = array<i64: 1, 640>}, {pipeline_mode = #tpu.pipeline_mode<synchronous>, transform_indices = @transform_9, window_bounds = array<i64: 640, 896>}, {pipeline_mode = #tpu.pipeline_mode<synchronous>, transform_indices = @transform_10, window_bounds = array<i64: 1, 896>}, {transform_indices = @transform_11, window_bounds = array<i64: 8, 896>}]} {
    %c0 = arith.constant 0 : index
    %c0_0 = arith.constant 0 : index
    %0 = vector.load %arg1[%c0, %c0_0] : memref<8x896xbf16, #tpu.memory_space<vmem>>, vector<8x896xbf16>
    %c0_1 = arith.constant 0 : index
    %c0_2 = arith.constant 0 : index
    %1 = vector.load %arg2[%c0_1, %c0_2] : memref<896x640xbf16, #tpu.memory_space<vmem>>, vector<896x640xbf16>
    %cst = arith.constant dense<0.000000e+00> : vector<8x640xf32>
    %2 = tpu.matmul %0, %1, %cst {dimension_numbers = #tpu.dot_dimension_numbers<[1], [0], [0], [1], [0, 0, 1, 1], [], []>} : vector<8x896xbf16>, vector<896x640xbf16>, vector<8x640xf32> -> vector<8x640xf32>
    %c0_3 = arith.constant 0 : index
    %c0_4 = arith.constant 0 : index
    %3 = vector.load %arg3[%c0_3, %c0_4] : memref<1x640xf32, #tpu.memory_space<vmem>>, vector<1x640xf32>
    %4 = vector.broadcast %3 : vector<1x640xf32> to vector<8x640xf32>
    %5 = arith.addf %2, %4 : vector<8x640xf32>
    %cst_5 = arith.constant 0.000000e+00 : f32
    %6 = vector.broadcast %cst_5 : f32 to vector<8x640xf32>
    %7 = arith.maximumf %5, %6 : vector<8x640xf32>
    %8 = arith.truncf %7 : vector<8x640xf32> to vector<8x640xbf16>
    %c0_6 = arith.constant 0 : index
    %c0_7 = arith.constant 0 : index
    %9 = vector.load %arg4[%c0_6, %c0_7] : memref<640x16xbf16, #tpu.memory_space<vmem>>, vector<640x16xbf16>
    %cst_8 = arith.constant dense<0.000000e+00> : vector<8x16xf32>
    %10 = tpu.matmul %8, %9, %cst_8 {dimension_numbers = #tpu.dot_dimension_numbers<[1], [0], [0], [1], [0, 0, 1, 1], [], []>} : vector<8x640xbf16>, vector<640x16xbf16>, vector<8x16xf32> -> vector<8x16xf32>
    %c0_9 = arith.constant 0 : index
    %c0_10 = arith.constant 0 : index
    %11 = vector.load %arg5[%c0_9, %c0_10] : memref<1x16xf32, #tpu.memory_space<vmem>>, vector<1x16xf32>
    %12 = vector.broadcast %11 : vector<1x16xf32> to vector<8x16xf32>
    %13 = arith.addf %10, %12 : vector<8x16xf32>
    %14 = arith.truncf %13 : vector<8x16xf32> to vector<8x16xbf16>
    %c0_11 = arith.constant 0 : index
    %c0_12 = arith.constant 0 : index
    %15 = vector.load %arg6[%c0_11, %c0_12] : memref<16x256xbf16, #tpu.memory_space<vmem>>, vector<16x256xbf16>
    %cst_13 = arith.constant dense<0.000000e+00> : vector<8x256xf32>
    %16 = tpu.matmul %14, %15, %cst_13 {dimension_numbers = #tpu.dot_dimension_numbers<[1], [0], [0], [1], [0, 0, 1, 1], [], []>} : vector<8x16xbf16>, vector<16x256xbf16>, vector<8x256xf32> -> vector<8x256xf32>
    %c0_14 = arith.constant 0 : index
    %c0_15 = arith.constant 0 : index
    %17 = vector.load %arg7[%c0_14, %c0_15] : memref<1x256xf32, #tpu.memory_space<vmem>>, vector<1x256xf32>
    %18 = vector.broadcast %17 : vector<1x256xf32> to vector<8x256xf32>
    %19 = arith.addf %16, %18 : vector<8x256xf32>
    %cst_16 = arith.constant 0.000000e+00 : f32
    %20 = vector.broadcast %cst_16 : f32 to vector<8x256xf32>
    %21 = arith.maximumf %19, %20 : vector<8x256xf32>
    %22 = arith.truncf %21 : vector<8x256xf32> to vector<8x256xbf16>
    %c0_17 = arith.constant 0 : index
    %c0_18 = arith.constant 0 : index
    %23 = vector.load %arg8[%c0_17, %c0_18] : memref<256x640xbf16, #tpu.memory_space<vmem>>, vector<256x640xbf16>
    %cst_19 = arith.constant dense<0.000000e+00> : vector<8x640xf32>
    %24 = tpu.matmul %22, %23, %cst_19 {dimension_numbers = #tpu.dot_dimension_numbers<[1], [0], [0], [1], [0, 0, 1, 1], [], []>} : vector<8x256xbf16>, vector<256x640xbf16>, vector<8x640xf32> -> vector<8x640xf32>
    %c0_20 = arith.constant 0 : index
    %c0_21 = arith.constant 0 : index
    %25 = vector.load %arg9[%c0_20, %c0_21] : memref<1x640xf32, #tpu.memory_space<vmem>>, vector<1x640xf32>
    %26 = vector.broadcast %25 : vector<1x640xf32> to vector<8x640xf32>
    %27 = arith.addf %24, %26 : vector<8x640xf32>
    %cst_22 = arith.constant 0.000000e+00 : f32
    %28 = vector.broadcast %cst_22 : f32 to vector<8x640xf32>
    %29 = arith.maximumf %27, %28 : vector<8x640xf32>
    %30 = arith.truncf %29 : vector<8x640xf32> to vector<8x640xbf16>
    %c0_23 = arith.constant 0 : index
    %c0_24 = arith.constant 0 : index
    %31 = vector.load %arg10[%c0_23, %c0_24] : memref<640x896xbf16, #tpu.memory_space<vmem>>, vector<640x896xbf16>
    %cst_25 = arith.constant dense<0.000000e+00> : vector<8x896xf32>
    %32 = tpu.matmul %30, %31, %cst_25 {dimension_numbers = #tpu.dot_dimension_numbers<[1], [0], [0], [1], [0, 0, 1, 1], [], []>} : vector<8x640xbf16>, vector<640x896xbf16>, vector<8x896xf32> -> vector<8x896xf32>
    %c0_26 = arith.constant 0 : index
    %c0_27 = arith.constant 0 : index
    %33 = vector.load %arg11[%c0_26, %c0_27] : memref<1x896xf32, #tpu.memory_space<vmem>>, vector<1x896xf32>
    %34 = vector.broadcast %33 : vector<1x896xf32> to vector<8x896xf32>
    %35 = arith.addf %32, %34 : vector<8x896xf32>
    %36 = math.tanh %35 : vector<8x896xf32>
    %c0_28 = arith.constant 0 : index
    %c0_29 = arith.constant 0 : index
    %37 = vector.load %arg12[%c0_28, %c0_29] : memref<8x896xf32, #tpu.memory_space<vmem>>, vector<8x896xf32>
    tpu.vector_store %arg12[%c0_28, %c0_29], %36 {strides = array<i32>} : memref<8x896xf32, #tpu.memory_space<vmem>>, vector<8x896xf32>,
    return
  }
  func.func @transform_0(%arg0: i32) -> (i32, i32) {
    %c0_i32 = arith.constant 0 : i32
    %c0_i32_0 = arith.constant 0 : i32
    return %arg0, %c0_i32 : i32, i32
  }
  func.func @transform_1(%arg0: i32) -> (i32, i32) {
    %c0_i32 = arith.constant 0 : i32
    %c0_i32_0 = arith.constant 0 : i32
    %c0_i32_1 = arith.constant 0 : i32
    return %c0_i32, %c0_i32_0 : i32, i32
  }
  func.func @transform_2(%arg0: i32) -> (i32, i32) {
    %c0_i32 = arith.constant 0 : i32
    %c0_i32_0 = arith.constant 0 : i32
    %c0_i32_1 = arith.constant 0 : i32
    return %c0_i32, %c0_i32_0 : i32, i32
  }
  func.func @transform_3(%arg0: i32) -> (i32, i32) {
    %c0_i32 = arith.constant 0 : i32
    %c0_i32_0 = arith.constant 0 : i32
    %c0_i32_1 = arith.constant 0 : i32
    return %c0_i32, %c0_i32_0 : i32, i32
  }
  func.func @transform_4(%arg0: i32) -> (i32, i32) {
    %c0_i32 = arith.constant 0 : i32
    %c0_i32_0 = arith.constant 0 : i32
    %c0_i32_1 = arith.constant 0 : i32
    return %c0_i32, %c0_i32_0 : i32, i32
  }
  func.func @transform_5(%arg0: i32) -> (i32, i32) {
    %c0_i32 = arith.constant 0 : i32
    %c0_i32_0 = arith.constant 0 : i32
    %c0_i32_1 = arith.constant 0 : i32
    return %c0_i32, %c0_i32_0 : i32, i32
  }
  func.func @transform_6(%arg0: i32) -> (i32, i32) {
    %c0_i32 = arith.constant 0 : i32
    %c0_i32_0 = arith.constant 0 : i32
    %c0_i32_1 = arith.constant 0 : i32
    return %c0_i32, %c0_i32_0 : i32, i32
  }
  func.func @transform_7(%arg0: i32) -> (i32, i32) {
    %c0_i32 = arith.constant 0 : i32
    %c0_i32_0 = arith.constant 0 : i32
    %c0_i32_1 = arith.constant 0 : i32
    return %c0_i32, %c0_i32_0 : i32, i32
  }
  func.func @transform_8(%arg0: i32) -> (i32, i32) {
    %c0_i32 = arith.constant 0 : i32
    %c0_i32_0 = arith.constant 0 : i32
    %c0_i32_1 = arith.constant 0 : i32
    return %c0_i32, %c0_i32_0 : i32, i32
  }
  func.func @transform_9(%arg0: i32) -> (i32, i32) {
    %c0_i32 = arith.constant 0 : i32
    %c0_i32_0 = arith.constant 0 : i32
    %c0_i32_1 = arith.constant 0 : i32
    return %c0_i32, %c0_i32_0 : i32, i32
  }
  func.func @transform_10(%arg0: i32) -> (i32, i32) {
    %c0_i32 = arith.constant 0 : i32
    %c0_i32_0 = arith.constant 0 : i32
    %c0_i32_1 = arith.constant 0 : i32
    return %c0_i32, %c0_i32_0 : i32, i32
  }
  func.func @transform_11(%arg0: i32) -> (i32, i32) {
    %c0_i32 = arith.constant 0 : i32
    %c0_i32_0 = arith.constant 0 : i32
    return %arg0, %c0_i32 : i32, i32
  }
}

</mosaic_0001>

<llo_original>
// kernel: tpu_custom_call.1
$region0: #{tpu_custom_call.1}
  #allocation0 [shape = 'u32[]', space=smem, size = 0x4, offset = 0x4, fixed_abs, tag = 'smem constant byte address 0x4 - core index']
  #allocation1 [shape = 'u32[144,128]{1,0:T(1,128)}', space=vmem, size = 0x12000, scoped, tag = 'internal scratch']
  %s0 = inlined_call_operand.hbm [shape: bf16[8,896], index: 0, kind: input, shape index: {}]
  %s1 = inlined_call_operand.hbm [shape: bf16[896,640], index: 1, kind: input, shape index: {}]
  %s2 = inlined_call_operand.hbm [shape: f32[1,640], index: 2, kind: input, shape index: {}]
  %s3 = inlined_call_operand.vmem [shape: bf16[640,16], index: 3, kind: input, shape index: {}]
  %s4 = inlined_call_operand.hbm [shape: f32[1,16], index: 4, kind: input, shape index: {}]
  %s5 = inlined_call_operand.hbm [shape: bf16[16,256], index: 5, kind: input, shape index: {}]
  %s6 = inlined_call_operand.hbm [shape: f32[1,256], index: 6, kind: input, shape index: {}]
  %s7 = inlined_call_operand.hbm [shape: bf16[256,640], index: 7, kind: input, shape index: {}]
  %s8 = inlined_call_operand.hbm [shape: f32[1,640], index: 8, kind: input, shape index: {}]
  %s9 = inlined_call_operand.hbm [shape: bf16[640,896], index: 9, kind: input, shape index: {}]
  %s10 = inlined_call_operand.hbm [shape: f32[1,896], index: 10, kind: input, shape index: {}]
  %s11 = inlined_call_operand.hbm [shape: f32[8,896], index: 11, kind: output, shape index: {}]
  %s12 = sld [smem:[#allocation0]]
  $region94: #{tpu_custom_call.1} parent=0
    _
  %s14 = ssub.s32 1, %s12
  %s15 = scalar_select 0, %s14, %s12
  $region1: #{tpu_custom_call.1} parent=0
    #allocation2 [shape = 'u8[14336]{0}', space=vmem, size = 0x3800, scoped, tag = 'input window, operand 0, single buffered']
    #allocation3 [shape = 's32[1]{0}', space=sflag, size = 0x4, scoped, tag = 'scoped memory for tpu_custom_call.1']
    #allocation4 [shape = 's32[1]{0}', space=sflag, size = 0x4, scoped, tag = 'scoped memory for tpu_custom_call.1']
    #allocation5 [shape = 'u8[1146880]{0}', space=vmem, size = 0x118000, scoped, tag = 'input window, operand 1, single buffered']
    #allocation6 [shape = 's32[1]{0}', space=sflag, size = 0x4, scoped, tag = 'scoped memory for tpu_custom_call.1']
    #allocation7 [shape = 'u8[2560]{0}', space=vmem, size = 0xc00, scoped, tag = 'input window, operand 2, single buffered']
    #allocation8 [shape = 'u8[512]{0}', space=vmem, size = 0x400, scoped, tag = 'input window, operand 4, single buffered']
    #allocation9 [shape = 's32[1]{0}', space=sflag, size = 0x4, scoped, tag = 'scoped memory for tpu_custom_call.1']
    #allocation10 [shape = 'u8[8192]{0}', space=vmem, size = 0x2000, scoped, tag = 'input window, operand 5, single buffered']
    #allocation11 [shape = 'u8[1024]{0}', space=vmem, size = 0x400, scoped, tag = 'input window, operand 6, single buffered']
    #allocation12 [shape = 's32[1]{0}', space=sflag, size = 0x4, scoped, tag = 'scoped memory for tpu_custom_call.1']
    #allocation13 [shape = 'u8[327680]{0}', space=vmem, size = 0x50000, scoped, tag = 'input window, operand 7, single buffered']
    #allocation14 [shape = 'u8[2560]{0}', space=vmem, size = 0xc00, scoped, tag = 'input window, operand 8, single buffered']
    #allocation15 [shape = 's32[1]{0}', space=sflag, size = 0x4, scoped, tag = 'scoped memory for tpu_custom_call.1']
    #allocation16 [shape = 'u8[1146880]{0}', space=vmem, size = 0x118000, scoped, tag = 'input window, operand 9, single buffered']
    #allocation17 [shape = 'u8[3584]{0}', space=vmem, size = 0x1000, scoped, tag = 'input window, operand 10, single buffered']
    #allocation18 [shape = 's32[1]{0}', space=sflag, size = 0x4, scoped, tag = 'scoped memory for tpu_custom_call.1']
    #allocation19 [shape = 'u8[28672]{0}', space=vmem, size = 0x7000, scoped, tag = 'output window, operand 0, single buffered']
    %16 = vsyncpa [#allocation3], 0
    %17 = vsyncpa [#allocation6], 0
    %18 = vsyncpa [#allocation9], 0
    %19 = vsyncpa [#allocation12], 0
    %20 = vsyncpa [#allocation15], 0
    %21 = vsyncpa [#allocation18], 0
    %22 = vsyncpa [#allocation4], 0
    // Predicated region
    $region2: #{tpu_custom_call.1} parent=1 // pred_check
      _
    $region3: #{tpu_custom_call.1} parent=1 // pred_check_branch
      %24 = sbr.rel (0) target = $region5
    $region4: #{tpu_custom_call.1} parent=1 // pred_region
      %s26 = ssub.s32 448, 448
      %27 = vsyncadd [#allocation3], %s26
      %s29 = sshll.u32 [#allocation2], 4
      %s30 = int_to_ptr.vmem [resolvable:$true] %s29
      %32 = dma.hbm_to_vmem [thread:$0]  %s0, 448, %s30, [#allocation3]
    $region5: #{tpu_custom_call.1} parent=1 // pred_fallthru
      _
    // Predicated region
    $region6: #{tpu_custom_call.1} parent=1 // pred_check
      _
    $region7: #{tpu_custom_call.1} parent=1 // pred_check_branch
      %34 = sbr.rel (0) target = $region9
    $region8: #{tpu_custom_call.1} parent=1 // pred_region
      %s36 = ssub.s32 35840, 35840
      %37 = vsyncadd [#allocation6], %s36
      %s38 = sshll.u32 [#allocation5], 4
      %s39 = int_to_ptr.vmem [resolvable:$true] %s38
      %44 = dma.hbm_to_vmem [thread:$0]  %s1, 35840, %s39, [#allocation6], 320, 320, 20
    $region9: #{tpu_custom_call.1} parent=1 // pred_fallthru
      _
    // Predicated region
    $region10: #{tpu_custom_call.1} parent=1 // pred_check
      _
    $region11: #{tpu_custom_call.1} parent=1 // pred_check_branch
      %46 = sbr.rel (0) target = $region13
    $region12: #{tpu_custom_call.1} parent=1 // pred_region
      %s48 = ssub.s32 80, 80
      %49 = vsyncadd [#allocation6], %s48
      %s51 = sshll.u32 [#allocation7], 4
      %s52 = int_to_ptr.vmem [resolvable:$true] %s51
      %54 = dma.hbm_to_vmem [thread:$0]  %s2, 80, %s52, [#allocation6]
    $region13: #{tpu_custom_call.1} parent=1 // pred_fallthru
      _
    // Predicated region
    $region14: #{tpu_custom_call.1} parent=1 // pred_check
      _
    $region15: #{tpu_custom_call.1} parent=1 // pred_check_branch
      %56 = sbr.rel (0) target = $region17
    $region16: #{tpu_custom_call.1} parent=1 // pred_region
      _
    $region17: #{tpu_custom_call.1} parent=1 // pred_fallthru
      _
    // Predicated region
    $region18: #{tpu_custom_call.1} parent=1 // pred_check
      _
    $region19: #{tpu_custom_call.1} parent=1 // pred_check_branch
      %58 = sbr.rel (0) target = $region21
    $region20: #{tpu_custom_call.1} parent=1 // pred_region
      %s60 = ssub.s32 16, 16
      %61 = vsyncadd [#allocation9], %s60
      %s63 = sshll.u32 [#allocation8], 4
      %s64 = int_to_ptr.vmem [resolvable:$true] %s63
      %66 = dma.hbm_to_vmem [thread:$0]  %s4, 16, %s64, [#allocation9]
    $region21: #{tpu_custom_call.1} parent=1 // pred_fallthru
      _
    // Predicated region
    $region22: #{tpu_custom_call.1} parent=1 // pred_check
      _
    $region23: #{tpu_custom_call.1} parent=1 // pred_check_branch
      %68 = sbr.rel (0) target = $region25
    $region24: #{tpu_custom_call.1} parent=1 // pred_region
      %s70 = ssub.s32 256, 256
      %71 = vsyncadd [#allocation9], %s70
      %s72 = sshll.u32 [#allocation10], 4
      %s73 = int_to_ptr.vmem [resolvable:$true] %s72
      %78 = dma.hbm_to_vmem [thread:$0]  %s5, 256, %s73, [#allocation9], 128, 128, 8
    $region25: #{tpu_custom_call.1} parent=1 // pred_fallthru
      _
    // Predicated region
    $region26: #{tpu_custom_call.1} parent=1 // pred_check
      _
    $region27: #{tpu_custom_call.1} parent=1 // pred_check_branch
      %80 = sbr.rel (0) target = $region29
    $region28: #{tpu_custom_call.1} parent=1 // pred_region
      %s82 = ssub.s32 32, 32
      %83 = vsyncadd [#allocation12], %s82
      %s85 = sshll.u32 [#allocation11], 4
      %s86 = int_to_ptr.vmem [resolvable:$true] %s85
      %88 = dma.hbm_to_vmem [thread:$0]  %s6, 32, %s86, [#allocation12]
    $region29: #{tpu_custom_call.1} parent=1 // pred_fallthru
      _
    // Predicated region
    $region30: #{tpu_custom_call.1} parent=1 // pred_check
      _
    $region31: #{tpu_custom_call.1} parent=1 // pred_check_branch
      %90 = sbr.rel (0) target = $region33
    $region32: #{tpu_custom_call.1} parent=1 // pred_region
      %s92 = ssub.s32 10240, 10240
      %93 = vsyncadd [#allocation12], %s92
      %s94 = sshll.u32 [#allocation13], 4
      %s95 = int_to_ptr.vmem [resolvable:$true] %s94
      %100 = dma.hbm_to_vmem [thread:$0]  %s7, 10240, %s95, [#allocation12], 320, 320, 20
    $region33: #{tpu_custom_call.1} parent=1 // pred_fallthru
      _
    // Predicated region
    $region34: #{tpu_custom_call.1} parent=1 // pred_check
      _
    $region35: #{tpu_custom_call.1} parent=1 // pred_check_branch
      %102 = sbr.rel (0) target = $region37
    $region36: #{tpu_custom_call.1} parent=1 // pred_region
      %s104 = ssub.s32 80, 80
      %105 = vsyncadd [#allocation15], %s104
      %s107 = sshll.u32 [#allocation14], 4
      %s108 = int_to_ptr.vmem [resolvable:$true] %s107
      %110 = dma.hbm_to_vmem [thread:$0]  %s8, 80, %s108, [#allocation15]
    $region37: #{tpu_custom_call.1} parent=1 // pred_fallthru
      _
    // Predicated region
    $region38: #{tpu_custom_call.1} parent=1 // pred_check
      _
    $region39: #{tpu_custom_call.1} parent=1 // pred_check_branch
      %112 = sbr.rel (0) target = $region41
    $region40: #{tpu_custom_call.1} parent=1 // pred_region
      %s114 = ssub.s32 35840, 35840
      %115 = vsyncadd [#allocation15], %s114
      %s116 = sshll.u32 [#allocation16], 4
      %s117 = int_to_ptr.vmem [resolvable:$true] %s116
      %122 = dma.hbm_to_vmem [thread:$0]  %s9, 35840, %s117, [#allocation15], 448, 448, 28
    $region41: #{tpu_custom_call.1} parent=1 // pred_fallthru
      _
    // Predicated region
    $region42: #{tpu_custom_call.1} parent=1 // pred_check
      _
    $region43: #{tpu_custom_call.1} parent=1 // pred_check_branch
      %124 = sbr.rel (0) target = $region45
    $region44: #{tpu_custom_call.1} parent=1 // pred_region
      %s126 = ssub.s32 112, 112
      %127 = vsyncadd [#allocation18], %s126
      %s129 = sshll.u32 [#allocation17], 4
      %s130 = int_to_ptr.vmem [resolvable:$true] %s129
      %132 = dma.hbm_to_vmem [thread:$0]  %s10, 112, %s130, [#allocation18]
    $region45: #{tpu_custom_call.1} parent=1 // pred_fallthru
      _
    // Predicated region
    $region46: #{tpu_custom_call.1} parent=1 // pred_check
      _
    $region47: #{tpu_custom_call.1} parent=1 // pred_check_branch
      %134 = sbr.rel (0) target = $region49
    $region48: #{tpu_custom_call.1} parent=1 // pred_region
      %135 = dma.done [#allocation3], 448
    $region49: #{tpu_custom_call.1} parent=1 // pred_fallthru
      _
    // Predicated region
    $region50: #{tpu_custom_call.1} parent=1 // pred_check
      _
    $region51: #{tpu_custom_call.1} parent=1 // pred_check_branch
      %137 = sbr.rel (0) target = $region53
    $region52: #{tpu_custom_call.1} parent=1 // pred_region
      %138 = dma.done [#allocation6], 35840
    $region53: #{tpu_custom_call.1} parent=1 // pred_fallthru
      _
    // Predicated region
    $region54: #{tpu_custom_call.1} parent=1 // pred_check
      _
    $region55: #{tpu_custom_call.1} parent=1 // pred_check_branch
      %140 = sbr.rel (0) target = $region57
    $region56: #{tpu_custom_call.1} parent=1 // pred_region
      %141 = dma.done [#allocation6], 80
    $region57: #{tpu_custom_call.1} parent=1 // pred_fallthru
      _
    // Predicated region
    $region58: #{tpu_custom_call.1} parent=1 // pred_check
      _
    $region59: #{tpu_custom_call.1} parent=1 // pred_check_branch
      %143 = sbr.rel (0) target = $region61
    $region60: #{tpu_custom_call.1} parent=1 // pred_region
      %144 = dma.done [#allocation9], 16
    $region61: #{tpu_custom_call.1} parent=1 // pred_fallthru
      _
    // Predicated region
    $region62: #{tpu_custom_call.1} parent=1 // pred_check
      _
    $region63: #{tpu_custom_call.1} parent=1 // pred_check_branch
      %146 = sbr.rel (0) target = $region65
    $region64: #{tpu_custom_call.1} parent=1 // pred_region
      %147 = dma.done [#allocation9], 256
    $region65: #{tpu_custom_call.1} parent=1 // pred_fallthru
      _
    // Predicated region
    $region66: #{tpu_custom_call.1} parent=1 // pred_check
      _
    $region67: #{tpu_custom_call.1} parent=1 // pred_check_branch
      %149 = sbr.rel (0) target = $region69
    $region68: #{tpu_custom_call.1} parent=1 // pred_region
      %150 = dma.done [#allocation12], 32
    $region69: #{tpu_custom_call.1} parent=1 // pred_fallthru
      _
    // Predicated region
    $region70: #{tpu_custom_call.1} parent=1 // pred_check
      _
    $region71: #{tpu_custom_call.1} parent=1 // pred_check_branch
      %152 = sbr.rel (0) target = $region73
    $region72: #{tpu_custom_call.1} parent=1 // pred_region
      %153 = dma.done [#allocation12], 10240
    $region73: #{tpu_custom_call.1} parent=1 // pred_fallthru
      _
    // Predicated region
    $region74: #{tpu_custom_call.1} parent=1 // pred_check
      _
    $region75: #{tpu_custom_call.1} parent=1 // pred_check_branch
      %155 = sbr.rel (0) target = $region77
    $region76: #{tpu_custom_call.1} parent=1 // pred_region
      %156 = dma.done [#allocation15], 80
    $region77: #{tpu_custom_call.1} parent=1 // pred_fallthru
      _
    // Predicated region
    $region78: #{tpu_custom_call.1} parent=1 // pred_check
      _
    $region79: #{tpu_custom_call.1} parent=1 // pred_check_branch
      %158 = sbr.rel (0) target = $region81
    $region80: #{tpu_custom_call.1} parent=1 // pred_region
      %159 = dma.done [#allocation15], 35840
    $region81: #{tpu_custom_call.1} parent=1 // pred_fallthru
      _
    // Predicated region
    $region82: #{tpu_custom_call.1} parent=1 // pred_check
      _
    $region83: #{tpu_custom_call.1} parent=1 // pred_check_branch
      %161 = sbr.rel (0) target = $region85
    $region84: #{tpu_custom_call.1} parent=1 // pred_region
      %162 = dma.done [#allocation18], 112
    $region85: #{tpu_custom_call.1} parent=1 // pred_fallthru
      _
    %v164 = vld [vmem:[#allocation2] sm:$0xff]
    %v165 = vld [vmem:[#allocation2 + $0x8] sm:$0xff]
    %v166 = vld [vmem:[#allocation2 + $0x10] sm:$0xff]
    %v167 = vld [vmem:[#allocation2 + $0x18] sm:$0xf]
    %v168 = vld [vmem:[#allocation5] sm:$0xff]
    %v169 = vld [vmem:[#allocation5 + $0x8] sm:$0xff]
    %v170 = vld [vmem:[#allocation5 + $0x10] sm:$0xf]
    %v171 = vld [vmem:[#allocation5 + $0x14] sm:$0xff]
    %v172 = vld [vmem:[#allocation5 + $0x1c] sm:$0xff]
    %v173 = vld [vmem:[#allocation5 + $0x24] sm:$0xf]
    %v174 = vld [vmem:[#allocation5 + $0x28] sm:$0xff]
    %v175 = vld [vmem:[#allocation5 + $0x30] sm:$0xff]
    %v176 = vld [vmem:[#allocation5 + $0x38] sm:$0xf]
    %v177 = vld [vmem:[#allocation5 + $0x3c] sm:$0xff]
    %v178 = vld [vmem:[#allocation5 + $0x44] sm:$0xff]
    %v179 = vld [vmem:[#allocation5 + $0x4c] sm:$0xf]
    %v180 = vld [vmem:[#allocation5 + $0x50] sm:$0xff]
    %v181 = vld [vmem:[#allocation5 + $0x58] sm:$0xff]
    %v182 = vld [vmem:[#allocation5 + $0x60] sm:$0xf]
    %v183 = vld [vmem:[#allocation5 + $0x64] sm:$0xff]
    %v184 = vld [vmem:[#allocation5 + $0x6c] sm:$0xff]
    %v185 = vld [vmem:[#allocation5 + $0x74] sm:$0xf]
    %v186 = vld [vmem:[#allocation5 + $0x78] sm:$0xff]
    %v187 = vld [vmem:[#allocation5 + $0x80] sm:$0xff]
    %v188 = vld [vmem:[#allocation5 + $0x88] sm:$0xf]
    %v189 = vld [vmem:[#allocation5 + $0x8c] sm:$0xff]
    %v190 = vld [vmem:[#allocation5 + $0x94] sm:$0xff]
    %v191 = vld [vmem:[#allocation5 + $0x9c] sm:$0xf]
    %v192 = vld [vmem:[#allocation5 + $0xa0] sm:$0xff]
    %v193 = vld [vmem:[#allocation5 + $0xa8] sm:$0xff]
    %v194 = vld [vmem:[#allocation5 + $0xb0] sm:$0xf]
    %v195 = vld [vmem:[#allocation5 + $0xb4] sm:$0xff]
    %v196 = vld [vmem:[#allocation5 + $0xbc] sm:$0xff]
    %v197 = vld [vmem:[#allocation5 + $0xc4] sm:$0xf]
    %v198 = vld [vmem:[#allocation5 + $0xc8] sm:$0xff]
    %v199 = vld [vmem:[#allocation5 + $0xd0] sm:$0xff]
    %v200 = vld [vmem:[#allocation5 + $0xd8] sm:$0xf]
    %v201 = vld [vmem:[#allocation5 + $0xdc] sm:$0xff]
    %v202 = vld [vmem:[#allocation5 + $0xe4] sm:$0xff]
    %v203 = vld [vmem:[#allocation5 + $0xec] sm:$0xf]
    %v204 = vld [vmem:[#allocation5 + $0xf0] sm:$0xff]
    %v205 = vld [vmem:[#allocation5 + $0xf8] sm:$0xff]
    %v206 = vld [vmem:[#allocation5 + $0x100] sm:$0xf]
    %v207 = vld [vmem:[#allocation5 + $0x104] sm:$0xff]
    %v208 = vld [vmem:[#allocation5 + $0x10c] sm:$0xff]
    %v209 = vld [vmem:[#allocation5 + $0x114] sm:$0xf]
    %v210 = vld [vmem:[#allocation5 + $0x118] sm:$0xff]
    %v211 = vld [vmem:[#allocation5 + $0x120] sm:$0xff]
    %v212 = vld [vmem:[#allocation5 + $0x128] sm:$0xf]
    %v213 = vld [vmem:[#allocation5 + $0x12c] sm:$0xff]
    %v214 = vld [vmem:[#allocation5 + $0x134] sm:$0xff]
    %v215 = vld [vmem:[#allocation5 + $0x13c] sm:$0xf]
    %v216 = vld [vmem:[#allocation5 + $0x140] sm:$0xff]
    %v217 = vld [vmem:[#allocation5 + $0x148] sm:$0xff]
    %v218 = vld [vmem:[#allocation5 + $0x150] sm:$0xf]
    %v219 = vld [vmem:[#allocation5 + $0x154] sm:$0xff]
    %v220 = vld [vmem:[#allocation5 + $0x15c] sm:$0xff]
    %v221 = vld [vmem:[#allocation5 + $0x164] sm:$0xf]
    %v222 = vld [vmem:[#allocation5 + $0x168] sm:$0xff]
    %v223 = vld [vmem:[#allocation5 + $0x170] sm:$0xff]
    %v224 = vld [vmem:[#allocation5 + $0x178] sm:$0xf]
    %v225 = vld [vmem:[#allocation5 + $0x17c] sm:$0xff]
    %v226 = vld [vmem:[#allocation5 + $0x184] sm:$0xff]
    %v227 = vld [vmem:[#allocation5 + $0x18c] sm:$0xf]
    %v228 = vld [vmem:[#allocation5 + $0x190] sm:$0xff]
    %v229 = vld [vmem:[#allocation5 + $0x198] sm:$0xff]
    %v230 = vld [vmem:[#allocation5 + $0x1a0] sm:$0xf]
    %v231 = vld [vmem:[#allocation5 + $0x1a4] sm:$0xff]
    %v232 = vld [vmem:[#allocation5 + $0x1ac] sm:$0xff]
    %v233 = vld [vmem:[#allocation5 + $0x1b4] sm:$0xf]
    %v234 = vld [vmem:[#allocation5 + $0x1b8] sm:$0xff]
    %v235 = vld [vmem:[#allocation5 + $0x1c0] sm:$0xff]
    %v236 = vld [vmem:[#allocation5 + $0x1c8] sm:$0xf]
    %v237 = vld [vmem:[#allocation5 + $0x1cc] sm:$0xff]
    %v238 = vld [vmem:[#allocation5 + $0x1d4] sm:$0xff]
    %v239 = vld [vmem:[#allocation5 + $0x1dc] sm:$0xf]
    %v240 = vld [vmem:[#allocation5 + $0x1e0] sm:$0xff]
    %v241 = vld [vmem:[#allocation5 + $0x1e8] sm:$0xff]
    %v242 = vld [vmem:[#allocation5 + $0x1f0] sm:$0xf]
    %v243 = vld [vmem:[#allocation5 + $0x1f4] sm:$0xff]
    %v244 = vld [vmem:[#allocation5 + $0x1fc] sm:$0xff]
    %v245 = vld [vmem:[#allocation5 + $0x204] sm:$0xf]
    %v246 = vld [vmem:[#allocation5 + $0x208] sm:$0xff]
    %v247 = vld [vmem:[#allocation5 + $0x210] sm:$0xff]
    %v248 = vld [vmem:[#allocation5 + $0x218] sm:$0xf]
    %v249 = vld [vmem:[#allocation5 + $0x21c] sm:$0xff]
    %v250 = vld [vmem:[#allocation5 + $0x224] sm:$0xff]
    %v251 = vld [vmem:[#allocation5 + $0x22c] sm:$0xf]
    %v252 = vld [vmem:[#allocation5 + $0x230] sm:$0xff]
    %v253 = vld [vmem:[#allocation5 + $0x238] sm:$0xff]
    %v254 = vld [vmem:[#allocation5 + $0x240] sm:$0xf]
    %v255 = vld [vmem:[#allocation5 + $0x244] sm:$0xff]
    %v256 = vld [vmem:[#allocation5 + $0x24c] sm:$0xff]
    %v257 = vld [vmem:[#allocation5 + $0x254] sm:$0xf]
    %v258 = vld [vmem:[#allocation5 + $0x258] sm:$0xff]
    %v259 = vld [vmem:[#allocation5 + $0x260] sm:$0xff]
    %v260 = vld [vmem:[#allocation5 + $0x268] sm:$0xf]
    %v261 = vld [vmem:[#allocation5 + $0x26c] sm:$0xff]
    %v262 = vld [vmem:[#allocation5 + $0x274] sm:$0xff]
    %v263 = vld [vmem:[#allocation5 + $0x27c] sm:$0xf]
    %v264 = vld [vmem:[#allocation5 + $0x280] sm:$0xff]
    %v265 = vld [vmem:[#allocation5 + $0x288] sm:$0xff]
    %v266 = vld [vmem:[#allocation5 + $0x290] sm:$0xf]
    %v267 = vld [vmem:[#allocation5 + $0x294] sm:$0xff]
    %v268 = vld [vmem:[#allocation5 + $0x29c] sm:$0xff]
    %v269 = vld [vmem:[#allocation5 + $0x2a4] sm:$0xf]
    %v270 = vld [vmem:[#allocation5 + $0x2a8] sm:$0xff]
    %v271 = vld [vmem:[#allocation5 + $0x2b0] sm:$0xff]
    %v272 = vld [vmem:[#allocation5 + $0x2b8] sm:$0xf]
    %v273 = vld [vmem:[#allocation5 + $0x2bc] sm:$0xff]
    %v274 = vld [vmem:[#allocation5 + $0x2c4] sm:$0xff]
    %v275 = vld [vmem:[#allocation5 + $0x2cc] sm:$0xf]
    %v276 = vld [vmem:[#allocation5 + $0x2d0] sm:$0xff]
    %v277 = vld [vmem:[#allocation5 + $0x2d8] sm:$0xff]
    %v278 = vld [vmem:[#allocation5 + $0x2e0] sm:$0xf]
    %v279 = vld [vmem:[#allocation5 + $0x2e4] sm:$0xff]
    %v280 = vld [vmem:[#allocation5 + $0x2ec] sm:$0xff]
    %v281 = vld [vmem:[#allocation5 + $0x2f4] sm:$0xf]
    %v282 = vld [vmem:[#allocation5 + $0x2f8] sm:$0xff]
    %v283 = vld [vmem:[#allocation5 + $0x300] sm:$0xff]
    %v284 = vld [vmem:[#allocation5 + $0x308] sm:$0xf]
    %v285 = vld [vmem:[#allocation5 + $0x30c] sm:$0xff]
    %v286 = vld [vmem:[#allocation5 + $0x314] sm:$0xff]
    %v287 = vld [vmem:[#allocation5 + $0x31c] sm:$0xf]
    %v288 = vld [vmem:[#allocation5 + $0x320] sm:$0xff]
    %v289 = vld [vmem:[#allocation5 + $0x328] sm:$0xff]
    %v290 = vld [vmem:[#allocation5 + $0x330] sm:$0xf]
    %v291 = vld [vmem:[#allocation5 + $0x334] sm:$0xff]
    %v292 = vld [vmem:[#allocation5 + $0x33c] sm:$0xff]
    %v293 = vld [vmem:[#allocation5 + $0x344] sm:$0xf]
    %v294 = vld [vmem:[#allocation5 + $0x348] sm:$0xff]
    %v295 = vld [vmem:[#allocation5 + $0x350] sm:$0xff]
    %v296 = vld [vmem:[#allocation5 + $0x358] sm:$0xf]
    %v297 = vld [vmem:[#allocation5 + $0x35c] sm:$0xff]
    %v298 = vld [vmem:[#allocation5 + $0x364] sm:$0xff]
    %v299 = vld [vmem:[#allocation5 + $0x36c] sm:$0xf]
    %v300 = vld [vmem:[#allocation5 + $0x370] sm:$0xff]
    %v301 = vld [vmem:[#allocation5 + $0x378] sm:$0xff]
    %v302 = vld [vmem:[#allocation5 + $0x380] sm:$0xf]
    %v303 = vld [vmem:[#allocation5 + $0x384] sm:$0xff]
    %v304 = vld [vmem:[#allocation5 + $0x38c] sm:$0xff]
    %v305 = vld [vmem:[#allocation5 + $0x394] sm:$0xf]
    %v306 = vld [vmem:[#allocation5 + $0x398] sm:$0xff]
    %v307 = vld [vmem:[#allocation5 + $0x3a0] sm:$0xff]
    %v308 = vld [vmem:[#allocation5 + $0x3a8] sm:$0xf]
    %v309 = vld [vmem:[#allocation5 + $0x3ac] sm:$0xff]
    %v310 = vld [vmem:[#allocation5 + $0x3b4] sm:$0xff]
    %v311 = vld [vmem:[#allocation5 + $0x3bc] sm:$0xf]
    %v312 = vld [vmem:[#allocation5 + $0x3c0] sm:$0xff]
    %v313 = vld [vmem:[#allocation5 + $0x3c8] sm:$0xff]
    %v314 = vld [vmem:[#allocation5 + $0x3d0] sm:$0xf]
    %v315 = vld [vmem:[#allocation5 + $0x3d4] sm:$0xff]
    %v316 = vld [vmem:[#allocation5 + $0x3dc] sm:$0xff]
    %v317 = vld [vmem:[#allocation5 + $0x3e4] sm:$0xf]
    %v318 = vld [vmem:[#allocation5 + $0x3e8] sm:$0xff]
    %v319 = vld [vmem:[#allocation5 + $0x3f0] sm:$0xff]
    %v320 = vld [vmem:[#allocation5 + $0x3f8] sm:$0xf]
    %v321 = vld [vmem:[#allocation5 + $0x3fc] sm:$0xff]
    %v322 = vld [vmem:[#allocation5 + $0x404] sm:$0xff]
    %v323 = vld [vmem:[#allocation5 + $0x40c] sm:$0xf]
    %v324 = vld [vmem:[#allocation5 + $0x410] sm:$0xff]
    %v325 = vld [vmem:[#allocation5 + $0x418] sm:$0xff]
    %v326 = vld [vmem:[#allocation5 + $0x420] sm:$0xf]
    %v327 = vld [vmem:[#allocation5 + $0x424] sm:$0xff]
    %v328 = vld [vmem:[#allocation5 + $0x42c] sm:$0xff]
    %v329 = vld [vmem:[#allocation5 + $0x434] sm:$0xf]
    %v330 = vld [vmem:[#allocation5 + $0x438] sm:$0xff]
    %v331 = vld [vmem:[#allocation5 + $0x440] sm:$0xff]
    %v332 = vld [vmem:[#allocation5 + $0x448] sm:$0xf]
    %v333 = vld [vmem:[#allocation5 + $0x44c] sm:$0xff]
    %v334 = vld [vmem:[#allocation5 + $0x454] sm:$0xff]
    %v335 = vld [vmem:[#allocation5 + $0x45c] sm:$0xf]
    %v336 = vld [vmem:[#allocation5 + $0x460] sm:$0xff]
    %v337 = vld [vmem:[#allocation5 + $0x468] sm:$0xff]
    %v338 = vld [vmem:[#allocation5 + $0x470] sm:$0xf]
    %v339 = vld [vmem:[#allocation5 + $0x474] sm:$0xff]
    %v340 = vld [vmem:[#allocation5 + $0x47c] sm:$0xff]
    %v341 = vld [vmem:[#allocation5 + $0x484] sm:$0xf]
    %v342 = vld [vmem:[#allocation5 + $0x488] sm:$0xff]
    %v343 = vld [vmem:[#allocation5 + $0x490] sm:$0xff]
    %v344 = vld [vmem:[#allocation5 + $0x498] sm:$0xf]
    %v345 = vld [vmem:[#allocation5 + $0x49c] sm:$0xff]
    %v346 = vld [vmem:[#allocation5 + $0x4a4] sm:$0xff]
    %v347 = vld [vmem:[#allocation5 + $0x4ac] sm:$0xf]
    %v348 = vld [vmem:[#allocation5 + $0x4b0] sm:$0xff]
    %v349 = vld [vmem:[#allocation5 + $0x4b8] sm:$0xff]
    %v350 = vld [vmem:[#allocation5 + $0x4c0] sm:$0xf]
    %v351 = vld [vmem:[#allocation5 + $0x4c4] sm:$0xff]
    %v352 = vld [vmem:[#allocation5 + $0x4cc] sm:$0xff]
    %v353 = vld [vmem:[#allocation5 + $0x4d4] sm:$0xf]
    %v354 = vld [vmem:[#allocation5 + $0x4d8] sm:$0xff]
    %v355 = vld [vmem:[#allocation5 + $0x4e0] sm:$0xff]
    %v356 = vld [vmem:[#allocation5 + $0x4e8] sm:$0xf]
    %v357 = vld [vmem:[#allocation5 + $0x4ec] sm:$0xff]
    %v358 = vld [vmem:[#allocation5 + $0x4f4] sm:$0xff]
    %v359 = vld [vmem:[#allocation5 + $0x4fc] sm:$0xf]
    %v360 = vld [vmem:[#allocation5 + $0x500] sm:$0xff]
    %v361 = vld [vmem:[#allocation5 + $0x508] sm:$0xff]
    %v362 = vld [vmem:[#allocation5 + $0x510] sm:$0xf]
    %v363 = vld [vmem:[#allocation5 + $0x514] sm:$0xff]
    %v364 = vld [vmem:[#allocation5 + $0x51c] sm:$0xff]
    %v365 = vld [vmem:[#allocation5 + $0x524] sm:$0xf]
    %v366 = vld [vmem:[#allocation5 + $0x528] sm:$0xff]
    %v367 = vld [vmem:[#allocation5 + $0x530] sm:$0xff]
    %v368 = vld [vmem:[#allocation5 + $0x538] sm:$0xf]
    %v369 = vld [vmem:[#allocation5 + $0x53c] sm:$0xff]
    %v370 = vld [vmem:[#allocation5 + $0x544] sm:$0xff]
    %v371 = vld [vmem:[#allocation5 + $0x54c] sm:$0xf]
    %v372 = vld [vmem:[#allocation5 + $0x550] sm:$0xff]
    %v373 = vld [vmem:[#allocation5 + $0x558] sm:$0xff]
    %v374 = vld [vmem:[#allocation5 + $0x560] sm:$0xf]
    %v375 = vld [vmem:[#allocation5 + $0x564] sm:$0xff]
    %v376 = vld [vmem:[#allocation5 + $0x56c] sm:$0xff]
    %v377 = vld [vmem:[#allocation5 + $0x574] sm:$0xf]
    %v378 = vld [vmem:[#allocation5 + $0x578] sm:$0xff]
    %v379 = vld [vmem:[#allocation5 + $0x580] sm:$0xff]
    %v380 = vld [vmem:[#allocation5 + $0x588] sm:$0xf]
    %v381 = vld [vmem:[#allocation5 + $0x58c] sm:$0xff]
    %v382 = vld [vmem:[#allocation5 + $0x594] sm:$0xff]
    %v383 = vld [vmem:[#allocation5 + $0x59c] sm:$0xf]
    %v384 = vld [vmem:[#allocation5 + $0x5a0] sm:$0xff]
    %v385 = vld [vmem:[#allocation5 + $0x5a8] sm:$0xff]
    %v386 = vld [vmem:[#allocation5 + $0x5b0] sm:$0xf]
    %v387 = vld [vmem:[#allocation5 + $0x5b4] sm:$0xff]
    %v388 = vld [vmem:[#allocation5 + $0x5bc] sm:$0xff]
    %v389 = vld [vmem:[#allocation5 + $0x5c4] sm:$0xf]
    %v390 = vld [vmem:[#allocation5 + $0x5c8] sm:$0xff]
    %v391 = vld [vmem:[#allocation5 + $0x5d0] sm:$0xff]
    %v392 = vld [vmem:[#allocation5 + $0x5d8] sm:$0xf]
    %v393 = vld [vmem:[#allocation5 + $0x5dc] sm:$0xff]
    %v394 = vld [vmem:[#allocation5 + $0x5e4] sm:$0xff]
    %v395 = vld [vmem:[#allocation5 + $0x5ec] sm:$0xf]
    %v396 = vld [vmem:[#allocation5 + $0x5f0] sm:$0xff]
    %v397 = vld [vmem:[#allocation5 + $0x5f8] sm:$0xff]
    %v398 = vld [vmem:[#allocation5 + $0x600] sm:$0xf]
    %v399 = vld [vmem:[#allocation5 + $0x604] sm:$0xff]
    %v400 = vld [vmem:[#allocation5 + $0x60c] sm:$0xff]
    %v401 = vld [vmem:[#allocation5 + $0x614] sm:$0xf]
    %v402 = vld [vmem:[#allocation5 + $0x618] sm:$0xff]
    %v403 = vld [vmem:[#allocation5 + $0x620] sm:$0xff]
    %v404 = vld [vmem:[#allocation5 + $0x628] sm:$0xf]
    %v405 = vld [vmem:[#allocation5 + $0x62c] sm:$0xff]
    %v406 = vld [vmem:[#allocation5 + $0x634] sm:$0xff]
    %v407 = vld [vmem:[#allocation5 + $0x63c] sm:$0xf]
    %v408 = vld [vmem:[#allocation5 + $0x640] sm:$0xff]
    %v409 = vld [vmem:[#allocation5 + $0x648] sm:$0xff]
    %v410 = vld [vmem:[#allocation5 + $0x650] sm:$0xf]
    %v411 = vld [vmem:[#allocation5 + $0x654] sm:$0xff]
    %v412 = vld [vmem:[#allocation5 + $0x65c] sm:$0xff]
    %v413 = vld [vmem:[#allocation5 + $0x664] sm:$0xf]
    %v414 = vld [vmem:[#allocation5 + $0x668] sm:$0xff]
    %v415 = vld [vmem:[#allocation5 + $0x670] sm:$0xff]
    %v416 = vld [vmem:[#allocation5 + $0x678] sm:$0xf]
    %v417 = vld [vmem:[#allocation5 + $0x67c] sm:$0xff]
    %v418 = vld [vmem:[#allocation5 + $0x684] sm:$0xff]
    %v419 = vld [vmem:[#allocation5 + $0x68c] sm:$0xf]
    %v420 = vld [vmem:[#allocation5 + $0x690] sm:$0xff]
    %v421 = vld [vmem:[#allocation5 + $0x698] sm:$0xff]
    %v422 = vld [vmem:[#allocation5 + $0x6a0] sm:$0xf]
    %v423 = vld [vmem:[#allocation5 + $0x6a4] sm:$0xff]
    %v424 = vld [vmem:[#allocation5 + $0x6ac] sm:$0xff]
    %v425 = vld [vmem:[#allocation5 + $0x6b4] sm:$0xf]
    %v426 = vld [vmem:[#allocation5 + $0x6b8] sm:$0xff]
    %v427 = vld [vmem:[#allocation5 + $0x6c0] sm:$0xff]
    %v428 = vld [vmem:[#allocation5 + $0x6c8] sm:$0xf]
    %v429 = vld [vmem:[#allocation5 + $0x6cc] sm:$0xff]
    %v430 = vld [vmem:[#allocation5 + $0x6d4] sm:$0xff]
    %v431 = vld [vmem:[#allocation5 + $0x6dc] sm:$0xf]
    %v432 = vld [vmem:[#allocation5 + $0x6e0] sm:$0xff]
    %v433 = vld [vmem:[#allocation5 + $0x6e8] sm:$0xff]
    %v434 = vld [vmem:[#allocation5 + $0x6f0] sm:$0xf]
    %v435 = vld [vmem:[#allocation5 + $0x6f4] sm:$0xff]
    %v436 = vld [vmem:[#allocation5 + $0x6fc] sm:$0xff]
    %v437 = vld [vmem:[#allocation5 + $0x704] sm:$0xf]
    %v438 = vld [vmem:[#allocation5 + $0x708] sm:$0xff]
    %v439 = vld [vmem:[#allocation5 + $0x710] sm:$0xff]
    %v440 = vld [vmem:[#allocation5 + $0x718] sm:$0xf]
    %v441 = vld [vmem:[#allocation5 + $0x71c] sm:$0xff]
    %v442 = vld [vmem:[#allocation5 + $0x724] sm:$0xff]
    %v443 = vld [vmem:[#allocation5 + $0x72c] sm:$0xf]
    %v444 = vld [vmem:[#allocation5 + $0x730] sm:$0xff]
    %v445 = vld [vmem:[#allocation5 + $0x738] sm:$0xff]
    %v446 = vld [vmem:[#allocation5 + $0x740] sm:$0xf]
    %v447 = vld [vmem:[#allocation5 + $0x744] sm:$0xff]
    %v448 = vld [vmem:[#allocation5 + $0x74c] sm:$0xff]
    %v449 = vld [vmem:[#allocation5 + $0x754] sm:$0xf]
    %v450 = vld [vmem:[#allocation5 + $0x758] sm:$0xff]
    %v451 = vld [vmem:[#allocation5 + $0x760] sm:$0xff]
    %v452 = vld [vmem:[#allocation5 + $0x768] sm:$0xf]
    %v453 = vld [vmem:[#allocation5 + $0x76c] sm:$0xff]
    %v454 = vld [vmem:[#allocation5 + $0x774] sm:$0xff]
    %v455 = vld [vmem:[#allocation5 + $0x77c] sm:$0xf]
    %v456 = vld [vmem:[#allocation5 + $0x780] sm:$0xff]
    %v457 = vld [vmem:[#allocation5 + $0x788] sm:$0xff]
    %v458 = vld [vmem:[#allocation5 + $0x790] sm:$0xf]
    %v459 = vld [vmem:[#allocation5 + $0x794] sm:$0xff]
    %v460 = vld [vmem:[#allocation5 + $0x79c] sm:$0xff]
    %v461 = vld [vmem:[#allocation5 + $0x7a4] sm:$0xf]
    %v462 = vld [vmem:[#allocation5 + $0x7a8] sm:$0xff]
    %v463 = vld [vmem:[#allocation5 + $0x7b0] sm:$0xff]
    %v464 = vld [vmem:[#allocation5 + $0x7b8] sm:$0xf]
    %v465 = vld [vmem:[#allocation5 + $0x7bc] sm:$0xff]
    %v466 = vld [vmem:[#allocation5 + $0x7c4] sm:$0xff]
    %v467 = vld [vmem:[#allocation5 + $0x7cc] sm:$0xf]
    %v468 = vld [vmem:[#allocation5 + $0x7d0] sm:$0xff]
    %v469 = vld [vmem:[#allocation5 + $0x7d8] sm:$0xff]
    %v470 = vld [vmem:[#allocation5 + $0x7e0] sm:$0xf]
    %v471 = vld [vmem:[#allocation5 + $0x7e4] sm:$0xff]
    %v472 = vld [vmem:[#allocation5 + $0x7ec] sm:$0xff]
    %v473 = vld [vmem:[#allocation5 + $0x7f4] sm:$0xf]
    %v474 = vld [vmem:[#allocation5 + $0x7f8] sm:$0xff]
    %v475 = vld [vmem:[#allocation5 + $0x800] sm:$0xff]
    %v476 = vld [vmem:[#allocation5 + $0x808] sm:$0xf]
    %v477 = vld [vmem:[#allocation5 + $0x80c] sm:$0xff]
    %v478 = vld [vmem:[#allocation5 + $0x814] sm:$0xff]
    %v479 = vld [vmem:[#allocation5 + $0x81c] sm:$0xf]
    %v480 = vld [vmem:[#allocation5 + $0x820] sm:$0xff]
    %v481 = vld [vmem:[#allocation5 + $0x828] sm:$0xff]
    %v482 = vld [vmem:[#allocation5 + $0x830] sm:$0xf]
    %v483 = vld [vmem:[#allocation5 + $0x834] sm:$0xff]
    %v484 = vld [vmem:[#allocation5 + $0x83c] sm:$0xff]
    %v485 = vld [vmem:[#allocation5 + $0x844] sm:$0xf]
    %v486 = vld [vmem:[#allocation5 + $0x848] sm:$0xff]
    %v487 = vld [vmem:[#allocation5 + $0x850] sm:$0xff]
    %v488 = vld [vmem:[#allocation5 + $0x858] sm:$0xf]
    %v489 = vld [vmem:[#allocation5 + $0x85c] sm:$0xff]
    %v490 = vld [vmem:[#allocation5 + $0x864] sm:$0xff]
    %v491 = vld [vmem:[#allocation5 + $0x86c] sm:$0xf]
    %v492 = vld [vmem:[#allocation5 + $0x870] sm:$0xff]
    %v493 = vld [vmem:[#allocation5 + $0x878] sm:$0xff]
    %v494 = vld [vmem:[#allocation5 + $0x880] sm:$0xf]
    %v495 = vld [vmem:[#allocation5 + $0x884] sm:$0xff]
    %v496 = vld [vmem:[#allocation5 + $0x88c] sm:$0xff]
    %v497 = vld [vmem:[#allocation5 + $0x894] sm:$0xf]
    %v498 = vld [vmem:[#allocation5 + $0x898] sm:$0xff]
    %v499 = vld [vmem:[#allocation5 + $0x8a0] sm:$0xff]
    %v500 = vld [vmem:[#allocation5 + $0x8a8] sm:$0xf]
    %v501 = vld [vmem:[#allocation5 + $0x8ac] sm:$0xff]
    %v502 = vld [vmem:[#allocation5 + $0x8b4] sm:$0xff]
    %v503 = vld [vmem:[#allocation5 + $0x8bc] sm:$0xf]
    %v504 = vld [vmem:[#allocation7] sm:$0x1f]
    %v506 = vlaneseq
    %v507 = vshrl.u32 %v506, 7
    %v508 = vsub.s32 0, %v507
    %v509 = vrot.slane %v504, %v508
    %v510 = vlaneseq
    %v511 = vshrl.u32 %v510, 7
    %v512 = vsub.s32 1, %v511
    %v513 = vrot.slane %v504, %v512
    %v514 = vlaneseq
    %v515 = vshrl.u32 %v514, 7
    %v516 = vsub.s32 2, %v515
    %v517 = vrot.slane %v504, %v516
    %v518 = vlaneseq
    %v519 = vshrl.u32 %v518, 7
    %v520 = vsub.s32 3, %v519
    %v521 = vrot.slane %v504, %v520
    %v522 = vlaneseq
    %v523 = vshrl.u32 %v522, 7
    %v524 = vsub.s32 4, %v523
    %v525 = vrot.slane %v504, %v524
    %v535 = vunpack.c.l.b16 %v164
    %v536 = vunpack.c.h.b16 %v164
    %v537 = vunpack.c.l.b16 %v165
    %v538 = vunpack.c.h.b16 %v165
    %v539 = vunpack.c.l.b16 %v166
    %v540 = vunpack.c.h.b16 %v166
    %v541 = vunpack.c.l.b16 %v167
    %v542 = vpack.c.b16 %v535, %v535
    %v543 = vpack.c.b16 %v536, %v536
    %v544 = vpack.c.b16 %v537, %v537
    %v545 = vpack.c.b16 %v538, %v538
    %v546 = vpack.c.b16 %v539, %v539
    %v547 = vpack.c.b16 %v540, %v540
    %v548 = vpack.c.b16 %v541, %v541
    %v892 = vunpack.c.l.b16 %v168
    %v893 = vunpack.c.h.b16 %v168
    %v894 = vunpack.c.l.b16 %v169
    %v895 = vunpack.c.h.b16 %v169
    %v896 = vunpack.c.l.b16 %v170
    %v897 = vunpack.c.l.b16 %v171
    %v898 = vunpack.c.h.b16 %v171
    %v899 = vunpack.c.l.b16 %v172
    %v900 = vunpack.c.h.b16 %v172
    %v901 = vunpack.c.l.b16 %v173
    %v902 = vunpack.c.l.b16 %v174
    %v903 = vunpack.c.h.b16 %v174
    %v904 = vunpack.c.l.b16 %v175
    %v905 = vunpack.c.h.b16 %v175
    %v906 = vunpack.c.l.b16 %v176
    %v907 = vunpack.c.l.b16 %v177
    %v908 = vunpack.c.h.b16 %v177
    %v909 = vunpack.c.l.b16 %v178
    %v910 = vunpack.c.h.b16 %v178
    %v911 = vunpack.c.l.b16 %v179
    %v912 = vunpack.c.l.b16 %v180
    %v913 = vunpack.c.h.b16 %v180
    %v914 = vunpack.c.l.b16 %v181
    %v915 = vunpack.c.h.b16 %v181
    %v916 = vunpack.c.l.b16 %v182
    %v917 = vunpack.c.l.b16 %v183
    %v918 = vunpack.c.h.b16 %v183
    %v919 = vunpack.c.l.b16 %v184
    %v920 = vunpack.c.h.b16 %v184
    %v921 = vunpack.c.l.b16 %v185
    %v922 = vunpack.c.l.b16 %v186
    %v923 = vunpack.c.h.b16 %v186
    %v924 = vunpack.c.l.b16 %v187
    %v925 = vunpack.c.h.b16 %v187
    %v926 = vunpack.c.l.b16 %v188
    %v927 = vunpack.c.l.b16 %v189
    %v928 = vunpack.c.h.b16 %v189
    %v929 = vunpack.c.l.b16 %v190
    %v930 = vunpack.c.h.b16 %v190
    %v931 = vunpack.c.l.b16 %v191
    %v932 = vunpack.c.l.b16 %v192
    %v933 = vunpack.c.h.b16 %v192
    %v934 = vunpack.c.l.b16 %v193
    %v935 = vunpack.c.h.b16 %v193
    %v936 = vunpack.c.l.b16 %v194
    %v937 = vunpack.c.l.b16 %v195
    %v938 = vunpack.c.h.b16 %v195
    %v939 = vunpack.c.l.b16 %v196
    %v940 = vunpack.c.h.b16 %v196
    %v941 = vunpack.c.l.b16 %v197
    %v942 = vunpack.c.l.b16 %v198
    %v943 = vunpack.c.h.b16 %v198
    %v944 = vunpack.c.l.b16 %v199
    %v945 = vunpack.c.h.b16 %v199
    %v946 = vunpack.c.l.b16 %v200
    %v947 = vunpack.c.l.b16 %v201
    %v948 = vunpack.c.h.b16 %v201
    %v949 = vunpack.c.l.b16 %v202
    %v950 = vunpack.c.h.b16 %v202
    %v951 = vunpack.c.l.b16 %v203
    %v952 = vunpack.c.l.b16 %v204
    %v953 = vunpack.c.h.b16 %v204
    %v954 = vunpack.c.l.b16 %v205
    %v955 = vunpack.c.h.b16 %v205
    %v956 = vunpack.c.l.b16 %v206
    %v957 = vunpack.c.l.b16 %v207
    %v958 = vunpack.c.h.b16 %v207
    %v959 = vunpack.c.l.b16 %v208
    %v960 = vunpack.c.h.b16 %v208
    %v961 = vunpack.c.l.b16 %v209
    %v962 = vunpack.c.l.b16 %v210
    %v963 = vunpack.c.h.b16 %v210
    %v964 = vunpack.c.l.b16 %v211
    %v965 = vunpack.c.h.b16 %v211
    %v966 = vunpack.c.l.b16 %v212
    %v967 = vunpack.c.l.b16 %v213
    %v968 = vunpack.c.h.b16 %v213
    %v969 = vunpack.c.l.b16 %v214
    %v970 = vunpack.c.h.b16 %v214
    %v971 = vunpack.c.l.b16 %v215
    %v972 = vunpack.c.l.b16 %v216
    %v973 = vunpack.c.h.b16 %v216
    %v974 = vunpack.c.l.b16 %v217
    %v975 = vunpack.c.h.b16 %v217
    %v976 = vunpack.c.l.b16 %v218
    %v977 = vunpack.c.l.b16 %v219
    %v978 = vunpack.c.h.b16 %v219
    %v979 = vunpack.c.l.b16 %v220
    %v980 = vunpack.c.h.b16 %v220
    %v981 = vunpack.c.l.b16 %v221
    %v982 = vunpack.c.l.b16 %v222
    %v983 = vunpack.c.h.b16 %v222
    %v984 = vunpack.c.l.b16 %v223
    %v985 = vunpack.c.h.b16 %v223
    %v986 = vunpack.c.l.b16 %v224
    %v987 = vunpack.c.l.b16 %v225
    %v988 = vunpack.c.h.b16 %v225
    %v989 = vunpack.c.l.b16 %v226
    %v990 = vunpack.c.h.b16 %v226
    %v991 = vunpack.c.l.b16 %v227
    %v992 = vunpack.c.l.b16 %v228
    %v993 = vunpack.c.h.b16 %v228
    %v994 = vunpack.c.l.b16 %v229
    %v995 = vunpack.c.h.b16 %v229
    %v996 = vunpack.c.l.b16 %v230
    %v997 = vunpack.c.l.b16 %v231
    %v998 = vunpack.c.h.b16 %v231
    %v999 = vunpack.c.l.b16 %v232
    %v1000 = vunpack.c.h.b16 %v232
    %v1001 = vunpack.c.l.b16 %v233
    %v1002 = vunpack.c.l.b16 %v234
    %v1003 = vunpack.c.h.b16 %v234
    %v1004 = vunpack.c.l.b16 %v235
    %v1005 = vunpack.c.h.b16 %v235
    %v1006 = vunpack.c.l.b16 %v236
    %v1007 = vunpack.c.l.b16 %v237
    %v1008 = vunpack.c.h.b16 %v237
    %v1009 = vunpack.c.l.b16 %v238
    %v1010 = vunpack.c.h.b16 %v238
    %v1011 = vunpack.c.l.b16 %v239
    %v1012 = vunpack.c.l.b16 %v240
    %v1013 = vunpack.c.h.b16 %v240
    %v1014 = vunpack.c.l.b16 %v241
    %v1015 = vunpack.c.h.b16 %v241
    %v1016 = vunpack.c.l.b16 %v242
    %v1017 = vunpack.c.l.b16 %v243
    %v1018 = vunpack.c.h.b16 %v243
    %v1019 = vunpack.c.l.b16 %v244
    %v1020 = vunpack.c.h.b16 %v244
    %v1021 = vunpack.c.l.b16 %v245
    %v1022 = vunpack.c.l.b16 %v246
    %v1023 = vunpack.c.h.b16 %v246
    %v1024 = vunpack.c.l.b16 %v247
    %v1025 = vunpack.c.h.b16 %v247
    %v1026 = vunpack.c.l.b16 %v248
    %v1027 = vunpack.c.l.b16 %v249
    %v1028 = vunpack.c.h.b16 %v249
    %v1029 = vunpack.c.l.b16 %v250
    %v1030 = vunpack.c.h.b16 %v250
    %v1031 = vunpack.c.l.b16 %v251
    %v1032 = vunpack.c.l.b16 %v252
    %v1033 = vunpack.c.h.b16 %v252
    %v1034 = vunpack.c.l.b16 %v253
    %v1035 = vunpack.c.h.b16 %v253
    %v1036 = vunpack.c.l.b16 %v254
    %v1037 = vunpack.c.l.b16 %v255
    %v1038 = vunpack.c.h.b16 %v255
    %v1039 = vunpack.c.l.b16 %v256
    %v1040 = vunpack.c.h.b16 %v256
    %v1041 = vunpack.c.l.b16 %v257
    %v1042 = vunpack.c.l.b16 %v258
    %v1043 = vunpack.c.h.b16 %v258
    %v1044 = vunpack.c.l.b16 %v259
    %v1045 = vunpack.c.h.b16 %v259
    %v1046 = vunpack.c.l.b16 %v260
    %v1047 = vunpack.c.l.b16 %v261
    %v1048 = vunpack.c.h.b16 %v261
    %v1049 = vunpack.c.l.b16 %v262
    %v1050 = vunpack.c.h.b16 %v262
    %v1051 = vunpack.c.l.b16 %v263
    %v1052 = vunpack.c.l.b16 %v264
    %v1053 = vunpack.c.h.b16 %v264
    %v1054 = vunpack.c.l.b16 %v265
    %v1055 = vunpack.c.h.b16 %v265
    %v1056 = vunpack.c.l.b16 %v266
    %v1057 = vunpack.c.l.b16 %v267
    %v1058 = vunpack.c.h.b16 %v267
    %v1059 = vunpack.c.l.b16 %v268
    %v1060 = vunpack.c.h.b16 %v268
    %v1061 = vunpack.c.l.b16 %v269
    %v1062 = vunpack.c.l.b16 %v270
    %v1063 = vunpack.c.h.b16 %v270
    %v1064 = vunpack.c.l.b16 %v271
    %v1065 = vunpack.c.h.b16 %v271
    %v1066 = vunpack.c.l.b16 %v272
    %v1067 = vunpack.c.l.b16 %v273
    %v1068 = vunpack.c.h.b16 %v273
    %v1069 = vunpack.c.l.b16 %v274
    %v1070 = vunpack.c.h.b16 %v274
    %v1071 = vunpack.c.l.b16 %v275
    %v1072 = vunpack.c.l.b16 %v276
    %v1073 = vunpack.c.h.b16 %v276
    %v1074 = vunpack.c.l.b16 %v277
    %v1075 = vunpack.c.h.b16 %v277
    %v1076 = vunpack.c.l.b16 %v278
    %v1077 = vunpack.c.l.b16 %v279
    %v1078 = vunpack.c.h.b16 %v279
    %v1079 = vunpack.c.l.b16 %v280
    %v1080 = vunpack.c.h.b16 %v280
    %v1081 = vunpack.c.l.b16 %v281
    %v1082 = vunpack.c.l.b16 %v282
    %v1083 = vunpack.c.h.b16 %v282
    %v1084 = vunpack.c.l.b16 %v283
    %v1085 = vunpack.c.h.b16 %v283
    %v1086 = vunpack.c.l.b16 %v284
    %v1087 = vunpack.c.l.b16 %v285
    %v1088 = vunpack.c.h.b16 %v285
    %v1089 = vunpack.c.l.b16 %v286
    %v1090 = vunpack.c.h.b16 %v286
    %v1091 = vunpack.c.l.b16 %v287
    %v1092 = vunpack.c.l.b16 %v288
    %v1093 = vunpack.c.h.b16 %v288
    %v1094 = vunpack.c.l.b16 %v289
    %v1095 = vunpack.c.h.b16 %v289
    %v1096 = vunpack.c.l.b16 %v290
    %v1097 = vunpack.c.l.b16 %v291
    %v1098 = vunpack.c.h.b16 %v291
    %v1099 = vunpack.c.l.b16 %v292
    %v1100 = vunpack.c.h.b16 %v292
    %v1101 = vunpack.c.l.b16 %v293
    %v1102 = vunpack.c.l.b16 %v294
    %v1103 = vunpack.c.h.b16 %v294
    %v1104 = vunpack.c.l.b16 %v295
    %v1105 = vunpack.c.h.b16 %v295
    %v1106 = vunpack.c.l.b16 %v296
    %v1107 = vunpack.c.l.b16 %v297
    %v1108 = vunpack.c.h.b16 %v297
    %v1109 = vunpack.c.l.b16 %v298
    %v1110 = vunpack.c.h.b16 %v298
    %v1111 = vunpack.c.l.b16 %v299
    %v1112 = vunpack.c.l.b16 %v300
    %v1113 = vunpack.c.h.b16 %v300
    %v1114 = vunpack.c.l.b16 %v301
    %v1115 = vunpack.c.h.b16 %v301
    %v1116 = vunpack.c.l.b16 %v302
    %v1117 = vunpack.c.l.b16 %v303
    %v1118 = vunpack.c.h.b16 %v303
    %v1119 = vunpack.c.l.b16 %v304
    %v1120 = vunpack.c.h.b16 %v304
    %v1121 = vunpack.c.l.b16 %v305
    %v1122 = vunpack.c.l.b16 %v306
    %v1123 = vunpack.c.h.b16 %v306
    %v1124 = vunpack.c.l.b16 %v307
    %v1125 = vunpack.c.h.b16 %v307
    %v1126 = vunpack.c.l.b16 %v308
    %v1127 = vunpack.c.l.b16 %v309
    %v1128 = vunpack.c.h.b16 %v309
    %v1129 = vunpack.c.l.b16 %v310
    %v1130 = vunpack.c.h.b16 %v310
    %v1131 = vunpack.c.l.b16 %v311
    %v1132 = vunpack.c.l.b16 %v312
    %v1133 = vunpack.c.h.b16 %v312
    %v1134 = vunpack.c.l.b16 %v313
    %v1135 = vunpack.c.h.b16 %v313
    %v1136 = vunpack.c.l.b16 %v314
    %v1137 = vunpack.c.l.b16 %v315
    %v1138 = vunpack.c.h.b16 %v315
    %v1139 = vunpack.c.l.b16 %v316
    %v1140 = vunpack.c.h.b16 %v316
    %v1141 = vunpack.c.l.b16 %v317
    %v1142 = vunpack.c.l.b16 %v318
    %v1143 = vunpack.c.h.b16 %v318
    %v1144 = vunpack.c.l.b16 %v319
    %v1145 = vunpack.c.h.b16 %v319
    %v1146 = vunpack.c.l.b16 %v320
    %v1147 = vunpack.c.l.b16 %v321
    %v1148 = vunpack.c.h.b16 %v321
    %v1149 = vunpack.c.l.b16 %v322
    %v1150 = vunpack.c.h.b16 %v322
    %v1151 = vunpack.c.l.b16 %v323
    %v1152 = vunpack.c.l.b16 %v324
    %v1153 = vunpack.c.h.b16 %v324
    %v1154 = vunpack.c.l.b16 %v325
    %v1155 = vunpack.c.h.b16 %v325
    %v1156 = vunpack.c.l.b16 %v326
    %v1157 = vunpack.c.l.b16 %v327
    %v1158 = vunpack.c.h.b16 %v327
    %v1159 = vunpack.c.l.b16 %v328
    %v1160 = vunpack.c.h.b16 %v328
    %v1161 = vunpack.c.l.b16 %v329
    %v1162 = vunpack.c.l.b16 %v330
    %v1163 = vunpack.c.h.b16 %v330
    %v1164 = vunpack.c.l.b16 %v331
    %v1165 = vunpack.c.h.b16 %v331
    %v1166 = vunpack.c.l.b16 %v332
    %v1167 = vunpack.c.l.b16 %v333
    %v1168 = vunpack.c.h.b16 %v333
    %v1169 = vunpack.c.l.b16 %v334
    %v1170 = vunpack.c.h.b16 %v334
    %v1171 = vunpack.c.l.b16 %v335
    %v1172 = vunpack.c.l.b16 %v336
    %v1173 = vunpack.c.h.b16 %v336
    %v1174 = vunpack.c.l.b16 %v337
    %v1175 = vunpack.c.h.b16 %v337
    %v1176 = vunpack.c.l.b16 %v338
    %v1177 = vunpack.c.l.b16 %v339
    %v1178 = vunpack.c.h.b16 %v339
    %v1179 = vunpack.c.l.b16 %v340
    %v1180 = vunpack.c.h.b16 %v340
    %v1181 = vunpack.c.l.b16 %v341
    %v1182 = vunpack.c.l.b16 %v342
    %v1183 = vunpack.c.h.b16 %v342
    %v1184 = vunpack.c.l.b16 %v343
    %v1185 = vunpack.c.h.b16 %v343
    %v1186 = vunpack.c.l.b16 %v344
    %v1187 = vunpack.c.l.b16 %v345
    %v1188 = vunpack.c.h.b16 %v345
    %v1189 = vunpack.c.l.b16 %v346
    %v1190 = vunpack.c.h.b16 %v346
    %v1191 = vunpack.c.l.b16 %v347
    %v1192 = vunpack.c.l.b16 %v348
    %v1193 = vunpack.c.h.b16 %v348
    %v1194 = vunpack.c.l.b16 %v349
    %v1195 = vunpack.c.h.b16 %v349
    %v1196 = vunpack.c.l.b16 %v350
    %v1197 = vunpack.c.l.b16 %v351
    %v1198 = vunpack.c.h.b16 %v351
    %v1199 = vunpack.c.l.b16 %v352
    %v1200 = vunpack.c.h.b16 %v352
    %v1201 = vunpack.c.l.b16 %v353
    %v1202 = vunpack.c.l.b16 %v354
    %v1203 = vunpack.c.h.b16 %v354
    %v1204 = vunpack.c.l.b16 %v355
    %v1205 = vunpack.c.h.b16 %v355
    %v1206 = vunpack.c.l.b16 %v356
    %v1207 = vunpack.c.l.b16 %v357
    %v1208 = vunpack.c.h.b16 %v357
    %v1209 = vunpack.c.l.b16 %v358
    %v1210 = vunpack.c.h.b16 %v358
    %v1211 = vunpack.c.l.b16 %v359
    %v1212 = vunpack.c.l.b16 %v360
    %v1213 = vunpack.c.h.b16 %v360
    %v1214 = vunpack.c.l.b16 %v361
    %v1215 = vunpack.c.h.b16 %v361
    %v1216 = vunpack.c.l.b16 %v362
    %v1217 = vunpack.c.l.b16 %v363
    %v1218 = vunpack.c.h.b16 %v363
    %v1219 = vunpack.c.l.b16 %v364
    %v1220 = vunpack.c.h.b16 %v364
    %v1221 = vunpack.c.l.b16 %v365
    %v1222 = vunpack.c.l.b16 %v366
    %v1223 = vunpack.c.h.b16 %v366
    %v1224 = vunpack.c.l.b16 %v367
    %v1225 = vunpack.c.h.b16 %v367
    %v1226 = vunpack.c.l.b16 %v368
    %v1227 = vunpack.c.l.b16 %v369
    %v1228 = vunpack.c.h.b16 %v369
    %v1229 = vunpack.c.l.b16 %v370
    %v1230 = vunpack.c.h.b16 %v370
    %v1231 = vunpack.c.l.b16 %v371
    %v1232 = vunpack.c.l.b16 %v372
    %v1233 = vunpack.c.h.b16 %v372
    %v1234 = vunpack.c.l.b16 %v373
    %v1235 = vunpack.c.h.b16 %v373
    %v1236 = vunpack.c.l.b16 %v374
    %v1237 = vunpack.c.l.b16 %v375
    %v1238 = vunpack.c.h.b16 %v375
    %v1239 = vunpack.c.l.b16 %v376
    %v1240 = vunpack.c.h.b16 %v376
    %v1241 = vunpack.c.l.b16 %v377
    %v1242 = vunpack.c.l.b16 %v378
    %v1243 = vunpack.c.h.b16 %v378
    %v1244 = vunpack.c.l.b16 %v379
    %v1245 = vunpack.c.h.b16 %v379
    %v1246 = vunpack.c.l.b16 %v380
    %v1247 = vunpack.c.l.b16 %v381
    %v1248 = vunpack.c.h.b16 %v381
    %v1249 = vunpack.c.l.b16 %v382
    %v1250 = vunpack.c.h.b16 %v382
    %v1251 = vunpack.c.l.b16 %v383
    %v1252 = vunpack.c.l.b16 %v384
    %v1253 = vunpack.c.h.b16 %v384
    %v1254 = vunpack.c.l.b16 %v385
    %v1255 = vunpack.c.h.b16 %v385
    %v1256 = vunpack.c.l.b16 %v386
    %v1257 = vunpack.c.l.b16 %v387
    %v1258 = vunpack.c.h.b16 %v387
    %v1259 = vunpack.c.l.b16 %v388
    %v1260 = vunpack.c.h.b16 %v388
    %v1261 = vunpack.c.l.b16 %v389
    %v1262 = vunpack.c.l.b16 %v390
    %v1263 = vunpack.c.h.b16 %v390
    %v1264 = vunpack.c.l.b16 %v391
    %v1265 = vunpack.c.h.b16 %v391
    %v1266 = vunpack.c.l.b16 %v392
    %v1267 = vunpack.c.l.b16 %v393
    %v1268 = vunpack.c.h.b16 %v393
    %v1269 = vunpack.c.l.b16 %v394
    %v1270 = vunpack.c.h.b16 %v394
    %v1271 = vunpack.c.l.b16 %v395
    %v1272 = vunpack.c.l.b16 %v396
    %v1273 = vunpack.c.h.b16 %v396
    %v1274 = vunpack.c.l.b16 %v397
    %v1275 = vunpack.c.h.b16 %v397
    %v1276 = vunpack.c.l.b16 %v398
    %v1277 = vunpack.c.l.b16 %v399
    %v1278 = vunpack.c.h.b16 %v399
    %v1279 = vunpack.c.l.b16 %v400
    %v1280 = vunpack.c.h.b16 %v400
    %v1281 = vunpack.c.l.b16 %v401
    %v1282 = vunpack.c.l.b16 %v402
    %v1283 = vunpack.c.h.b16 %v402
    %v1284 = vunpack.c.l.b16 %v403
    %v1285 = vunpack.c.h.b16 %v403
    %v1286 = vunpack.c.l.b16 %v404
    %v1287 = vunpack.c.l.b16 %v405
    %v1288 = vunpack.c.h.b16 %v405
    %v1289 = vunpack.c.l.b16 %v406
    %v1290 = vunpack.c.h.b16 %v406
    %v1291 = vunpack.c.l.b16 %v407
    %v1292 = vunpack.c.l.b16 %v408
    %v1293 = vunpack.c.h.b16 %v408
    %v1294 = vunpack.c.l.b16 %v409
    %v1295 = vunpack.c.h.b16 %v409
    %v1296 = vunpack.c.l.b16 %v410
    %v1297 = vunpack.c.l.b16 %v411
    %v1298 = vunpack.c.h.b16 %v411
    %v1299 = vunpack.c.l.b16 %v412
    %v1300 = vunpack.c.h.b16 %v412
    %v1301 = vunpack.c.l.b16 %v413
    %v1302 = vunpack.c.l.b16 %v414
    %v1303 = vunpack.c.h.b16 %v414
    %v1304 = vunpack.c.l.b16 %v415
    %v1305 = vunpack.c.h.b16 %v415
    %v1306 = vunpack.c.l.b16 %v416
    %v1307 = vunpack.c.l.b16 %v417
    %v1308 = vunpack.c.h.b16 %v417
    %v1309 = vunpack.c.l.b16 %v418
    %v1310 = vunpack.c.h.b16 %v418
    %v1311 = vunpack.c.l.b16 %v419
    %v1312 = vunpack.c.l.b16 %v420
    %v1313 = vunpack.c.h.b16 %v420
    %v1314 = vunpack.c.l.b16 %v421
    %v1315 = vunpack.c.h.b16 %v421
    %v1316 = vunpack.c.l.b16 %v422
    %v1317 = vunpack.c.l.b16 %v423
    %v1318 = vunpack.c.h.b16 %v423
    %v1319 = vunpack.c.l.b16 %v424
    %v1320 = vunpack.c.h.b16 %v424
    %v1321 = vunpack.c.l.b16 %v425
    %v1322 = vunpack.c.l.b16 %v426
    %v1323 = vunpack.c.h.b16 %v426
    %v1324 = vunpack.c.l.b16 %v427
    %v1325 = vunpack.c.h.b16 %v427
    %v1326 = vunpack.c.l.b16 %v428
    %v1327 = vunpack.c.l.b16 %v429
    %v1328 = vunpack.c.h.b16 %v429
    %v1329 = vunpack.c.l.b16 %v430
    %v1330 = vunpack.c.h.b16 %v430
    %v1331 = vunpack.c.l.b16 %v431
    %v1332 = vunpack.c.l.b16 %v432
    %v1333 = vunpack.c.h.b16 %v432
    %v1334 = vunpack.c.l.b16 %v433
    %v1335 = vunpack.c.h.b16 %v433
    %v1336 = vunpack.c.l.b16 %v434
    %v1337 = vunpack.c.l.b16 %v435
    %v1338 = vunpack.c.h.b16 %v435
    %v1339 = vunpack.c.l.b16 %v436
    %v1340 = vunpack.c.h.b16 %v436
    %v1341 = vunpack.c.l.b16 %v437
    %v1342 = vunpack.c.l.b16 %v438
    %v1343 = vunpack.c.h.b16 %v438
    %v1344 = vunpack.c.l.b16 %v439
    %v1345 = vunpack.c.h.b16 %v439
    %v1346 = vunpack.c.l.b16 %v440
    %v1347 = vunpack.c.l.b16 %v441
    %v1348 = vunpack.c.h.b16 %v441
    %v1349 = vunpack.c.l.b16 %v442
    %v1350 = vunpack.c.h.b16 %v442
    %v1351 = vunpack.c.l.b16 %v443
    %v1352 = vunpack.c.l.b16 %v444
    %v1353 = vunpack.c.h.b16 %v444
    %v1354 = vunpack.c.l.b16 %v445
    %v1355 = vunpack.c.h.b16 %v445
    %v1356 = vunpack.c.l.b16 %v446
    %v1357 = vunpack.c.l.b16 %v447
    %v1358 = vunpack.c.h.b16 %v447
    %v1359 = vunpack.c.l.b16 %v448
    %v1360 = vunpack.c.h.b16 %v448
    %v1361 = vunpack.c.l.b16 %v449
    %v1362 = vunpack.c.l.b16 %v450
    %v1363 = vunpack.c.h.b16 %v450
    %v1364 = vunpack.c.l.b16 %v451
    %v1365 = vunpack.c.h.b16 %v451
    %v1366 = vunpack.c.l.b16 %v452
    %v1367 = vunpack.c.l.b16 %v453
    %v1368 = vunpack.c.h.b16 %v453
    %v1369 = vunpack.c.l.b16 %v454
    %v1370 = vunpack.c.h.b16 %v454
    %v1371 = vunpack.c.l.b16 %v455
    %v1372 = vunpack.c.l.b16 %v456
    %v1373 = vunpack.c.h.b16 %v456
    %v1374 = vunpack.c.l.b16 %v457
    %v1375 = vunpack.c.h.b16 %v457
    %v1376 = vunpack.c.l.b16 %v458
    %v1377 = vunpack.c.l.b16 %v459
    %v1378 = vunpack.c.h.b16 %v459
    %v1379 = vunpack.c.l.b16 %v460
    %v1380 = vunpack.c.h.b16 %v460
    %v1381 = vunpack.c.l.b16 %v461
    %v1382 = vunpack.c.l.b16 %v462
    %v1383 = vunpack.c.h.b16 %v462
    %v1384 = vunpack.c.l.b16 %v463
    %v1385 = vunpack.c.h.b16 %v463
    %v1386 = vunpack.c.l.b16 %v464
    %v1387 = vunpack.c.l.b16 %v465
    %v1388 = vunpack.c.h.b16 %v465
    %v1389 = vunpack.c.l.b16 %v466
    %v1390 = vunpack.c.h.b16 %v466
    %v1391 = vunpack.c.l.b16 %v467
    %v1392 = vunpack.c.l.b16 %v468
    %v1393 = vunpack.c.h.b16 %v468
    %v1394 = vunpack.c.l.b16 %v469
    %v1395 = vunpack.c.h.b16 %v469
    %v1396 = vunpack.c.l.b16 %v470
    %v1397 = vunpack.c.l.b16 %v471
    %v1398 = vunpack.c.h.b16 %v471
    %v1399 = vunpack.c.l.b16 %v472
    %v1400 = vunpack.c.h.b16 %v472
    %v1401 = vunpack.c.l.b16 %v473
    %v1402 = vunpack.c.l.b16 %v474
    %v1403 = vunpack.c.h.b16 %v474
    %v1404 = vunpack.c.l.b16 %v475
    %v1405 = vunpack.c.h.b16 %v475
    %v1406 = vunpack.c.l.b16 %v476
    %v1407 = vunpack.c.l.b16 %v477
    %v1408 = vunpack.c.h.b16 %v477
    %v1409 = vunpack.c.l.b16 %v478
    %v1410 = vunpack.c.h.b16 %v478
    %v1411 = vunpack.c.l.b16 %v479
    %v1412 = vunpack.c.l.b16 %v480
    %v1413 = vunpack.c.h.b16 %v480
    %v1414 = vunpack.c.l.b16 %v481
    %v1415 = vunpack.c.h.b16 %v481
    %v1416 = vunpack.c.l.b16 %v482
    %v1417 = vunpack.c.l.b16 %v483
    %v1418 = vunpack.c.h.b16 %v483
    %v1419 = vunpack.c.l.b16 %v484
    %v1420 = vunpack.c.h.b16 %v484
    %v1421 = vunpack.c.l.b16 %v485
    %v1422 = vunpack.c.l.b16 %v486
    %v1423 = vunpack.c.h.b16 %v486
    %v1424 = vunpack.c.l.b16 %v487
    %v1425 = vunpack.c.h.b16 %v487
    %v1426 = vunpack.c.l.b16 %v488
    %v1427 = vunpack.c.l.b16 %v489
    %v1428 = vunpack.c.h.b16 %v489
    %v1429 = vunpack.c.l.b16 %v490
    %v1430 = vunpack.c.h.b16 %v490
    %v1431 = vunpack.c.l.b16 %v491
    %v1432 = vunpack.c.l.b16 %v492
    %v1433 = vunpack.c.h.b16 %v492
    %v1434 = vunpack.c.l.b16 %v493
    %v1435 = vunpack.c.h.b16 %v493
    %v1436 = vunpack.c.l.b16 %v494
    %v1437 = vunpack.c.l.b16 %v495
    %v1438 = vunpack.c.h.b16 %v495
    %v1439 = vunpack.c.l.b16 %v496
    %v1440 = vunpack.c.h.b16 %v496
    %v1441 = vunpack.c.l.b16 %v497
    %v1442 = vunpack.c.l.b16 %v498
    %v1443 = vunpack.c.h.b16 %v498
    %v1444 = vunpack.c.l.b16 %v499
    %v1445 = vunpack.c.h.b16 %v499
    %v1446 = vunpack.c.l.b16 %v500
    %v1447 = vunpack.c.l.b16 %v501
    %v1448 = vunpack.c.h.b16 %v501
    %v1449 = vunpack.c.l.b16 %v502
    %v1450 = vunpack.c.h.b16 %v502
    %v1451 = vunpack.c.l.b16 %v503
    %v1452 = vpack.c.b16 %v897, %v892
    %v1453 = vpack.c.b16 %v898, %v893
    %v1454 = vpack.c.b16 %v899, %v894
    %v1455 = vpack.c.b16 %v900, %v895
    %v1456 = vpack.c.b16 %v901, %v896
    %v1457 = vpack.c.b16 %v907, %v902
    %v1458 = vpack.c.b16 %v908, %v903
    %v1459 = vpack.c.b16 %v909, %v904
    %v1460 = vpack.c.b16 %v910, %v905
    %v1461 = vpack.c.b16 %v911, %v906
    %v1462 = vpack.c.b16 %v917, %v912
    %v1463 = vpack.c.b16 %v918, %v913
    %v1464 = vpack.c.b16 %v919, %v914
    %v1465 = vpack.c.b16 %v920, %v915
    %v1466 = vpack.c.b16 %v921, %v916
    %v1467 = vpack.c.b16 %v927, %v922
    %v1468 = vpack.c.b16 %v928, %v923
    %v1469 = vpack.c.b16 %v929, %v924
    %v1470 = vpack.c.b16 %v930, %v925
    %v1471 = vpack.c.b16 %v931, %v926
    %v1472 = vpack.c.b16 %v937, %v932
    %v1473 = vpack.c.b16 %v938, %v933
    %v1474 = vpack.c.b16 %v939, %v934
    %v1475 = vpack.c.b16 %v940, %v935
    %v1476 = vpack.c.b16 %v941, %v936
    %v1477 = vpack.c.b16 %v947, %v942
    %v1478 = vpack.c.b16 %v948, %v943
    %v1479 = vpack.c.b16 %v949, %v944
    %v1480 = vpack.c.b16 %v950, %v945
    %v1481 = vpack.c.b16 %v951, %v946
    %v1482 = vpack.c.b16 %v957, %v952
    %v1483 = vpack.c.b16 %v958, %v953
    %v1484 = vpack.c.b16 %v959, %v954
    %v1485 = vpack.c.b16 %v960, %v955
    %v1486 = vpack.c.b16 %v961, %v956
    %v1487 = vpack.c.b16 %v967, %v962
    %v1488 = vpack.c.b16 %v968, %v963
    %v1489 = vpack.c.b16 %v969, %v964
    %v1490 = vpack.c.b16 %v970, %v965
    %v1491 = vpack.c.b16 %v971, %v966
    %v1492 = vpack.c.b16 %v977, %v972
    %v1493 = vpack.c.b16 %v978, %v973
    %v1494 = vpack.c.b16 %v979, %v974
    %v1495 = vpack.c.b16 %v980, %v975
    %v1496 = vpack.c.b16 %v981, %v976
    %v1497 = vpack.c.b16 %v987, %v982
    %v1498 = vpack.c.b16 %v988, %v983
    %v1499 = vpack.c.b16 %v989, %v984
    %v1500 = vpack.c.b16 %v990, %v985
    %v1501 = vpack.c.b16 %v991, %v986
    %v1502 = vpack.c.b16 %v997, %v992
    %v1503 = vpack.c.b16 %v998, %v993
    %v1504 = vpack.c.b16 %v999, %v994
    %v1505 = vpack.c.b16 %v1000, %v995
    %v1506 = vpack.c.b16 %v1001, %v996
    %v1507 = vpack.c.b16 %v1007, %v1002
    %v1508 = vpack.c.b16 %v1008, %v1003
    %v1509 = vpack.c.b16 %v1009, %v1004
    %v1510 = vpack.c.b16 %v1010, %v1005
    %v1511 = vpack.c.b16 %v1011, %v1006
    %v1512 = vpack.c.b16 %v1017, %v1012
    %v1513 = vpack.c.b16 %v1018, %v1013
    %v1514 = vpack.c.b16 %v1019, %v1014
    %v1515 = vpack.c.b16 %v1020, %v1015
    %v1516 = vpack.c.b16 %v1021, %v1016
    %v1517 = vpack.c.b16 %v1027, %v1022
    %v1518 = vpack.c.b16 %v1028, %v1023
    %v1519 = vpack.c.b16 %v1029, %v1024
    %v1520 = vpack.c.b16 %v1030, %v1025
    %v1521 = vpack.c.b16 %v1031, %v1026
    %v1522 = vpack.c.b16 %v1037, %v1032
    %v1523 = vpack.c.b16 %v1038, %v1033
    %v1524 = vpack.c.b16 %v1039, %v1034
    %v1525 = vpack.c.b16 %v1040, %v1035
    %v1526 = vpack.c.b16 %v1041, %v1036
    %v1527 = vpack.c.b16 %v1047, %v1042
    %v1528 = vpack.c.b16 %v1048, %v1043
    %v1529 = vpack.c.b16 %v1049, %v1044
    %v1530 = vpack.c.b16 %v1050, %v1045
    %v1531 = vpack.c.b16 %v1051, %v1046
    %v1532 = vpack.c.b16 %v1057, %v1052
    %v1533 = vpack.c.b16 %v1058, %v1053
    %v1534 = vpack.c.b16 %v1059, %v1054
    %v1535 = vpack.c.b16 %v1060, %v1055
    %v1536 = vpack.c.b16 %v1061, %v1056
    %v1537 = vpack.c.b16 %v1067, %v1062
    %v1538 = vpack.c.b16 %v1068, %v1063
    %v1539 = vpack.c.b16 %v1069, %v1064
    %v1540 = vpack.c.b16 %v1070, %v1065
    %v1541 = vpack.c.b16 %v1071, %v1066
    %v1542 = vpack.c.b16 %v1077, %v1072
    %v1543 = vpack.c.b16 %v1078, %v1073
    %v1544 = vpack.c.b16 %v1079, %v1074
    %v1545 = vpack.c.b16 %v1080, %v1075
    %v1546 = vpack.c.b16 %v1081, %v1076
    %v1547 = vpack.c.b16 %v1087, %v1082
    %v1548 = vpack.c.b16 %v1088, %v1083
    %v1549 = vpack.c.b16 %v1089, %v1084
    %v1550 = vpack.c.b16 %v1090, %v1085
    %v1551 = vpack.c.b16 %v1091, %v1086
    %v1552 = vpack.c.b16 %v1097, %v1092
    %v1553 = vpack.c.b16 %v1098, %v1093
    %v1554 = vpack.c.b16 %v1099, %v1094
    %v1555 = vpack.c.b16 %v1100, %v1095
    %v1556 = vpack.c.b16 %v1101, %v1096
    %v1557 = vpack.c.b16 %v1107, %v1102
    %v1558 = vpack.c.b16 %v1108, %v1103
    %v1559 = vpack.c.b16 %v1109, %v1104
    %v1560 = vpack.c.b16 %v1110, %v1105
    %v1561 = vpack.c.b16 %v1111, %v1106
    %v1562 = vpack.c.b16 %v1117, %v1112
    %v1563 = vpack.c.b16 %v1118, %v1113
    %v1564 = vpack.c.b16 %v1119, %v1114
    %v1565 = vpack.c.b16 %v1120, %v1115
    %v1566 = vpack.c.b16 %v1121, %v1116
    %v1567 = vpack.c.b16 %v1127, %v1122
    %v1568 = vpack.c.b16 %v1128, %v1123
    %v1569 = vpack.c.b16 %v1129, %v1124
    %v1570 = vpack.c.b16 %v1130, %v1125
    %v1571 = vpack.c.b16 %v1131, %v1126
    %v1572 = vpack.c.b16 %v1137, %v1132
    %v1573 = vpack.c.b16 %v1138, %v1133
    %v1574 = vpack.c.b16 %v1139, %v1134
    %v1575 = vpack.c.b16 %v1140, %v1135
    %v1576 = vpack.c.b16 %v1141, %v1136
    %v1577 = vpack.c.b16 %v1147, %v1142
    %v1578 = vpack.c.b16 %v1148, %v1143
    %v1579 = vpack.c.b16 %v1149, %v1144
    %v1580 = vpack.c.b16 %v1150, %v1145
    %v1581 = vpack.c.b16 %v1151, %v1146
    %v1582 = vpack.c.b16 %v1157, %v1152
    %v1583 = vpack.c.b16 %v1158, %v1153
    %v1584 = vpack.c.b16 %v1159, %v1154
    %v1585 = vpack.c.b16 %v1160, %v1155
    %v1586 = vpack.c.b16 %v1161, %v1156
    %v1587 = vpack.c.b16 %v1167, %v1162
    %v1588 = vpack.c.b16 %v1168, %v1163
    %v1589 = vpack.c.b16 %v1169, %v1164
    %v1590 = vpack.c.b16 %v1170, %v1165
    %v1591 = vpack.c.b16 %v1171, %v1166
    %v1592 = vpack.c.b16 %v1177, %v1172
    %v1593 = vpack.c.b16 %v1178, %v1173
    %v1594 = vpack.c.b16 %v1179, %v1174
    %v1595 = vpack.c.b16 %v1180, %v1175
    %v1596 = vpack.c.b16 %v1181, %v1176
    %v1597 = vpack.c.b16 %v1187, %v1182
    %v1598 = vpack.c.b16 %v1188, %v1183
    %v1599 = vpack.c.b16 %v1189, %v1184
    %v1600 = vpack.c.b16 %v1190, %v1185
    %v1601 = vpack.c.b16 %v1191, %v1186
    %v1602 = vpack.c.b16 %v1197, %v1192
    %v1603 = vpack.c.b16 %v1198, %v1193
    %v1604 = vpack.c.b16 %v1199, %v1194
    %v1605 = vpack.c.b16 %v1200, %v1195
    %v1606 = vpack.c.b16 %v1201, %v1196
    %v1607 = vpack.c.b16 %v1207, %v1202
    %v1608 = vpack.c.b16 %v1208, %v1203
    %v1609 = vpack.c.b16 %v1209, %v1204
    %v1610 = vpack.c.b16 %v1210, %v1205
    %v1611 = vpack.c.b16 %v1211, %v1206
    %v1612 = vpack.c.b16 %v1217, %v1212
    %v1613 = vpack.c.b16 %v1218, %v1213
    %v1614 = vpack.c.b16 %v1219, %v1214
    %v1615 = vpack.c.b16 %v1220, %v1215
    %v1616 = vpack.c.b16 %v1221, %v1216
    %v1617 = vpack.c.b16 %v1227, %v1222
    %v1618 = vpack.c.b16 %v1228, %v1223
    %v1619 = vpack.c.b16 %v1229, %v1224
    %v1620 = vpack.c.b16 %v1230, %v1225
    %v1621 = vpack.c.b16 %v1231, %v1226
    %v1622 = vpack.c.b16 %v1237, %v1232
    %v1623 = vpack.c.b16 %v1238, %v1233
    %v1624 = vpack.c.b16 %v1239, %v1234
    %v1625 = vpack.c.b16 %v1240, %v1235
    %v1626 = vpack.c.b16 %v1241, %v1236
    %v1627 = vpack.c.b16 %v1247, %v1242
    %v1628 = vpack.c.b16 %v1248, %v1243
    %v1629 = vpack.c.b16 %v1249, %v1244
    %v1630 = vpack.c.b16 %v1250, %v1245
    %v1631 = vpack.c.b16 %v1251, %v1246
    %v1632 = vpack.c.b16 %v1257, %v1252
    %v1633 = vpack.c.b16 %v1258, %v1253
    %v1634 = vpack.c.b16 %v1259, %v1254
    %v1635 = vpack.c.b16 %v1260, %v1255
    %v1636 = vpack.c.b16 %v1261, %v1256
    %v1637 = vpack.c.b16 %v1267, %v1262
    %v1638 = vpack.c.b16 %v1268, %v1263
    %v1639 = vpack.c.b16 %v1269, %v1264
    %v1640 = vpack.c.b16 %v1270, %v1265
    %v1641 = vpack.c.b16 %v1271, %v1266
    %v1642 = vpack.c.b16 %v1277, %v1272
    %v1643 = vpack.c.b16 %v1278, %v1273
    %v1644 = vpack.c.b16 %v1279, %v1274
    %v1645 = vpack.c.b16 %v1280, %v1275
    %v1646 = vpack.c.b16 %v1281, %v1276
    %v1647 = vpack.c.b16 %v1287, %v1282
    %v1648 = vpack.c.b16 %v1288, %v1283
    %v1649 = vpack.c.b16 %v1289, %v1284
    %v1650 = vpack.c.b16 %v1290, %v1285
    %v1651 = vpack.c.b16 %v1291, %v1286
    %v1652 = vpack.c.b16 %v1297, %v1292
    %v1653 = vpack.c.b16 %v1298, %v1293
    %v1654 = vpack.c.b16 %v1299, %v1294
    %v1655 = vpack.c.b16 %v1300, %v1295
    %v1656 = vpack.c.b16 %v1301, %v1296
    %v1657 = vpack.c.b16 %v1307, %v1302
    %v1658 = vpack.c.b16 %v1308, %v1303
    %v1659 = vpack.c.b16 %v1309, %v1304
    %v1660 = vpack.c.b16 %v1310, %v1305
    %v1661 = vpack.c.b16 %v1311, %v1306
    %v1662 = vpack.c.b16 %v1317, %v1312
    %v1663 = vpack.c.b16 %v1318, %v1313
    %v1664 = vpack.c.b16 %v1319, %v1314
    %v1665 = vpack.c.b16 %v1320, %v1315
    %v1666 = vpack.c.b16 %v1321, %v1316
    %v1667 = vpack.c.b16 %v1327, %v1322
    %v1668 = vpack.c.b16 %v1328, %v1323
    %v1669 = vpack.c.b16 %v1329, %v1324
    %v1670 = vpack.c.b16 %v1330, %v1325
    %v1671 = vpack.c.b16 %v1331, %v1326
    %v1672 = vpack.c.b16 %v1337, %v1332
    %v1673 = vpack.c.b16 %v1338, %v1333
    %v1674 = vpack.c.b16 %v1339, %v1334
    %v1675 = vpack.c.b16 %v1340, %v1335
    %v1676 = vpack.c.b16 %v1341, %v1336
    %v1677 = vpack.c.b16 %v1347, %v1342
    %v1678 = vpack.c.b16 %v1348, %v1343
    %v1679 = vpack.c.b16 %v1349, %v1344
    %v1680 = vpack.c.b16 %v1350, %v1345
    %v1681 = vpack.c.b16 %v1351, %v1346
    %v1682 = vpack.c.b16 %v1357, %v1352
    %v1683 = vpack.c.b16 %v1358, %v1353
    %v1684 = vpack.c.b16 %v1359, %v1354
    %v1685 = vpack.c.b16 %v1360, %v1355
    %v1686 = vpack.c.b16 %v1361, %v1356
    %v1687 = vpack.c.b16 %v1367, %v1362
    %v1688 = vpack.c.b16 %v1368, %v1363
    %v1689 = vpack.c.b16 %v1369, %v1364
    %v1690 = vpack.c.b16 %v1370, %v1365
    %v1691 = vpack.c.b16 %v1371, %v1366
    %v1692 = vpack.c.b16 %v1377, %v1372
    %v1693 = vpack.c.b16 %v1378, %v1373
    %v1694 = vpack.c.b16 %v1379, %v1374
    %v1695 = vpack.c.b16 %v1380, %v1375
    %v1696 = vpack.c.b16 %v1381, %v1376
    %v1697 = vpack.c.b16 %v1387, %v1382
    %v1698 = vpack.c.b16 %v1388, %v1383
    %v1699 = vpack.c.b16 %v1389, %v1384
    %v1700 = vpack.c.b16 %v1390, %v1385
    %v1701 = vpack.c.b16 %v1391, %v1386
    %v1702 = vpack.c.b16 %v1397, %v1392
    %v1703 = vpack.c.b16 %v1398, %v1393
    %v1704 = vpack.c.b16 %v1399, %v1394
    %v1705 = vpack.c.b16 %v1400, %v1395
    %v1706 = vpack.c.b16 %v1401, %v1396
    %v1707 = vpack.c.b16 %v1407, %v1402
    %v1708 = vpack.c.b16 %v1408, %v1403
    %v1709 = vpack.c.b16 %v1409, %v1404
    %v1710 = vpack.c.b16 %v1410, %v1405
    %v1711 = vpack.c.b16 %v1411, %v1406
    %v1712 = vpack.c.b16 %v1417, %v1412
    %v1713 = vpack.c.b16 %v1418, %v1413
    %v1714 = vpack.c.b16 %v1419, %v1414
    %v1715 = vpack.c.b16 %v1420, %v1415
    %v1716 = vpack.c.b16 %v1421, %v1416
    %v1717 = vpack.c.b16 %v1427, %v1422
    %v1718 = vpack.c.b16 %v1428, %v1423
    %v1719 = vpack.c.b16 %v1429, %v1424
    %v1720 = vpack.c.b16 %v1430, %v1425
    %v1721 = vpack.c.b16 %v1431, %v1426
    %v1722 = vpack.c.b16 %v1437, %v1432
    %v1723 = vpack.c.b16 %v1438, %v1433
    %v1724 = vpack.c.b16 %v1439, %v1434
    %v1725 = vpack.c.b16 %v1440, %v1435
    %v1726 = vpack.c.b16 %v1441, %v1436
    %v1727 = vpack.c.b16 %v1447, %v1442
    %v1728 = vpack.c.b16 %v1448, %v1443
    %v1729 = vpack.c.b16 %v1449, %v1444
    %v1730 = vpack.c.b16 %v1450, %v1445
    %v1731 = vpack.c.b16 %v1451, %v1446
    %2012 = vmatprep.subr.bf16.mxu0 %v1453
    %2013 = vmatpush1.bf16.msra.mxu0 %v1452
    %2014 = vmatprep.subr.bf16.mxu0 %v1458
    %2015 = vmatpush1.bf16.msra.mxu0 %v1457
    %2016 = vmatprep.subr.bf16.mxu0 %v1463
    %2017 = vmatpush1.bf16.msra.mxu0 %v1462
    %2018 = vmatprep.subr.bf16.mxu0 %v1468
    %2019 = vmatpush1.bf16.msra.mxu0 %v1467
    %2020 = vmatprep.subr.bf16.mxu0 %v1473
    %2021 = vmatpush1.bf16.msra.mxu0 %v1472
    %2022 = vmatprep.subr.bf16.mxu0 %v1478
    %2023 = vmatpush1.bf16.msra.mxu0 %v1477
    %2024 = vmatprep.subr.bf16.mxu0 %v1483
    %2025 = vmatpush1.bf16.msra.mxu0 %v1482
    %2026 = vmatprep.subr.bf16.mxu0 %v1488
    %2027 = vmatpush1.bf16.msra.mxu0 %v1487
    %2028 = vmatprep.subr.bf16.mxu0 %v1493
    %2029 = vmatpush1.bf16.msra.mxu0 %v1492
    %2030 = vmatprep.subr.bf16.mxu0 %v1498
    %2031 = vmatpush1.bf16.msra.mxu0 %v1497
    %2032 = vmatprep.subr.bf16.mxu0 %v1503
    %2033 = vmatpush1.bf16.msra.mxu0 %v1502
    %2034 = vmatprep.subr.bf16.mxu0 %v1508
    %2035 = vmatpush1.bf16.msra.mxu0 %v1507
    %2036 = vmatprep.subr.bf16.mxu0 %v1513
    %2037 = vmatpush1.bf16.msra.mxu0 %v1512
    %2038 = vmatprep.subr.bf16.mxu0 %v1518
    %2039 = vmatpush1.bf16.msra.mxu0 %v1517
    %2040 = vmatprep.subr.bf16.mxu0 %v1523
    %2041 = vmatpush1.bf16.msra.mxu0 %v1522
    %2042 = vmatprep.subr.bf16.mxu0 %v1528
    %2043 = vmatpush1.bf16.msra.mxu0 %v1527
    %2044 = vmatprep.mubr.bf16.mxu0 %v543
    %2045 = vmatmul.mubr.bf16.gmra.mrb[0].mxu0 %v542
    %v2046 = vpop.f32.mrb[0].mxu0
    %v2047 = vadd.f32 %v509, %v2046
    %v2048 = vpop.f32.mrb[0].mxu0
    %v2049 = vadd.f32 %v513, %v2048
    %v2050 = vpop.f32.mrb[0].mxu0
    %v2051 = vpop.f32.mrb[0].mxu0
    %2052 = vdwg.mxu0
    %2053 = vmatprep.subr.bf16.mxu0 %v1533
    %2054 = vmatpush1.bf16.msra.mxu0 %v1532
    %2055 = vmatprep.subr.bf16.mxu0 %v1538
    %2056 = vmatpush1.bf16.msra.mxu0 %v1537
    %2057 = vmatprep.subr.bf16.mxu0 %v1543
    %2058 = vmatpush1.bf16.msra.mxu0 %v1542
    %2059 = vmatprep.subr.bf16.mxu0 %v1548
    %2060 = vmatpush1.bf16.msra.mxu0 %v1547
    %2061 = vmatprep.subr.bf16.mxu0 %v1553
    %2062 = vmatpush1.bf16.msra.mxu0 %v1552
    %2063 = vmatprep.subr.bf16.mxu0 %v1558
    %2064 = vmatpush1.bf16.msra.mxu0 %v1557
    %2065 = vmatprep.subr.bf16.mxu0 %v1563
    %2066 = vmatpush1.bf16.msra.mxu0 %v1562
    %2067 = vmatprep.subr.bf16.mxu0 %v1568
    %2068 = vmatpush1.bf16.msra.mxu0 %v1567
    %2069 = vmatprep.subr.bf16.mxu0 %v1573
    %2070 = vmatpush1.bf16.msra.mxu0 %v1572
    %2071 = vmatprep.subr.bf16.mxu0 %v1578
    %2072 = vmatpush1.bf16.msra.mxu0 %v1577
    %2073 = vmatprep.subr.bf16.mxu0 %v1583
    %2074 = vmatpush1.bf16.msra.mxu0 %v1582
    %2075 = vmatprep.subr.bf16.mxu0 %v1588
    %2076 = vmatpush1.bf16.msra.mxu0 %v1587
    %2077 = vmatprep.subr.bf16.mxu0 %v1593
    %2078 = vmatpush1.bf16.msra.mxu0 %v1592
    %2079 = vmatprep.subr.bf16.mxu0 %v1598
    %2080 = vmatpush1.bf16.msra.mxu0 %v1597
    %2081 = vmatprep.subr.bf16.mxu0 %v1603
    %2082 = vmatpush1.bf16.msra.mxu0 %v1602
    %2083 = vmatprep.subr.bf16.mxu0 %v1608
    %2084 = vmatpush1.bf16.msra.mxu0 %v1607
    %2085 = vmatprep.mubr.bf16.mxu0 %v545
    %2086 = vmatmul.mubr.bf16.gmra.mrb[0].mxu0 %v544
    %v2087 = vpop.f32.mrb[0].mxu0
    %v2088 = vadd.f32 %v2047, %v2087
    %v2089 = vpop.f32.mrb[0].mxu0
    %v2090 = vadd.f32 %v2049, %v2089
    %v2091 = vpop.f32.mrb[0].mxu0
    %v2092 = vpop.f32.mrb[0].mxu0
    %2093 = vdwg.mxu0
    %2094 = vmatprep.subr.bf16.mxu0 %v1613
    %2095 = vmatpush1.bf16.msra.mxu0 %v1612
    %2096 = vmatprep.subr.bf16.mxu0 %v1618
    %2097 = vmatpush1.bf16.msra.mxu0 %v1617
    %2098 = vmatprep.subr.bf16.mxu0 %v1623
    %2099 = vmatpush1.bf16.msra.mxu0 %v1622
    %2100 = vmatprep.subr.bf16.mxu0 %v1628
    %2101 = vmatpush1.bf16.msra.mxu0 %v1627
    %2102 = vmatprep.subr.bf16.mxu0 %v1633
    %2103 = vmatpush1.bf16.msra.mxu0 %v1632
    %2104 = vmatprep.subr.bf16.mxu0 %v1638
    %2105 = vmatpush1.bf16.msra.mxu0 %v1637
    %2106 = vmatprep.subr.bf16.mxu0 %v1643
    %2107 = vmatpush1.bf16.msra.mxu0 %v1642
    %2108 = vmatprep.subr.bf16.mxu0 %v1648
    %2109 = vmatpush1.bf16.msra.mxu0 %v1647
    %2110 = vmatprep.subr.bf16.mxu0 %v1653
    %2111 = vmatpush1.bf16.msra.mxu0 %v1652
    %2112 = vmatprep.subr.bf16.mxu0 %v1658
    %2113 = vmatpush1.bf16.msra.mxu0 %v1657
    %2114 = vmatprep.subr.bf16.mxu0 %v1663
    %2115 = vmatpush1.bf16.msra.mxu0 %v1662
    %2116 = vmatprep.subr.bf16.mxu0 %v1668
    %2117 = vmatpush1.bf16.msra.mxu0 %v1667
    %2118 = vmatprep.subr.bf16.mxu0 %v1673
    %2119 = vmatpush1.bf16.msra.mxu0 %v1672
    %2120 = vmatprep.subr.bf16.mxu0 %v1678
    %2121 = vmatpush1.bf16.msra.mxu0 %v1677
    %2122 = vmatprep.subr.bf16.mxu0 %v1683
    %2123 = vmatpush1.bf16.msra.mxu0 %v1682
    %2124 = vmatprep.subr.bf16.mxu0 %v1688
    %2125 = vmatpush1.bf16.msra.mxu0 %v1687
    %2126 = vmatprep.mubr.bf16.mxu0 %v547
    %2127 = vmatmul.mubr.bf16.gmra.mrb[0].mxu0 %v546
    %v2128 = vpop.f32.mrb[0].mxu0
    %v2129 = vadd.f32 %v2088, %v2128
    %v2130 = vpop.f32.mrb[0].mxu0
    %v2131 = vadd.f32 %v2090, %v2130
    %v2132 = vpop.f32.mrb[0].mxu0
    %v2133 = vpop.f32.mrb[0].mxu0
    %2134 = vdwg.mxu0
    %2135 = vmatprep.subr.bf16.mxu0 %v1693
    %2136 = vmatpush1.bf16.msra.mxu0 %v1692
    %2137 = vmatprep.subr.bf16.mxu0 %v1698
    %2138 = vmatpush1.bf16.msra.mxu0 %v1697
    %2139 = vmatprep.subr.bf16.mxu0 %v1703
    %2140 = vmatpush1.bf16.msra.mxu0 %v1702
    %2141 = vmatprep.subr.bf16.mxu0 %v1708
    %2142 = vmatpush1.bf16.msra.mxu0 %v1707
    %2143 = vmatprep.subr.bf16.mxu0 %v1713
    %2144 = vmatpush1.bf16.msra.mxu0 %v1712
    %2145 = vmatprep.subr.bf16.mxu0 %v1718
    %2146 = vmatpush1.bf16.msra.mxu0 %v1717
    %2147 = vmatprep.subr.bf16.mxu0 %v1723
    %2148 = vmatpush1.bf16.msra.mxu0 %v1722
    %2149 = vmatprep.subr.bf16.mxu0 %v1728
    %2150 = vmatpush1.bf16.msra.mxu0 %v1727
    %2151 = vmatprep.subr.bf16.mxu0 0
    %2152 = vmatpush1.bf16.msra.mxu0 0
    %2153 = vmatprep.subr.bf16.mxu0 0
    %2154 = vmatpush1.bf16.msra.mxu0 0
    %2155 = vmatprep.subr.bf16.mxu0 0
    %2156 = vmatpush1.bf16.msra.mxu0 0
    %2157 = vmatprep.subr.bf16.mxu0 0
    %2158 = vmatpush1.bf16.msra.mxu0 0
    %2159 = vmatprep.subr.bf16.mxu0 0
    %2160 = vmatpush1.bf16.msra.mxu0 0
    %2161 = vmatprep.subr.bf16.mxu0 0
    %2162 = vmatpush1.bf16.msra.mxu0 0
    %2163 = vmatprep.subr.bf16.mxu0 0
    %2164 = vmatpush1.bf16.msra.mxu0 0
    %2165 = vmatprep.subr.bf16.mxu0 0
    %2166 = vmatpush1.bf16.msra.mxu0 0
    %2167 = vmatprep.mubr.bf16.mxu0 0
    %2168 = vmatmul.mubr.bf16.gmra.mrb[0].mxu0 %v548
    %v2169 = vpop.f32.mrb[0].mxu0
    %v2170 = vadd.f32 %v2129, %v2169
    %v2171 = vpop.f32.mrb[0].mxu0
    %v2172 = vadd.f32 %v2131, %v2171
    %v2173 = vpop.f32.mrb[0].mxu0
    %v2174 = vpop.f32.mrb[0].mxu0
    %2175 = vdwg.mxu0
    %2176 = vmatprep.subr.bf16.mxu0 %v1455
    %2177 = vmatpush1.bf16.msra.mxu0 %v1454
    %2178 = vmatprep.subr.bf16.mxu0 %v1460
    %2179 = vmatpush1.bf16.msra.mxu0 %v1459
    %2180 = vmatprep.subr.bf16.mxu0 %v1465
    %2181 = vmatpush1.bf16.msra.mxu0 %v1464
    %2182 = vmatprep.subr.bf16.mxu0 %v1470
    %2183 = vmatpush1.bf16.msra.mxu0 %v1469
    %2184 = vmatprep.subr.bf16.mxu0 %v1475
    %2185 = vmatpush1.bf16.msra.mxu0 %v1474
    %2186 = vmatprep.subr.bf16.mxu0 %v1480
    %2187 = vmatpush1.bf16.msra.mxu0 %v1479
    %2188 = vmatprep.subr.bf16.mxu0 %v1485
    %2189 = vmatpush1.bf16.msra.mxu0 %v1484
    %2190 = vmatprep.subr.bf16.mxu0 %v1490
    %2191 = vmatpush1.bf16.msra.mxu0 %v1489
    %2192 = vmatprep.subr.bf16.mxu0 %v1495
    %2193 = vmatpush1.bf16.msra.mxu0 %v1494
    %2194 = vmatprep.subr.bf16.mxu0 %v1500
    %2195 = vmatpush1.bf16.msra.mxu0 %v1499
    %2196 = vmatprep.subr.bf16.mxu0 %v1505
    %2197 = vmatpush1.bf16.msra.mxu0 %v1504
    %2198 = vmatprep.subr.bf16.mxu0 %v1510
    %2199 = vmatpush1.bf16.msra.mxu0 %v1509
    %2200 = vmatprep.subr.bf16.mxu0 %v1515
    %2201 = vmatpush1.bf16.msra.mxu0 %v1514
    %2202 = vmatprep.subr.bf16.mxu0 %v1520
    %2203 = vmatpush1.bf16.msra.mxu0 %v1519
    %2204 = vmatprep.subr.bf16.mxu0 %v1525
    %2205 = vmatpush1.bf16.msra.mxu0 %v1524
    %2206 = vmatprep.subr.bf16.mxu0 %v1530
    %2207 = vmatpush1.bf16.msra.mxu0 %v1529
    %2208 = vmatprep.mubr.bf16.mxu0 %v543
    %2209 = vmatmul.mubr.bf16.gmra.mrb[0].mxu0 %v542
    %v2210 = vpop.f32.mrb[0].mxu0
    %v2211 = vadd.f32 %v517, %v2210
    %v2212 = vpop.f32.mrb[0].mxu0
    %v2213 = vadd.f32 %v521, %v2212
    %v2214 = vpop.f32.mrb[0].mxu0
    %v2215 = vpop.f32.mrb[0].mxu0
    %2216 = vdwg.mxu0
    %2217 = vmatprep.subr.bf16.mxu0 %v1535
    %2218 = vmatpush1.bf16.msra.mxu0 %v1534
    %2219 = vmatprep.subr.bf16.mxu0 %v1540
    %2220 = vmatpush1.bf16.msra.mxu0 %v1539
    %2221 = vmatprep.subr.bf16.mxu0 %v1545
    %2222 = vmatpush1.bf16.msra.mxu0 %v1544
    %2223 = vmatprep.subr.bf16.mxu0 %v1550
    %2224 = vmatpush1.bf16.msra.mxu0 %v1549
    %2225 = vmatprep.subr.bf16.mxu0 %v1555
    %2226 = vmatpush1.bf16.msra.mxu0 %v1554
    %2227 = vmatprep.subr.bf16.mxu0 %v1560
    %2228 = vmatpush1.bf16.msra.mxu0 %v1559
    %2229 = vmatprep.subr.bf16.mxu0 %v1565
    %2230 = vmatpush1.bf16.msra.mxu0 %v1564
    %2231 = vmatprep.subr.bf16.mxu0 %v1570
    %2232 = vmatpush1.bf16.msra.mxu0 %v1569
    %2233 = vmatprep.subr.bf16.mxu0 %v1575
    %2234 = vmatpush1.bf16.msra.mxu0 %v1574
    %2235 = vmatprep.subr.bf16.mxu0 %v1580
    %2236 = vmatpush1.bf16.msra.mxu0 %v1579
    %2237 = vmatprep.subr.bf16.mxu0 %v1585
    %2238 = vmatpush1.bf16.msra.mxu0 %v1584
    %2239 = vmatprep.subr.bf16.mxu0 %v1590
    %2240 = vmatpush1.bf16.msra.mxu0 %v1589
    %2241 = vmatprep.subr.bf16.mxu0 %v1595
    %2242 = vmatpush1.bf16.msra.mxu0 %v1594
    %2243 = vmatprep.subr.bf16.mxu0 %v1600
    %2244 = vmatpush1.bf16.msra.mxu0 %v1599
    %2245 = vmatprep.subr.bf16.mxu0 %v1605
    %2246 = vmatpush1.bf16.msra.mxu0 %v1604
    %2247 = vmatprep.subr.bf16.mxu0 %v1610
    %2248 = vmatpush1.bf16.msra.mxu0 %v1609
    %2249 = vmatprep.mubr.bf16.mxu0 %v545
    %2250 = vmatmul.mubr.bf16.gmra.mrb[0].mxu0 %v544
    %v2251 = vpop.f32.mrb[0].mxu0
    %v2252 = vadd.f32 %v2211, %v2251
    %v2253 = vpop.f32.mrb[0].mxu0
    %v2254 = vadd.f32 %v2213, %v2253
    %v2255 = vpop.f32.mrb[0].mxu0
    %v2256 = vpop.f32.mrb[0].mxu0
    %2257 = vdwg.mxu0
    %2258 = vmatprep.subr.bf16.mxu0 %v1615
    %2259 = vmatpush1.bf16.msra.mxu0 %v1614
    %2260 = vmatprep.subr.bf16.mxu0 %v1620
    %2261 = vmatpush1.bf16.msra.mxu0 %v1619
    %2262 = vmatprep.subr.bf16.mxu0 %v1625
    %2263 = vmatpush1.bf16.msra.mxu0 %v1624
    %2264 = vmatprep.subr.bf16.mxu0 %v1630
    %2265 = vmatpush1.bf16.msra.mxu0 %v1629
    %2266 = vmatprep.subr.bf16.mxu0 %v1635
    %2267 = vmatpush1.bf16.msra.mxu0 %v1634
    %2268 = vmatprep.subr.bf16.mxu0 %v1640
    %2269 = vmatpush1.bf16.msra.mxu0 %v1639
    %2270 = vmatprep.subr.bf16.mxu0 %v1645
    %2271 = vmatpush1.bf16.msra.mxu0 %v1644
    %2272 = vmatprep.subr.bf16.mxu0 %v1650
    %2273 = vmatpush1.bf16.msra.mxu0 %v1649
    %2274 = vmatprep.subr.bf16.mxu0 %v1655
    %2275 = vmatpush1.bf16.msra.mxu0 %v1654
    %2276 = vmatprep.subr.bf16.mxu0 %v1660
    %2277 = vmatpush1.bf16.msra.mxu0 %v1659
    %2278 = vmatprep.subr.bf16.mxu0 %v1665
    %2279 = vmatpush1.bf16.msra.mxu0 %v1664
    %2280 = vmatprep.subr.bf16.mxu0 %v1670
    %2281 = vmatpush1.bf16.msra.mxu0 %v1669
    %2282 = vmatprep.subr.bf16.mxu0 %v1675
    %2283 = vmatpush1.bf16.msra.mxu0 %v1674
    %2284 = vmatprep.subr.bf16.mxu0 %v1680
    %2285 = vmatpush1.bf16.msra.mxu0 %v1679
    %2286 = vmatprep.subr.bf16.mxu0 %v1685
    %2287 = vmatpush1.bf16.msra.mxu0 %v1684
    %2288 = vmatprep.subr.bf16.mxu0 %v1690
    %2289 = vmatpush1.bf16.msra.mxu0 %v1689
    %2290 = vmatprep.mubr.bf16.mxu0 %v547
    %2291 = vmatmul.mubr.bf16.gmra.mrb[0].mxu0 %v546
    %v2292 = vpop.f32.mrb[0].mxu0
    %v2293 = vadd.f32 %v2252, %v2292
    %v2294 = vpop.f32.mrb[0].mxu0
    %v2295 = vadd.f32 %v2254, %v2294
    %v2296 = vpop.f32.mrb[0].mxu0
    %v2297 = vpop.f32.mrb[0].mxu0
    %2298 = vdwg.mxu0
    %2299 = vmatprep.subr.bf16.mxu0 %v1695
    %2300 = vmatpush1.bf16.msra.mxu0 %v1694
    %2301 = vmatprep.subr.bf16.mxu0 %v1700
    %2302 = vmatpush1.bf16.msra.mxu0 %v1699
    %2303 = vmatprep.subr.bf16.mxu0 %v1705
    %2304 = vmatpush1.bf16.msra.mxu0 %v1704
    %2305 = vmatprep.subr.bf16.mxu0 %v1710
    %2306 = vmatpush1.bf16.msra.mxu0 %v1709
    %2307 = vmatprep.subr.bf16.mxu0 %v1715
    %2308 = vmatpush1.bf16.msra.mxu0 %v1714
    %2309 = vmatprep.subr.bf16.mxu0 %v1720
    %2310 = vmatpush1.bf16.msra.mxu0 %v1719
    %2311 = vmatprep.subr.bf16.mxu0 %v1725
    %2312 = vmatpush1.bf16.msra.mxu0 %v1724
    %2313 = vmatprep.subr.bf16.mxu0 %v1730
    %2314 = vmatpush1.bf16.msra.mxu0 %v1729
    %2315 = vmatprep.subr.bf16.mxu0 0
    %2316 = vmatpush1.bf16.msra.mxu0 0
    %2317 = vmatprep.subr.bf16.mxu0 0
    %2318 = vmatpush1.bf16.msra.mxu0 0
    %2319 = vmatprep.subr.bf16.mxu0 0
    %2320 = vmatpush1.bf16.msra.mxu0 0
    %2321 = vmatprep.subr.bf16.mxu0 0
    %2322 = vmatpush1.bf16.msra.mxu0 0
    %2323 = vmatprep.subr.bf16.mxu0 0
    %2324 = vmatpush1.bf16.msra.mxu0 0
    %2325 = vmatprep.subr.bf16.mxu0 0
    %2326 = vmatpush1.bf16.msra.mxu0 0
    %2327 = vmatprep.subr.bf16.mxu0 0
    %2328 = vmatpush1.bf16.msra.mxu0 0
    %2329 = vmatprep.subr.bf16.mxu0 0
    %2330 = vmatpush1.bf16.msra.mxu0 0
    %2331 = vmatprep.mubr.bf16.mxu0 0
    %2332 = vmatmul.mubr.bf16.gmra.mrb[0].mxu0 %v548
    %v2333 = vpop.f32.mrb[0].mxu0
    %v2334 = vadd.f32 %v2293, %v2333
    %v2335 = vpop.f32.mrb[0].mxu0
    %v2336 = vadd.f32 %v2295, %v2335
    %v2337 = vpop.f32.mrb[0].mxu0
    %v2338 = vpop.f32.mrb[0].mxu0
    %2339 = vdwg.mxu0
    %2340 = vmatprep.subr.bf16.mxu0 0
    %2341 = vmatpush1.bf16.msra.mxu0 %v1456
    %2342 = vmatprep.subr.bf16.mxu0 0
    %2343 = vmatpush1.bf16.msra.mxu0 %v1461
    %2344 = vmatprep.subr.bf16.mxu0 0
    %2345 = vmatpush1.bf16.msra.mxu0 %v1466
    %2346 = vmatprep.subr.bf16.mxu0 0
    %2347 = vmatpush1.bf16.msra.mxu0 %v1471
    %2348 = vmatprep.subr.bf16.mxu0 0
    %2349 = vmatpush1.bf16.msra.mxu0 %v1476
    %2350 = vmatprep.subr.bf16.mxu0 0
    %2351 = vmatpush1.bf16.msra.mxu0 %v1481
    %2352 = vmatprep.subr.bf16.mxu0 0
    %2353 = vmatpush1.bf16.msra.mxu0 %v1486
    %2354 = vmatprep.subr.bf16.mxu0 0
    %2355 = vmatpush1.bf16.msra.mxu0 %v1491
    %2356 = vmatprep.subr.bf16.mxu0 0
    %2357 = vmatpush1.bf16.msra.mxu0 %v1496
    %2358 = vmatprep.subr.bf16.mxu0 0
    %2359 = vmatpush1.bf16.msra.mxu0 %v1501
    %2360 = vmatprep.subr.bf16.mxu0 0
    %2361 = vmatpush1.bf16.msra.mxu0 %v1506
    %2362 = vmatprep.subr.bf16.mxu0 0
    %2363 = vmatpush1.bf16.msra.mxu0 %v1511
    %2364 = vmatprep.subr.bf16.mxu0 0
    %2365 = vmatpush1.bf16.msra.mxu0 %v1516
    %2366 = vmatprep.subr.bf16.mxu0 0
    %2367 = vmatpush1.bf16.msra.mxu0 %v1521
    %2368 = vmatprep.subr.bf16.mxu0 0
    %2369 = vmatpush1.bf16.msra.mxu0 %v1526
    %2370 = vmatprep.subr.bf16.mxu0 0
    %2371 = vmatpush1.bf16.msra.mxu0 %v1531
    %2372 = vmatprep.mubr.bf16.mxu0 %v543
    %2373 = vmatmul.mubr.bf16.gmra.mrb[0].mxu0 %v542
    %v2374 = vpop.f32.mrb[0].mxu0
    %v2375 = vadd.f32 %v525, %v2374
    %v2376 = vpop.f32.mrb[0].mxu0
    %v2377 = vpop.f32.mrb[0].mxu0
    %v2378 = vpop.f32.mrb[0].mxu0
    %2379 = vdwg.mxu0
    %2380 = vmatprep.subr.bf16.mxu0 0
    %2381 = vmatpush1.bf16.msra.mxu0 %v1536
    %2382 = vmatprep.subr.bf16.mxu0 0
    %2383 = vmatpush1.bf16.msra.mxu0 %v1541
    %2384 = vmatprep.subr.bf16.mxu0 0
    %2385 = vmatpush1.bf16.msra.mxu0 %v1546
    %2386 = vmatprep.subr.bf16.mxu0 0
    %2387 = vmatpush1.bf16.msra.mxu0 %v1551
    %2388 = vmatprep.subr.bf16.mxu0 0
    %2389 = vmatpush1.bf16.msra.mxu0 %v1556
    %2390 = vmatprep.subr.bf16.mxu0 0
    %2391 = vmatpush1.bf16.msra.mxu0 %v1561
    %2392 = vmatprep.subr.bf16.mxu0 0
    %2393 = vmatpush1.bf16.msra.mxu0 %v1566
    %2394 = vmatprep.subr.bf16.mxu0 0
    %2395 = vmatpush1.bf16.msra.mxu0 %v1571
    %2396 = vmatprep.subr.bf16.mxu0 0
    %2397 = vmatpush1.bf16.msra.mxu0 %v1576
    %2398 = vmatprep.subr.bf16.mxu0 0
    %2399 = vmatpush1.bf16.msra.mxu0 %v1581
    %2400 = vmatprep.subr.bf16.mxu0 0
    %2401 = vmatpush1.bf16.msra.mxu0 %v1586
    %2402 = vmatprep.subr.bf16.mxu0 0
    %2403 = vmatpush1.bf16.msra.mxu0 %v1591
    %2404 = vmatprep.subr.bf16.mxu0 0
    %2405 = vmatpush1.bf16.msra.mxu0 %v1596
    %2406 = vmatprep.subr.bf16.mxu0 0
    %2407 = vmatpush1.bf16.msra.mxu0 %v1601
    %2408 = vmatprep.subr.bf16.mxu0 0
    %2409 = vmatpush1.bf16.msra.mxu0 %v1606
    %2410 = vmatprep.subr.bf16.mxu0 0
    %2411 = vmatpush1.bf16.msra.mxu0 %v1611
    %2412 = vmatprep.mubr.bf16.mxu0 %v545
    %2413 = vmatmul.mubr.bf16.gmra.mrb[0].mxu0 %v544
    %v2414 = vpop.f32.mrb[0].mxu0
    %v2415 = vadd.f32 %v2375, %v2414
    %v2416 = vpop.f32.mrb[0].mxu0
    %v2417 = vpop.f32.mrb[0].mxu0
    %v2418 = vpop.f32.mrb[0].mxu0
    %2419 = vdwg.mxu0
    %2420 = vmatprep.subr.bf16.mxu0 0
    %2421 = vmatpush1.bf16.msra.mxu0 %v1616
    %2422 = vmatprep.subr.bf16.mxu0 0
    %2423 = vmatpush1.bf16.msra.mxu0 %v1621
    %2424 = vmatprep.subr.bf16.mxu0 0
    %2425 = vmatpush1.bf16.msra.mxu0 %v1626
    %2426 = vmatprep.subr.bf16.mxu0 0
    %2427 = vmatpush1.bf16.msra.mxu0 %v1631
    %2428 = vmatprep.subr.bf16.mxu0 0
    %2429 = vmatpush1.bf16.msra.mxu0 %v1636
    %2430 = vmatprep.subr.bf16.mxu0 0
    %2431 = vmatpush1.bf16.msra.mxu0 %v1641
    %2432 = vmatprep.subr.bf16.mxu0 0
    %2433 = vmatpush1.bf16.msra.mxu0 %v1646
    %2434 = vmatprep.subr.bf16.mxu0 0
    %2435 = vmatpush1.bf16.msra.mxu0 %v1651
    %2436 = vmatprep.subr.bf16.mxu0 0
    %2437 = vmatpush1.bf16.msra.mxu0 %v1656
    %2438 = vmatprep.subr.bf16.mxu0 0
    %2439 = vmatpush1.bf16.msra.mxu0 %v1661
    %2440 = vmatprep.subr.bf16.mxu0 0
    %2441 = vmatpush1.bf16.msra.mxu0 %v1666
    %2442 = vmatprep.subr.bf16.mxu0 0
    %2443 = vmatpush1.bf16.msra.mxu0 %v1671
    %2444 = vmatprep.subr.bf16.mxu0 0
    %2445 = vmatpush1.bf16.msra.mxu0 %v1676
    %2446 = vmatprep.subr.bf16.mxu0 0
    %2447 = vmatpush1.bf16.msra.mxu0 %v1681
    %2448 = vmatprep.subr.bf16.mxu0 0
    %2449 = vmatpush1.bf16.msra.mxu0 %v1686
    %2450 = vmatprep.subr.bf16.mxu0 0
    %2451 = vmatpush1.bf16.msra.mxu0 %v1691
    %2452 = vmatprep.mubr.bf16.mxu0 %v547
    %2453 = vmatmul.mubr.bf16.gmra.mrb[0].mxu0 %v546
    %v2454 = vpop.f32.mrb[0].mxu0
    %v2455 = vadd.f32 %v2415, %v2454
    %v2456 = vpop.f32.mrb[0].mxu0
    %v2457 = vpop.f32.mrb[0].mxu0
    %v2458 = vpop.f32.mrb[0].mxu0
    %2459 = vdwg.mxu0
    %2460 = vmatprep.subr.bf16.mxu0 0
    %2461 = vmatpush1.bf16.msra.mxu0 %v1696
    %2462 = vmatprep.subr.bf16.mxu0 0
    %2463 = vmatpush1.bf16.msra.mxu0 %v1701
    %2464 = vmatprep.subr.bf16.mxu0 0
    %2465 = vmatpush1.bf16.msra.mxu0 %v1706
    %2466 = vmatprep.subr.bf16.mxu0 0
    %2467 = vmatpush1.bf16.msra.mxu0 %v1711
    %2468 = vmatprep.subr.bf16.mxu0 0
    %2469 = vmatpush1.bf16.msra.mxu0 %v1716
    %2470 = vmatprep.subr.bf16.mxu0 0
    %2471 = vmatpush1.bf16.msra.mxu0 %v1721
    %2472 = vmatprep.subr.bf16.mxu0 0
    %2473 = vmatpush1.bf16.msra.mxu0 %v1726
    %2474 = vmatprep.subr.bf16.mxu0 0
    %2475 = vmatpush1.bf16.msra.mxu0 %v1731
    %2476 = vmatprep.subr.bf16.mxu0 0
    %2477 = vmatpush1.bf16.msra.mxu0 0
    %2478 = vmatprep.subr.bf16.mxu0 0
    %2479 = vmatpush1.bf16.msra.mxu0 0
    %2480 = vmatprep.subr.bf16.mxu0 0
    %2481 = vmatpush1.bf16.msra.mxu0 0
    %2482 = vmatprep.subr.bf16.mxu0 0
    %2483 = vmatpush1.bf16.msra.mxu0 0
    %2484 = vmatprep.subr.bf16.mxu0 0
    %2485 = vmatpush1.bf16.msra.mxu0 0
    %2486 = vmatprep.subr.bf16.mxu0 0
    %2487 = vmatpush1.bf16.msra.mxu0 0
    %2488 = vmatprep.subr.bf16.mxu0 0
    %2489 = vmatpush1.bf16.msra.mxu0 0
    %2490 = vmatprep.subr.bf16.mxu0 0
    %2491 = vmatpush1.bf16.msra.mxu0 0
    %2492 = vmatprep.mubr.bf16.mxu0 0
    %2493 = vmatmul.mubr.bf16.gmra.mrb[0].mxu0 %v548
    %v2494 = vpop.f32.mrb[0].mxu0
    %v2495 = vadd.f32 %v2455, %v2494
    %v2496 = vpop.f32.mrb[0].mxu0
    %v2497 = vpop.f32.mrb[0].mxu0
    %v2498 = vpop.f32.mrb[0].mxu0
    %2499 = vdwg.mxu0
    %v2500 = vmax.f32 %v2170, 0.0
    %v2501 = vmax.f32 %v2172, 0.0
    %v2502 = vmax.f32 %v2334, 0.0
    %v2503 = vmax.f32 %v2336, 0.0
    %v2504 = vmax.f32 %v2495, 0.0
    %v2505 = vpack.c.bf16 %v2500, %v2500
    %v2506 = vpack.c.bf16 %v2501, %v2501
    %v2507 = vpack.c.bf16 %v2502, %v2502
    %v2508 = vpack.c.bf16 %v2503, %v2503
    %v2509 = vpack.c.bf16 %v2504, %v2504
    %v2510 = vld [vmem:[%s3] sm:$0xf]
    %v2511 = vld [vmem:[%s3 + $0x4] sm:$0xf]
    %v2512 = vld [vmem:[%s3 + $0x8] sm:$0xf]
    %v2513 = vld [vmem:[%s3 + $0xc] sm:$0xf]
    %v2514 = vld [vmem:[%s3 + $0x10] sm:$0xf]
    %v2515 = vld [vmem:[%s3 + $0x14] sm:$0xf]
    %v2516 = vld [vmem:[%s3 + $0x18] sm:$0xf]
    %v2517 = vld [vmem:[%s3 + $0x1c] sm:$0xf]
    %v2518 = vld [vmem:[%s3 + $0x20] sm:$0xf]
    %v2519 = vld [vmem:[%s3 + $0x24] sm:$0xf]
    %v2520 = vld [vmem:[%s3 + $0x28] sm:$0xf]
    %v2521 = vld [vmem:[%s3 + $0x2c] sm:$0xf]
    %v2522 = vld [vmem:[%s3 + $0x30] sm:$0xf]
    %v2523 = vld [vmem:[%s3 + $0x34] sm:$0xf]
    %v2524 = vld [vmem:[%s3 + $0x38] sm:$0xf]
    %v2525 = vld [vmem:[%s3 + $0x3c] sm:$0xf]
    %v2526 = vld [vmem:[%s3 + $0x40] sm:$0xf]
    %v2527 = vld [vmem:[%s3 + $0x44] sm:$0xf]
    %v2528 = vld [vmem:[%s3 + $0x48] sm:$0xf]
    %v2529 = vld [vmem:[%s3 + $0x4c] sm:$0xf]
    %v2530 = vld [vmem:[%s3 + $0x50] sm:$0xf]
    %v2531 = vld [vmem:[%s3 + $0x54] sm:$0xf]
    %v2532 = vld [vmem:[%s3 + $0x58] sm:$0xf]
    %v2533 = vld [vmem:[%s3 + $0x5c] sm:$0xf]
    %v2534 = vld [vmem:[%s3 + $0x60] sm:$0xf]
    %v2535 = vld [vmem:[%s3 + $0x64] sm:$0xf]
    %v2536 = vld [vmem:[%s3 + $0x68] sm:$0xf]
    %v2537 = vld [vmem:[%s3 + $0x6c] sm:$0xf]
    %v2538 = vld [vmem:[%s3 + $0x70] sm:$0xf]
    %v2539 = vld [vmem:[%s3 + $0x74] sm:$0xf]
    %v2540 = vld [vmem:[%s3 + $0x78] sm:$0xf]
    %v2541 = vld [vmem:[%s3 + $0x7c] sm:$0xf]
    %v2542 = vld [vmem:[%s3 + $0x80] sm:$0xf]
    %v2543 = vld [vmem:[%s3 + $0x84] sm:$0xf]
    %v2544 = vld [vmem:[%s3 + $0x88] sm:$0xf]
    %v2545 = vld [vmem:[%s3 + $0x8c] sm:$0xf]
    %v2546 = vld [vmem:[%s3 + $0x90] sm:$0xf]
    %v2547 = vld [vmem:[%s3 + $0x94] sm:$0xf]
    %v2548 = vld [vmem:[%s3 + $0x98] sm:$0xf]
    %v2549 = vld [vmem:[%s3 + $0x9c] sm:$0xf]
    %v2550 = vld [vmem:[%s3 + $0xa0] sm:$0xf]
    %v2551 = vld [vmem:[%s3 + $0xa4] sm:$0xf]
    %v2552 = vld [vmem:[%s3 + $0xa8] sm:$0xf]
    %v2553 = vld [vmem:[%s3 + $0xac] sm:$0xf]
    %v2554 = vld [vmem:[%s3 + $0xb0] sm:$0xf]
    %v2555 = vld [vmem:[%s3 + $0xb4] sm:$0xf]
    %v2556 = vld [vmem:[%s3 + $0xb8] sm:$0xf]
    %v2557 = vld [vmem:[%s3 + $0xbc] sm:$0xf]
    %v2558 = vld [vmem:[%s3 + $0xc0] sm:$0xf]
    %v2559 = vld [vmem:[%s3 + $0xc4] sm:$0xf]
    %v2560 = vld [vmem:[%s3 + $0xc8] sm:$0xf]
    %v2561 = vld [vmem:[%s3 + $0xcc] sm:$0xf]
    %v2562 = vld [vmem:[%s3 + $0xd0] sm:$0xf]
    %v2563 = vld [vmem:[%s3 + $0xd4] sm:$0xf]
    %v2564 = vld [vmem:[%s3 + $0xd8] sm:$0xf]
    %v2565 = vld [vmem:[%s3 + $0xdc] sm:$0xf]
    %v2566 = vld [vmem:[%s3 + $0xe0] sm:$0xf]
    %v2567 = vld [vmem:[%s3 + $0xe4] sm:$0xf]
    %v2568 = vld [vmem:[%s3 + $0xe8] sm:$0xf]
    %v2569 = vld [vmem:[%s3 + $0xec] sm:$0xf]
    %v2570 = vld [vmem:[%s3 + $0xf0] sm:$0xf]
    %v2571 = vld [vmem:[%s3 + $0xf4] sm:$0xf]
    %v2572 = vld [vmem:[%s3 + $0xf8] sm:$0xf]
    %v2573 = vld [vmem:[%s3 + $0xfc] sm:$0xf]
    %v2574 = vld [vmem:[%s3 + $0x100] sm:$0xf]
    %v2575 = vld [vmem:[%s3 + $0x104] sm:$0xf]
    %v2576 = vld [vmem:[%s3 + $0x108] sm:$0xf]
    %v2577 = vld [vmem:[%s3 + $0x10c] sm:$0xf]
    %v2578 = vld [vmem:[%s3 + $0x110] sm:$0xf]
    %v2579 = vld [vmem:[%s3 + $0x114] sm:$0xf]
    %v2580 = vld [vmem:[%s3 + $0x118] sm:$0xf]
    %v2581 = vld [vmem:[%s3 + $0x11c] sm:$0xf]
    %v2582 = vld [vmem:[%s3 + $0x120] sm:$0xf]
    %v2583 = vld [vmem:[%s3 + $0x124] sm:$0xf]
    %v2584 = vld [vmem:[%s3 + $0x128] sm:$0xf]
    %v2585 = vld [vmem:[%s3 + $0x12c] sm:$0xf]
    %v2586 = vld [vmem:[%s3 + $0x130] sm:$0xf]
    %v2587 = vld [vmem:[%s3 + $0x134] sm:$0xf]
    %v2588 = vld [vmem:[%s3 + $0x138] sm:$0xf]
    %v2589 = vld [vmem:[%s3 + $0x13c] sm:$0xf]
    %v2590 = vld [vmem:[#allocation8] sm:$0x1]
    %v2592 = vlaneseq
    %v2593 = vshrl.u32 %v2592, 7
    %v2594 = vsub.s32 0, %v2593
    %v2595 = vrot.slane %v2590, %v2594
    %v2677 = vunpack.c.l.b16 %v2510
    %v2678 = vunpack.c.l.b16 %v2511
    %v2679 = vunpack.c.l.b16 %v2512
    %v2680 = vunpack.c.l.b16 %v2513
    %v2681 = vunpack.c.l.b16 %v2514
    %v2682 = vunpack.c.l.b16 %v2515
    %v2683 = vunpack.c.l.b16 %v2516
    %v2684 = vunpack.c.l.b16 %v2517
    %v2685 = vunpack.c.l.b16 %v2518
    %v2686 = vunpack.c.l.b16 %v2519
    %v2687 = vunpack.c.l.b16 %v2520
    %v2688 = vunpack.c.l.b16 %v2521
    %v2689 = vunpack.c.l.b16 %v2522
    %v2690 = vunpack.c.l.b16 %v2523
    %v2691 = vunpack.c.l.b16 %v2524
    %v2692 = vunpack.c.l.b16 %v2525
    %v2693 = vunpack.c.l.b16 %v2526
    %v2694 = vunpack.c.l.b16 %v2527
    %v2695 = vunpack.c.l.b16 %v2528
    %v2696 = vunpack.c.l.b16 %v2529
    %v2697 = vunpack.c.l.b16 %v2530
    %v2698 = vunpack.c.l.b16 %v2531
    %v2699 = vunpack.c.l.b16 %v2532
    %v2700 = vunpack.c.l.b16 %v2533
    %v2701 = vunpack.c.l.b16 %v2534
    %v2702 = vunpack.c.l.b16 %v2535
    %v2703 = vunpack.c.l.b16 %v2536
    %v2704 = vunpack.c.l.b16 %v2537
    %v2705 = vunpack.c.l.b16 %v2538
    %v2706 = vunpack.c.l.b16 %v2539
    %v2707 = vunpack.c.l.b16 %v2540
    %v2708 = vunpack.c.l.b16 %v2541
    %v2709 = vunpack.c.l.b16 %v2542
    %v2710 = vunpack.c.l.b16 %v2543
    %v2711 = vunpack.c.l.b16 %v2544
    %v2712 = vunpack.c.l.b16 %v2545
    %v2713 = vunpack.c.l.b16 %v2546
    %v2714 = vunpack.c.l.b16 %v2547
    %v2715 = vunpack.c.l.b16 %v2548
    %v2716 = vunpack.c.l.b16 %v2549
    %v2717 = vunpack.c.l.b16 %v2550
    %v2718 = vunpack.c.l.b16 %v2551
    %v2719 = vunpack.c.l.b16 %v2552
    %v2720 = vunpack.c.l.b16 %v2553
    %v2721 = vunpack.c.l.b16 %v2554
    %v2722 = vunpack.c.l.b16 %v2555
    %v2723 = vunpack.c.l.b16 %v2556
    %v2724 = vunpack.c.l.b16 %v2557
    %v2725 = vunpack.c.l.b16 %v2558
    %v2726 = vunpack.c.l.b16 %v2559
    %v2727 = vunpack.c.l.b16 %v2560
    %v2728 = vunpack.c.l.b16 %v2561
    %v2729 = vunpack.c.l.b16 %v2562
    %v2730 = vunpack.c.l.b16 %v2563
    %v2731 = vunpack.c.l.b16 %v2564
    %v2732 = vunpack.c.l.b16 %v2565
    %v2733 = vunpack.c.l.b16 %v2566
    %v2734 = vunpack.c.l.b16 %v2567
    %v2735 = vunpack.c.l.b16 %v2568
    %v2736 = vunpack.c.l.b16 %v2569
    %v2737 = vunpack.c.l.b16 %v2570
    %v2738 = vunpack.c.l.b16 %v2571
    %v2739 = vunpack.c.l.b16 %v2572
    %v2740 = vunpack.c.l.b16 %v2573
    %v2741 = vunpack.c.l.b16 %v2574
    %v2742 = vunpack.c.l.b16 %v2575
    %v2743 = vunpack.c.l.b16 %v2576
    %v2744 = vunpack.c.l.b16 %v2577
    %v2745 = vunpack.c.l.b16 %v2578
    %v2746 = vunpack.c.l.b16 %v2579
    %v2747 = vunpack.c.l.b16 %v2580
    %v2748 = vunpack.c.l.b16 %v2581
    %v2749 = vunpack.c.l.b16 %v2582
    %v2750 = vunpack.c.l.b16 %v2583
    %v2751 = vunpack.c.l.b16 %v2584
    %v2752 = vunpack.c.l.b16 %v2585
    %v2753 = vunpack.c.l.b16 %v2586
    %v2754 = vunpack.c.l.b16 %v2587
    %v2755 = vunpack.c.l.b16 %v2588
    %v2756 = vunpack.c.l.b16 %v2589
    %v2757 = vpack.c.b16 %v2678, %v2677
    %v2758 = vpack.c.b16 %v2680, %v2679
    %v2759 = vpack.c.b16 %v2682, %v2681
    %v2760 = vpack.c.b16 %v2684, %v2683
    %v2761 = vpack.c.b16 %v2686, %v2685
    %v2762 = vpack.c.b16 %v2688, %v2687
    %v2763 = vpack.c.b16 %v2690, %v2689
    %v2764 = vpack.c.b16 %v2692, %v2691
    %v2765 = vpack.c.b16 %v2694, %v2693
    %v2766 = vpack.c.b16 %v2696, %v2695
    %v2767 = vpack.c.b16 %v2698, %v2697
    %v2768 = vpack.c.b16 %v2700, %v2699
    %v2769 = vpack.c.b16 %v2702, %v2701
    %v2770 = vpack.c.b16 %v2704, %v2703
    %v2771 = vpack.c.b16 %v2706, %v2705
    %v2772 = vpack.c.b16 %v2708, %v2707
    %v2773 = vpack.c.b16 %v2710, %v2709
    %v2774 = vpack.c.b16 %v2712, %v2711
    %v2775 = vpack.c.b16 %v2714, %v2713
    %v2776 = vpack.c.b16 %v2716, %v2715
    %v2777 = vpack.c.b16 %v2718, %v2717
    %v2778 = vpack.c.b16 %v2720, %v2719
    %v2779 = vpack.c.b16 %v2722, %v2721
    %v2780 = vpack.c.b16 %v2724, %v2723
    %v2781 = vpack.c.b16 %v2726, %v2725
    %v2782 = vpack.c.b16 %v2728, %v2727
    %v2783 = vpack.c.b16 %v2730, %v2729
    %v2784 = vpack.c.b16 %v2732, %v2731
    %v2785 = vpack.c.b16 %v2734, %v2733
    %v2786 = vpack.c.b16 %v2736, %v2735
    %v2787 = vpack.c.b16 %v2738, %v2737
    %v2788 = vpack.c.b16 %v2740, %v2739
    %v2789 = vpack.c.b16 %v2742, %v2741
    %v2790 = vpack.c.b16 %v2744, %v2743
    %v2791 = vpack.c.b16 %v2746, %v2745
    %v2792 = vpack.c.b16 %v2748, %v2747
    %v2793 = vpack.c.b16 %v2750, %v2749
    %v2794 = vpack.c.b16 %v2752, %v2751
    %v2795 = vpack.c.b16 %v2754, %v2753
    %v2796 = vpack.c.b16 %v2756, %v2755
    %2837 = vmatprep.subr.bf16.mxu0 0
    %2838 = vmatpush1.bf16.msra.mxu0 %v2757
    %2839 = vmatprep.subr.bf16.mxu0 0
    %2840 = vmatpush1.bf16.msra.mxu0 %v2758
    %2841 = vmatprep.subr.bf16.mxu0 0
    %2842 = vmatpush1.bf16.msra.mxu0 %v2759
    %2843 = vmatprep.subr.bf16.mxu0 0
    %2844 = vmatpush1.bf16.msra.mxu0 %v2760
    %2845 = vmatprep.subr.bf16.mxu0 0
    %2846 = vmatpush1.bf16.msra.mxu0 %v2761
    %2847 = vmatprep.subr.bf16.mxu0 0
    %2848 = vmatpush1.bf16.msra.mxu0 %v2762
    %2849 = vmatprep.subr.bf16.mxu0 0
    %2850 = vmatpush1.bf16.msra.mxu0 %v2763
    %2851 = vmatprep.subr.bf16.mxu0 0
    %2852 = vmatpush1.bf16.msra.mxu0 %v2764
    %2853 = vmatprep.subr.bf16.mxu0 0
    %2854 = vmatpush1.bf16.msra.mxu0 %v2765
    %2855 = vmatprep.subr.bf16.mxu0 0
    %2856 = vmatpush1.bf16.msra.mxu0 %v2766
    %2857 = vmatprep.subr.bf16.mxu0 0
    %2858 = vmatpush1.bf16.msra.mxu0 %v2767
    %2859 = vmatprep.subr.bf16.mxu0 0
    %2860 = vmatpush1.bf16.msra.mxu0 %v2768
    %2861 = vmatprep.subr.bf16.mxu0 0
    %2862 = vmatpush1.bf16.msra.mxu0 %v2769
    %2863 = vmatprep.subr.bf16.mxu0 0
    %2864 = vmatpush1.bf16.msra.mxu0 %v2770
    %2865 = vmatprep.subr.bf16.mxu0 0
    %2866 = vmatpush1.bf16.msra.mxu0 %v2771
    %2867 = vmatprep.subr.bf16.mxu0 0
    %2868 = vmatpush1.bf16.msra.mxu0 %v2772
    %2869 = vmatprep.mubr.bf16.mxu0 %v2506
    %2870 = vmatmul.mubr.bf16.gmra.mrb[0].mxu0 %v2505
    %v2871 = vpop.f32.mrb[0].mxu0
    %v2872 = vadd.f32 %v2595, %v2871
    %v2873 = vpop.f32.mrb[0].mxu0
    %v2874 = vpop.f32.mrb[0].mxu0
    %v2875 = vpop.f32.mrb[0].mxu0
    %2876 = vdwg.mxu0
    %2877 = vmatprep.subr.bf16.mxu0 0
    %2878 = vmatpush1.bf16.msra.mxu0 %v2773
    %2879 = vmatprep.subr.bf16.mxu0 0
    %2880 = vmatpush1.bf16.msra.mxu0 %v2774
    %2881 = vmatprep.subr.bf16.mxu0 0
    %2882 = vmatpush1.bf16.msra.mxu0 %v2775
    %2883 = vmatprep.subr.bf16.mxu0 0
    %2884 = vmatpush1.bf16.msra.mxu0 %v2776
    %2885 = vmatprep.subr.bf16.mxu0 0
    %2886 = vmatpush1.bf16.msra.mxu0 %v2777
    %2887 = vmatprep.subr.bf16.mxu0 0
    %2888 = vmatpush1.bf16.msra.mxu0 %v2778
    %2889 = vmatprep.subr.bf16.mxu0 0
    %2890 = vmatpush1.bf16.msra.mxu0 %v2779
    %2891 = vmatprep.subr.bf16.mxu0 0
    %2892 = vmatpush1.bf16.msra.mxu0 %v2780
    %2893 = vmatprep.subr.bf16.mxu0 0
    %2894 = vmatpush1.bf16.msra.mxu0 %v2781
    %2895 = vmatprep.subr.bf16.mxu0 0
    %2896 = vmatpush1.bf16.msra.mxu0 %v2782
    %2897 = vmatprep.subr.bf16.mxu0 0
    %2898 = vmatpush1.bf16.msra.mxu0 %v2783
    %2899 = vmatprep.subr.bf16.mxu0 0
    %2900 = vmatpush1.bf16.msra.mxu0 %v2784
    %2901 = vmatprep.subr.bf16.mxu0 0
    %2902 = vmatpush1.bf16.msra.mxu0 %v2785
    %2903 = vmatprep.subr.bf16.mxu0 0
    %2904 = vmatpush1.bf16.msra.mxu0 %v2786
    %2905 = vmatprep.subr.bf16.mxu0 0
    %2906 = vmatpush1.bf16.msra.mxu0 %v2787
    %2907 = vmatprep.subr.bf16.mxu0 0
    %2908 = vmatpush1.bf16.msra.mxu0 %v2788
    %2909 = vmatprep.mubr.bf16.mxu0 %v2508
    %2910 = vmatmul.mubr.bf16.gmra.mrb[0].mxu0 %v2507
    %v2911 = vpop.f32.mrb[0].mxu0
    %v2912 = vadd.f32 %v2872, %v2911
    %v2913 = vpop.f32.mrb[0].mxu0
    %v2914 = vpop.f32.mrb[0].mxu0
    %v2915 = vpop.f32.mrb[0].mxu0
    %2916 = vdwg.mxu0
    %2917 = vmatprep.subr.bf16.mxu0 0
    %2918 = vmatpush1.bf16.msra.mxu0 %v2789
    %2919 = vmatprep.subr.bf16.mxu0 0
    %2920 = vmatpush1.bf16.msra.mxu0 %v2790
    %2921 = vmatprep.subr.bf16.mxu0 0
    %2922 = vmatpush1.bf16.msra.mxu0 %v2791
    %2923 = vmatprep.subr.bf16.mxu0 0
    %2924 = vmatpush1.bf16.msra.mxu0 %v2792
    %2925 = vmatprep.subr.bf16.mxu0 0
    %2926 = vmatpush1.bf16.msra.mxu0 %v2793
    %2927 = vmatprep.subr.bf16.mxu0 0
    %2928 = vmatpush1.bf16.msra.mxu0 %v2794
    %2929 = vmatprep.subr.bf16.mxu0 0
    %2930 = vmatpush1.bf16.msra.mxu0 %v2795
    %2931 = vmatprep.subr.bf16.mxu0 0
    %2932 = vmatpush1.bf16.msra.mxu0 %v2796
    %2933 = vmatprep.subr.bf16.mxu0 0
    %2934 = vmatpush1.bf16.msra.mxu0 0
    %2935 = vmatprep.subr.bf16.mxu0 0
    %2936 = vmatpush1.bf16.msra.mxu0 0
    %2937 = vmatprep.subr.bf16.mxu0 0
    %2938 = vmatpush1.bf16.msra.mxu0 0
    %2939 = vmatprep.subr.bf16.mxu0 0
    %2940 = vmatpush1.bf16.msra.mxu0 0
    %2941 = vmatprep.subr.bf16.mxu0 0
    %2942 = vmatpush1.bf16.msra.mxu0 0
    %2943 = vmatprep.subr.bf16.mxu0 0
    %2944 = vmatpush1.bf16.msra.mxu0 0
    %2945 = vmatprep.subr.bf16.mxu0 0
    %2946 = vmatpush1.bf16.msra.mxu0 0
    %2947 = vmatprep.subr.bf16.mxu0 0
    %2948 = vmatpush1.bf16.msra.mxu0 0
    %2949 = vmatprep.mubr.bf16.mxu0 0
    %2950 = vmatmul.mubr.bf16.gmra.mrb[0].mxu0 %v2509
    %v2951 = vpop.f32.mrb[0].mxu0
    %v2952 = vadd.f32 %v2912, %v2951
    %v2953 = vpop.f32.mrb[0].mxu0
    %v2954 = vpop.f32.mrb[0].mxu0
    %v2955 = vpop.f32.mrb[0].mxu0
    %2956 = vdwg.mxu0
    %v2957 = vpack.c.bf16 %v2952, %v2952
    %v2958 = vld [vmem:[#allocation10] sm:$0xff]
    %v2959 = vld [vmem:[#allocation10 + $0x8] sm:$0xff]
    %v2960 = vld [vmem:[#allocation11] sm:$0x3]
    %v2962 = vlaneseq
    %v2963 = vshrl.u32 %v2962, 7
    %v2964 = vsub.s32 0, %v2963
    %v2965 = vrot.slane %v2960, %v2964
    %v2966 = vlaneseq
    %v2967 = vshrl.u32 %v2966, 7
    %v2968 = vsub.s32 1, %v2967
    %v2969 = vrot.slane %v2960, %v2968
    %v2974 = vunpack.c.l.b16 %v2958
    %v2975 = vunpack.c.h.b16 %v2958
    %v2976 = vunpack.c.l.b16 %v2959
    %v2977 = vunpack.c.h.b16 %v2959
    %v2978 = vpack.c.b16 %v2976, %v2974
    %v2979 = vpack.c.b16 %v2977, %v2975
    %vm2982 = vcmask 130048
    %v2984 = vsel %vm2982, %v2957, 0
    %2986 = vmatprep.subr.bf16.mxu0 %v2979
    %2987 = vmatpush1.bf16.msra.mxu0 %v2978
    %2988 = vmatprep.subr.bf16.mxu0 0
    %2989 = vmatpush1.bf16.msra.mxu0 0
    %2990 = vmatprep.subr.bf16.mxu0 0
    %2991 = vmatpush1.bf16.msra.mxu0 0
    %2992 = vmatprep.subr.bf16.mxu0 0
    %2993 = vmatpush1.bf16.msra.mxu0 0
    %2994 = vmatprep.subr.bf16.mxu0 0
    %2995 = vmatpush1.bf16.msra.mxu0 0
    %2996 = vmatprep.subr.bf16.mxu0 0
    %2997 = vmatpush1.bf16.msra.mxu0 0
    %2998 = vmatprep.subr.bf16.mxu0 0
    %2999 = vmatpush1.bf16.msra.mxu0 0
    %3000 = vmatprep.subr.bf16.mxu0 0
    %3001 = vmatpush1.bf16.msra.mxu0 0
    %3002 = vmatprep.subr.bf16.mxu0 0
    %3003 = vmatpush1.bf16.msra.mxu0 0
    %3004 = vmatprep.subr.bf16.mxu0 0
    %3005 = vmatpush1.bf16.msra.mxu0 0
    %3006 = vmatprep.subr.bf16.mxu0 0
    %3007 = vmatpush1.bf16.msra.mxu0 0
    %3008 = vmatprep.subr.bf16.mxu0 0
    %3009 = vmatpush1.bf16.msra.mxu0 0
    %3010 = vmatprep.subr.bf16.mxu0 0
    %3011 = vmatpush1.bf16.msra.mxu0 0
    %3012 = vmatprep.subr.bf16.mxu0 0
    %3013 = vmatpush1.bf16.msra.mxu0 0
    %3014 = vmatprep.subr.bf16.mxu0 0
    %3015 = vmatpush1.bf16.msra.mxu0 0
    %3016 = vmatprep.subr.bf16.mxu0 0
    %3017 = vmatpush1.bf16.msra.mxu0 0
    %3018 = vmatprep.mubr.bf16.mxu0 0
    %3019 = vmatmul.mubr.bf16.gmra.mrb[0].mxu0 %v2984
    %v3020 = vpop.f32.mrb[0].mxu0
    %v3021 = vadd.f32 %v2965, %v3020
    %v3022 = vpop.f32.mrb[0].mxu0
    %v3023 = vadd.f32 %v2969, %v3022
    %v3024 = vpop.f32.mrb[0].mxu0
    %v3025 = vpop.f32.mrb[0].mxu0
    %3026 = vdwg.mxu0
    %v3027 = vmax.f32 %v3021, 0.0
    %v3028 = vmax.f32 %v3023, 0.0
    %v3029 = vpack.c.bf16 %v3027, %v3027
    %v3030 = vpack.c.bf16 %v3028, %v3028
    %v3031 = vld [vmem:[#allocation13] sm:$0xff]
    %v3032 = vld [vmem:[#allocation13 + $0x8] sm:$0xff]
    %v3033 = vld [vmem:[#allocation13 + $0x10] sm:$0xf]
    %v3034 = vld [vmem:[#allocation13 + $0x14] sm:$0xff]
    %v3035 = vld [vmem:[#allocation13 + $0x1c] sm:$0xff]
    %v3036 = vld [vmem:[#allocation13 + $0x24] sm:$0xf]
    %v3037 = vld [vmem:[#allocation13 + $0x28] sm:$0xff]
    %v3038 = vld [vmem:[#allocation13 + $0x30] sm:$0xff]
    %v3039 = vld [vmem:[#allocation13 + $0x38] sm:$0xf]
    %v3040 = vld [vmem:[#allocation13 + $0x3c] sm:$0xff]
    %v3041 = vld [vmem:[#allocation13 + $0x44] sm:$0xff]
    %v3042 = vld [vmem:[#allocation13 + $0x4c] sm:$0xf]
    %v3043 = vld [vmem:[#allocation13 + $0x50] sm:$0xff]
    %v3044 = vld [vmem:[#allocation13 + $0x58] sm:$0xff]
    %v3045 = vld [vmem:[#allocation13 + $0x60] sm:$0xf]
    %v3046 = vld [vmem:[#allocation13 + $0x64] sm:$0xff]
    %v3047 = vld [vmem:[#allocation13 + $0x6c] sm:$0xff]
    %v3048 = vld [vmem:[#allocation13 + $0x74] sm:$0xf]
    %v3049 = vld [vmem:[#allocation13 + $0x78] sm:$0xff]
    %v3050 = vld [vmem:[#allocation13 + $0x80] sm:$0xff]
    %v3051 = vld [vmem:[#allocation13 + $0x88] sm:$0xf]
    %v3052 = vld [vmem:[#allocation13 + $0x8c] sm:$0xff]
    %v3053 = vld [vmem:[#allocation13 + $0x94] sm:$0xff]
    %v3054 = vld [vmem:[#allocation13 + $0x9c] sm:$0xf]
    %v3055 = vld [vmem:[#allocation13 + $0xa0] sm:$0xff]
    %v3056 = vld [vmem:[#allocation13 + $0xa8] sm:$0xff]
    %v3057 = vld [vmem:[#allocation13 + $0xb0] sm:$0xf]
    %v3058 = vld [vmem:[#allocation13 + $0xb4] sm:$0xff]
    %v3059 = vld [vmem:[#allocation13 + $0xbc] sm:$0xff]
    %v3060 = vld [vmem:[#allocation13 + $0xc4] sm:$0xf]
    %v3061 = vld [vmem:[#allocation13 + $0xc8] sm:$0xff]
    %v3062 = vld [vmem:[#allocation13 + $0xd0] sm:$0xff]
    %v3063 = vld [vmem:[#allocation13 + $0xd8] sm:$0xf]
    %v3064 = vld [vmem:[#allocation13 + $0xdc] sm:$0xff]
    %v3065 = vld [vmem:[#allocation13 + $0xe4] sm:$0xff]
    %v3066 = vld [vmem:[#allocation13 + $0xec] sm:$0xf]
    %v3067 = vld [vmem:[#allocation13 + $0xf0] sm:$0xff]
    %v3068 = vld [vmem:[#allocation13 + $0xf8] sm:$0xff]
    %v3069 = vld [vmem:[#allocation13 + $0x100] sm:$0xf]
    %v3070 = vld [vmem:[#allocation13 + $0x104] sm:$0xff]
    %v3071 = vld [vmem:[#allocation13 + $0x10c] sm:$0xff]
    %v3072 = vld [vmem:[#allocation13 + $0x114] sm:$0xf]
    %v3073 = vld [vmem:[#allocation13 + $0x118] sm:$0xff]
    %v3074 = vld [vmem:[#allocation13 + $0x120] sm:$0xff]
    %v3075 = vld [vmem:[#allocation13 + $0x128] sm:$0xf]
    %v3076 = vld [vmem:[#allocation13 + $0x12c] sm:$0xff]
    %v3077 = vld [vmem:[#allocation13 + $0x134] sm:$0xff]
    %v3078 = vld [vmem:[#allocation13 + $0x13c] sm:$0xf]
    %v3079 = vld [vmem:[#allocation13 + $0x140] sm:$0xff]
    %v3080 = vld [vmem:[#allocation13 + $0x148] sm:$0xff]
    %v3081 = vld [vmem:[#allocation13 + $0x150] sm:$0xf]
    %v3082 = vld [vmem:[#allocation13 + $0x154] sm:$0xff]
    %v3083 = vld [vmem:[#allocation13 + $0x15c] sm:$0xff]
    %v3084 = vld [vmem:[#allocation13 + $0x164] sm:$0xf]
    %v3085 = vld [vmem:[#allocation13 + $0x168] sm:$0xff]
    %v3086 = vld [vmem:[#allocation13 + $0x170] sm:$0xff]
    %v3087 = vld [vmem:[#allocation13 + $0x178] sm:$0xf]
    %v3088 = vld [vmem:[#allocation13 + $0x17c] sm:$0xff]
    %v3089 = vld [vmem:[#allocation13 + $0x184] sm:$0xff]
    %v3090 = vld [vmem:[#allocation13 + $0x18c] sm:$0xf]
    %v3091 = vld [vmem:[#allocation13 + $0x190] sm:$0xff]
    %v3092 = vld [vmem:[#allocation13 + $0x198] sm:$0xff]
    %v3093 = vld [vmem:[#allocation13 + $0x1a0] sm:$0xf]
    %v3094 = vld [vmem:[#allocation13 + $0x1a4] sm:$0xff]
    %v3095 = vld [vmem:[#allocation13 + $0x1ac] sm:$0xff]
    %v3096 = vld [vmem:[#allocation13 + $0x1b4] sm:$0xf]
    %v3097 = vld [vmem:[#allocation13 + $0x1b8] sm:$0xff]
    %v3098 = vld [vmem:[#allocation13 + $0x1c0] sm:$0xff]
    %v3099 = vld [vmem:[#allocation13 + $0x1c8] sm:$0xf]
    %v3100 = vld [vmem:[#allocation13 + $0x1cc] sm:$0xff]
    %v3101 = vld [vmem:[#allocation13 + $0x1d4] sm:$0xff]
    %v3102 = vld [vmem:[#allocation13 + $0x1dc] sm:$0xf]
    %v3103 = vld [vmem:[#allocation13 + $0x1e0] sm:$0xff]
    %v3104 = vld [vmem:[#allocation13 + $0x1e8] sm:$0xff]
    %v3105 = vld [vmem:[#allocation13 + $0x1f0] sm:$0xf]
    %v3106 = vld [vmem:[#allocation13 + $0x1f4] sm:$0xff]
    %v3107 = vld [vmem:[#allocation13 + $0x1fc] sm:$0xff]
    %v3108 = vld [vmem:[#allocation13 + $0x204] sm:$0xf]
    %v3109 = vld [vmem:[#allocation13 + $0x208] sm:$0xff]
    %v3110 = vld [vmem:[#allocation13 + $0x210] sm:$0xff]
    %v3111 = vld [vmem:[#allocation13 + $0x218] sm:$0xf]
    %v3112 = vld [vmem:[#allocation13 + $0x21c] sm:$0xff]
    %v3113 = vld [vmem:[#allocation13 + $0x224] sm:$0xff]
    %v3114 = vld [vmem:[#allocation13 + $0x22c] sm:$0xf]
    %v3115 = vld [vmem:[#allocation13 + $0x230] sm:$0xff]
    %v3116 = vld [vmem:[#allocation13 + $0x238] sm:$0xff]
    %v3117 = vld [vmem:[#allocation13 + $0x240] sm:$0xf]
    %v3118 = vld [vmem:[#allocation13 + $0x244] sm:$0xff]
    %v3119 = vld [vmem:[#allocation13 + $0x24c] sm:$0xff]
    %v3120 = vld [vmem:[#allocation13 + $0x254] sm:$0xf]
    %v3121 = vld [vmem:[#allocation13 + $0x258] sm:$0xff]
    %v3122 = vld [vmem:[#allocation13 + $0x260] sm:$0xff]
    %v3123 = vld [vmem:[#allocation13 + $0x268] sm:$0xf]
    %v3124 = vld [vmem:[#allocation13 + $0x26c] sm:$0xff]
    %v3125 = vld [vmem:[#allocation13 + $0x274] sm:$0xff]
    %v3126 = vld [vmem:[#allocation13 + $0x27c] sm:$0xf]
    %v3127 = vld [vmem:[#allocation14] sm:$0x1f]
    %v3129 = vlaneseq
    %v3130 = vshrl.u32 %v3129, 7
    %v3131 = vsub.s32 0, %v3130
    %v3132 = vrot.slane %v3127, %v3131
    %v3133 = vlaneseq
    %v3134 = vshrl.u32 %v3133, 7
    %v3135 = vsub.s32 1, %v3134
    %v3136 = vrot.slane %v3127, %v3135
    %v3137 = vlaneseq
    %v3138 = vshrl.u32 %v3137, 7
    %v3139 = vsub.s32 2, %v3138
    %v3140 = vrot.slane %v3127, %v3139
    %v3141 = vlaneseq
    %v3142 = vshrl.u32 %v3141, 7
    %v3143 = vsub.s32 3, %v3142
    %v3144 = vrot.slane %v3127, %v3143
    %v3145 = vlaneseq
    %v3146 = vshrl.u32 %v3145, 7
    %v3147 = vsub.s32 4, %v3146
    %v3148 = vrot.slane %v3127, %v3147
    %v3250 = vunpack.c.l.b16 %v3031
    %v3251 = vunpack.c.h.b16 %v3031
    %v3252 = vunpack.c.l.b16 %v3032
    %v3253 = vunpack.c.h.b16 %v3032
    %v3254 = vunpack.c.l.b16 %v3033
    %v3255 = vunpack.c.l.b16 %v3034
    %v3256 = vunpack.c.h.b16 %v3034
    %v3257 = vunpack.c.l.b16 %v3035
    %v3258 = vunpack.c.h.b16 %v3035
    %v3259 = vunpack.c.l.b16 %v3036
    %v3260 = vunpack.c.l.b16 %v3037
    %v3261 = vunpack.c.h.b16 %v3037
    %v3262 = vunpack.c.l.b16 %v3038
    %v3263 = vunpack.c.h.b16 %v3038
    %v3264 = vunpack.c.l.b16 %v3039
    %v3265 = vunpack.c.l.b16 %v3040
    %v3266 = vunpack.c.h.b16 %v3040
    %v3267 = vunpack.c.l.b16 %v3041
    %v3268 = vunpack.c.h.b16 %v3041
    %v3269 = vunpack.c.l.b16 %v3042
    %v3270 = vunpack.c.l.b16 %v3043
    %v3271 = vunpack.c.h.b16 %v3043
    %v3272 = vunpack.c.l.b16 %v3044
    %v3273 = vunpack.c.h.b16 %v3044
    %v3274 = vunpack.c.l.b16 %v3045
    %v3275 = vunpack.c.l.b16 %v3046
    %v3276 = vunpack.c.h.b16 %v3046
    %v3277 = vunpack.c.l.b16 %v3047
    %v3278 = vunpack.c.h.b16 %v3047
    %v3279 = vunpack.c.l.b16 %v3048
    %v3280 = vunpack.c.l.b16 %v3049
    %v3281 = vunpack.c.h.b16 %v3049
    %v3282 = vunpack.c.l.b16 %v3050
    %v3283 = vunpack.c.h.b16 %v3050
    %v3284 = vunpack.c.l.b16 %v3051
    %v3285 = vunpack.c.l.b16 %v3052
    %v3286 = vunpack.c.h.b16 %v3052
    %v3287 = vunpack.c.l.b16 %v3053
    %v3288 = vunpack.c.h.b16 %v3053
    %v3289 = vunpack.c.l.b16 %v3054
    %v3290 = vunpack.c.l.b16 %v3055
    %v3291 = vunpack.c.h.b16 %v3055
    %v3292 = vunpack.c.l.b16 %v3056
    %v3293 = vunpack.c.h.b16 %v3056
    %v3294 = vunpack.c.l.b16 %v3057
    %v3295 = vunpack.c.l.b16 %v3058
    %v3296 = vunpack.c.h.b16 %v3058
    %v3297 = vunpack.c.l.b16 %v3059
    %v3298 = vunpack.c.h.b16 %v3059
    %v3299 = vunpack.c.l.b16 %v3060
    %v3300 = vunpack.c.l.b16 %v3061
    %v3301 = vunpack.c.h.b16 %v3061
    %v3302 = vunpack.c.l.b16 %v3062
    %v3303 = vunpack.c.h.b16 %v3062
    %v3304 = vunpack.c.l.b16 %v3063
    %v3305 = vunpack.c.l.b16 %v3064
    %v3306 = vunpack.c.h.b16 %v3064
    %v3307 = vunpack.c.l.b16 %v3065
    %v3308 = vunpack.c.h.b16 %v3065
    %v3309 = vunpack.c.l.b16 %v3066
    %v3310 = vunpack.c.l.b16 %v3067
    %v3311 = vunpack.c.h.b16 %v3067
    %v3312 = vunpack.c.l.b16 %v3068
    %v3313 = vunpack.c.h.b16 %v3068
    %v3314 = vunpack.c.l.b16 %v3069
    %v3315 = vunpack.c.l.b16 %v3070
    %v3316 = vunpack.c.h.b16 %v3070
    %v3317 = vunpack.c.l.b16 %v3071
    %v3318 = vunpack.c.h.b16 %v3071
    %v3319 = vunpack.c.l.b16 %v3072
    %v3320 = vunpack.c.l.b16 %v3073
    %v3321 = vunpack.c.h.b16 %v3073
    %v3322 = vunpack.c.l.b16 %v3074
    %v3323 = vunpack.c.h.b16 %v3074
    %v3324 = vunpack.c.l.b16 %v3075
    %v3325 = vunpack.c.l.b16 %v3076
    %v3326 = vunpack.c.h.b16 %v3076
    %v3327 = vunpack.c.l.b16 %v3077
    %v3328 = vunpack.c.h.b16 %v3077
    %v3329 = vunpack.c.l.b16 %v3078
    %v3330 = vunpack.c.l.b16 %v3079
    %v3331 = vunpack.c.h.b16 %v3079
    %v3332 = vunpack.c.l.b16 %v3080
    %v3333 = vunpack.c.h.b16 %v3080
    %v3334 = vunpack.c.l.b16 %v3081
    %v3335 = vunpack.c.l.b16 %v3082
    %v3336 = vunpack.c.h.b16 %v3082
    %v3337 = vunpack.c.l.b16 %v3083
    %v3338 = vunpack.c.h.b16 %v3083
    %v3339 = vunpack.c.l.b16 %v3084
    %v3340 = vunpack.c.l.b16 %v3085
    %v3341 = vunpack.c.h.b16 %v3085
    %v3342 = vunpack.c.l.b16 %v3086
    %v3343 = vunpack.c.h.b16 %v3086
    %v3344 = vunpack.c.l.b16 %v3087
    %v3345 = vunpack.c.l.b16 %v3088
    %v3346 = vunpack.c.h.b16 %v3088
    %v3347 = vunpack.c.l.b16 %v3089
    %v3348 = vunpack.c.h.b16 %v3089
    %v3349 = vunpack.c.l.b16 %v3090
    %v3350 = vunpack.c.l.b16 %v3091
    %v3351 = vunpack.c.h.b16 %v3091
    %v3352 = vunpack.c.l.b16 %v3092
    %v3353 = vunpack.c.h.b16 %v3092
    %v3354 = vunpack.c.l.b16 %v3093
    %v3355 = vunpack.c.l.b16 %v3094
    %v3356 = vunpack.c.h.b16 %v3094
    %v3357 = vunpack.c.l.b16 %v3095
    %v3358 = vunpack.c.h.b16 %v3095
    %v3359 = vunpack.c.l.b16 %v3096
    %v3360 = vunpack.c.l.b16 %v3097
    %v3361 = vunpack.c.h.b16 %v3097
    %v3362 = vunpack.c.l.b16 %v3098
    %v3363 = vunpack.c.h.b16 %v3098
    %v3364 = vunpack.c.l.b16 %v3099
    %v3365 = vunpack.c.l.b16 %v3100
    %v3366 = vunpack.c.h.b16 %v3100
    %v3367 = vunpack.c.l.b16 %v3101
    %v3368 = vunpack.c.h.b16 %v3101
    %v3369 = vunpack.c.l.b16 %v3102
    %v3370 = vunpack.c.l.b16 %v3103
    %v3371 = vunpack.c.h.b16 %v3103
    %v3372 = vunpack.c.l.b16 %v3104
    %v3373 = vunpack.c.h.b16 %v3104
    %v3374 = vunpack.c.l.b16 %v3105
    %v3375 = vunpack.c.l.b16 %v3106
    %v3376 = vunpack.c.h.b16 %v3106
    %v3377 = vunpack.c.l.b16 %v3107
    %v3378 = vunpack.c.h.b16 %v3107
    %v3379 = vunpack.c.l.b16 %v3108
    %v3380 = vunpack.c.l.b16 %v3109
    %v3381 = vunpack.c.h.b16 %v3109
    %v3382 = vunpack.c.l.b16 %v3110
    %v3383 = vunpack.c.h.b16 %v3110
    %v3384 = vunpack.c.l.b16 %v3111
    %v3385 = vunpack.c.l.b16 %v3112
    %v3386 = vunpack.c.h.b16 %v3112
    %v3387 = vunpack.c.l.b16 %v3113
    %v3388 = vunpack.c.h.b16 %v3113
    %v3389 = vunpack.c.l.b16 %v3114
    %v3390 = vunpack.c.l.b16 %v3115
    %v3391 = vunpack.c.h.b16 %v3115
    %v3392 = vunpack.c.l.b16 %v3116
    %v3393 = vunpack.c.h.b16 %v3116
    %v3394 = vunpack.c.l.b16 %v3117
    %v3395 = vunpack.c.l.b16 %v3118
    %v3396 = vunpack.c.h.b16 %v3118
    %v3397 = vunpack.c.l.b16 %v3119
    %v3398 = vunpack.c.h.b16 %v3119
    %v3399 = vunpack.c.l.b16 %v3120
    %v3400 = vunpack.c.l.b16 %v3121
    %v3401 = vunpack.c.h.b16 %v3121
    %v3402 = vunpack.c.l.b16 %v3122
    %v3403 = vunpack.c.h.b16 %v3122
    %v3404 = vunpack.c.l.b16 %v3123
    %v3405 = vunpack.c.l.b16 %v3124
    %v3406 = vunpack.c.h.b16 %v3124
    %v3407 = vunpack.c.l.b16 %v3125
    %v3408 = vunpack.c.h.b16 %v3125
    %v3409 = vunpack.c.l.b16 %v3126
    %v3410 = vpack.c.b16 %v3255, %v3250
    %v3411 = vpack.c.b16 %v3256, %v3251
    %v3412 = vpack.c.b16 %v3257, %v3252
    %v3413 = vpack.c.b16 %v3258, %v3253
    %v3414 = vpack.c.b16 %v3259, %v3254
    %v3415 = vpack.c.b16 %v3265, %v3260
    %v3416 = vpack.c.b16 %v3266, %v3261
    %v3417 = vpack.c.b16 %v3267, %v3262
    %v3418 = vpack.c.b16 %v3268, %v3263
    %v3419 = vpack.c.b16 %v3269, %v3264
    %v3420 = vpack.c.b16 %v3275, %v3270
    %v3421 = vpack.c.b16 %v3276, %v3271
    %v3422 = vpack.c.b16 %v3277, %v3272
    %v3423 = vpack.c.b16 %v3278, %v3273
    %v3424 = vpack.c.b16 %v3279, %v3274
    %v3425 = vpack.c.b16 %v3285, %v3280
    %v3426 = vpack.c.b16 %v3286, %v3281
    %v3427 = vpack.c.b16 %v3287, %v3282
    %v3428 = vpack.c.b16 %v3288, %v3283
    %v3429 = vpack.c.b16 %v3289, %v3284
    %v3430 = vpack.c.b16 %v3295, %v3290
    %v3431 = vpack.c.b16 %v3296, %v3291
    %v3432 = vpack.c.b16 %v3297, %v3292
    %v3433 = vpack.c.b16 %v3298, %v3293
    %v3434 = vpack.c.b16 %v3299, %v3294
    %v3435 = vpack.c.b16 %v3305, %v3300
    %v3436 = vpack.c.b16 %v3306, %v3301
    %v3437 = vpack.c.b16 %v3307, %v3302
    %v3438 = vpack.c.b16 %v3308, %v3303
    %v3439 = vpack.c.b16 %v3309, %v3304
    %v3440 = vpack.c.b16 %v3315, %v3310
    %v3441 = vpack.c.b16 %v3316, %v3311
    %v3442 = vpack.c.b16 %v3317, %v3312
    %v3443 = vpack.c.b16 %v3318, %v3313
    %v3444 = vpack.c.b16 %v3319, %v3314
    %v3445 = vpack.c.b16 %v3325, %v3320
    %v3446 = vpack.c.b16 %v3326, %v3321
    %v3447 = vpack.c.b16 %v3327, %v3322
    %v3448 = vpack.c.b16 %v3328, %v3323
    %v3449 = vpack.c.b16 %v3329, %v3324
    %v3450 = vpack.c.b16 %v3335, %v3330
    %v3451 = vpack.c.b16 %v3336, %v3331
    %v3452 = vpack.c.b16 %v3337, %v3332
    %v3453 = vpack.c.b16 %v3338, %v3333
    %v3454 = vpack.c.b16 %v3339, %v3334
    %v3455 = vpack.c.b16 %v3345, %v3340
    %v3456 = vpack.c.b16 %v3346, %v3341
    %v3457 = vpack.c.b16 %v3347, %v3342
    %v3458 = vpack.c.b16 %v3348, %v3343
    %v3459 = vpack.c.b16 %v3349, %v3344
    %v3460 = vpack.c.b16 %v3355, %v3350
    %v3461 = vpack.c.b16 %v3356, %v3351
    %v3462 = vpack.c.b16 %v3357, %v3352
    %v3463 = vpack.c.b16 %v3358, %v3353
    %v3464 = vpack.c.b16 %v3359, %v3354
    %v3465 = vpack.c.b16 %v3365, %v3360
    %v3466 = vpack.c.b16 %v3366, %v3361
    %v3467 = vpack.c.b16 %v3367, %v3362
    %v3468 = vpack.c.b16 %v3368, %v3363
    %v3469 = vpack.c.b16 %v3369, %v3364
    %v3470 = vpack.c.b16 %v3375, %v3370
    %v3471 = vpack.c.b16 %v3376, %v3371
    %v3472 = vpack.c.b16 %v3377, %v3372
    %v3473 = vpack.c.b16 %v3378, %v3373
    %v3474 = vpack.c.b16 %v3379, %v3374
    %v3475 = vpack.c.b16 %v3385, %v3380
    %v3476 = vpack.c.b16 %v3386, %v3381
    %v3477 = vpack.c.b16 %v3387, %v3382
    %v3478 = vpack.c.b16 %v3388, %v3383
    %v3479 = vpack.c.b16 %v3389, %v3384
    %v3480 = vpack.c.b16 %v3395, %v3390
    %v3481 = vpack.c.b16 %v3396, %v3391
    %v3482 = vpack.c.b16 %v3397, %v3392
    %v3483 = vpack.c.b16 %v3398, %v3393
    %v3484 = vpack.c.b16 %v3399, %v3394
    %v3485 = vpack.c.b16 %v3405, %v3400
    %v3486 = vpack.c.b16 %v3406, %v3401
    %v3487 = vpack.c.b16 %v3407, %v3402
    %v3488 = vpack.c.b16 %v3408, %v3403
    %v3489 = vpack.c.b16 %v3409, %v3404
    %3570 = vmatprep.subr.bf16.mxu0 %v3411
    %3571 = vmatpush1.bf16.msra.mxu0 %v3410
    %3572 = vmatprep.subr.bf16.mxu0 %v3416
    %3573 = vmatpush1.bf16.msra.mxu0 %v3415
    %3574 = vmatprep.subr.bf16.mxu0 %v3421
    %3575 = vmatpush1.bf16.msra.mxu0 %v3420
    %3576 = vmatprep.subr.bf16.mxu0 %v3426
    %3577 = vmatpush1.bf16.msra.mxu0 %v3425
    %3578 = vmatprep.subr.bf16.mxu0 %v3431
    %3579 = vmatpush1.bf16.msra.mxu0 %v3430
    %3580 = vmatprep.subr.bf16.mxu0 %v3436
    %3581 = vmatpush1.bf16.msra.mxu0 %v3435
    %3582 = vmatprep.subr.bf16.mxu0 %v3441
    %3583 = vmatpush1.bf16.msra.mxu0 %v3440
    %3584 = vmatprep.subr.bf16.mxu0 %v3446
    %3585 = vmatpush1.bf16.msra.mxu0 %v3445
    %3586 = vmatprep.subr.bf16.mxu0 %v3451
    %3587 = vmatpush1.bf16.msra.mxu0 %v3450
    %3588 = vmatprep.subr.bf16.mxu0 %v3456
    %3589 = vmatpush1.bf16.msra.mxu0 %v3455
    %3590 = vmatprep.subr.bf16.mxu0 %v3461
    %3591 = vmatpush1.bf16.msra.mxu0 %v3460
    %3592 = vmatprep.subr.bf16.mxu0 %v3466
    %3593 = vmatpush1.bf16.msra.mxu0 %v3465
    %3594 = vmatprep.subr.bf16.mxu0 %v3471
    %3595 = vmatpush1.bf16.msra.mxu0 %v3470
    %3596 = vmatprep.subr.bf16.mxu0 %v3476
    %3597 = vmatpush1.bf16.msra.mxu0 %v3475
    %3598 = vmatprep.subr.bf16.mxu0 %v3481
    %3599 = vmatpush1.bf16.msra.mxu0 %v3480
    %3600 = vmatprep.subr.bf16.mxu0 %v3486
    %3601 = vmatpush1.bf16.msra.mxu0 %v3485
    %3602 = vmatprep.mubr.bf16.mxu0 %v3030
    %3603 = vmatmul.mubr.bf16.gmra.mrb[0].mxu0 %v3029
    %v3604 = vpop.f32.mrb[0].mxu0
    %v3605 = vadd.f32 %v3132, %v3604
    %v3606 = vpop.f32.mrb[0].mxu0
    %v3607 = vadd.f32 %v3136, %v3606
    %v3608 = vpop.f32.mrb[0].mxu0
    %v3609 = vpop.f32.mrb[0].mxu0
    %3610 = vdwg.mxu0
    %3611 = vmatprep.subr.bf16.mxu0 %v3413
    %3612 = vmatpush1.bf16.msra.mxu0 %v3412
    %3613 = vmatprep.subr.bf16.mxu0 %v3418
    %3614 = vmatpush1.bf16.msra.mxu0 %v3417
    %3615 = vmatprep.subr.bf16.mxu0 %v3423
    %3616 = vmatpush1.bf16.msra.mxu0 %v3422
    %3617 = vmatprep.subr.bf16.mxu0 %v3428
    %3618 = vmatpush1.bf16.msra.mxu0 %v3427
    %3619 = vmatprep.subr.bf16.mxu0 %v3433
    %3620 = vmatpush1.bf16.msra.mxu0 %v3432
    %3621 = vmatprep.subr.bf16.mxu0 %v3438
    %3622 = vmatpush1.bf16.msra.mxu0 %v3437
    %3623 = vmatprep.subr.bf16.mxu0 %v3443
    %3624 = vmatpush1.bf16.msra.mxu0 %v3442
    %3625 = vmatprep.subr.bf16.mxu0 %v3448
    %3626 = vmatpush1.bf16.msra.mxu0 %v3447
    %3627 = vmatprep.subr.bf16.mxu0 %v3453
    %3628 = vmatpush1.bf16.msra.mxu0 %v3452
    %3629 = vmatprep.subr.bf16.mxu0 %v3458
    %3630 = vmatpush1.bf16.msra.mxu0 %v3457
    %3631 = vmatprep.subr.bf16.mxu0 %v3463
    %3632 = vmatpush1.bf16.msra.mxu0 %v3462
    %3633 = vmatprep.subr.bf16.mxu0 %v3468
    %3634 = vmatpush1.bf16.msra.mxu0 %v3467
    %3635 = vmatprep.subr.bf16.mxu0 %v3473
    %3636 = vmatpush1.bf16.msra.mxu0 %v3472
    %3637 = vmatprep.subr.bf16.mxu0 %v3478
    %3638 = vmatpush1.bf16.msra.mxu0 %v3477
    %3639 = vmatprep.subr.bf16.mxu0 %v3483
    %3640 = vmatpush1.bf16.msra.mxu0 %v3482
    %3641 = vmatprep.subr.bf16.mxu0 %v3488
    %3642 = vmatpush1.bf16.msra.mxu0 %v3487
    %3643 = vmatprep.mubr.bf16.mxu0 %v3030
    %3644 = vmatmul.mubr.bf16.gmra.mrb[0].mxu0 %v3029
    %v3645 = vpop.f32.mrb[0].mxu0
    %v3646 = vadd.f32 %v3140, %v3645
    %v3647 = vpop.f32.mrb[0].mxu0
    %v3648 = vadd.f32 %v3144, %v3647
    %v3649 = vpop.f32.mrb[0].mxu0
    %v3650 = vpop.f32.mrb[0].mxu0
    %3651 = vdwg.mxu0
    %3652 = vmatprep.subr.bf16.mxu0 0
    %3653 = vmatpush1.bf16.msra.mxu0 %v3414
    %3654 = vmatprep.subr.bf16.mxu0 0
    %3655 = vmatpush1.bf16.msra.mxu0 %v3419
    %3656 = vmatprep.subr.bf16.mxu0 0
    %3657 = vmatpush1.bf16.msra.mxu0 %v3424
    %3658 = vmatprep.subr.bf16.mxu0 0
    %3659 = vmatpush1.bf16.msra.mxu0 %v3429
    %3660 = vmatprep.subr.bf16.mxu0 0
    %3661 = vmatpush1.bf16.msra.mxu0 %v3434
    %3662 = vmatprep.subr.bf16.mxu0 0
    %3663 = vmatpush1.bf16.msra.mxu0 %v3439
    %3664 = vmatprep.subr.bf16.mxu0 0
    %3665 = vmatpush1.bf16.msra.mxu0 %v3444
    %3666 = vmatprep.subr.bf16.mxu0 0
    %3667 = vmatpush1.bf16.msra.mxu0 %v3449
    %3668 = vmatprep.subr.bf16.mxu0 0
    %3669 = vmatpush1.bf16.msra.mxu0 %v3454
    %3670 = vmatprep.subr.bf16.mxu0 0
    %3671 = vmatpush1.bf16.msra.mxu0 %v3459
    %3672 = vmatprep.subr.bf16.mxu0 0
    %3673 = vmatpush1.bf16.msra.mxu0 %v3464
    %3674 = vmatprep.subr.bf16.mxu0 0
    %3675 = vmatpush1.bf16.msra.mxu0 %v3469
    %3676 = vmatprep.subr.bf16.mxu0 0
    %3677 = vmatpush1.bf16.msra.mxu0 %v3474
    %3678 = vmatprep.subr.bf16.mxu0 0
    %3679 = vmatpush1.bf16.msra.mxu0 %v3479
    %3680 = vmatprep.subr.bf16.mxu0 0
    %3681 = vmatpush1.bf16.msra.mxu0 %v3484
    %3682 = vmatprep.subr.bf16.mxu0 0
    %3683 = vmatpush1.bf16.msra.mxu0 %v3489
    %3684 = vmatprep.mubr.bf16.mxu0 %v3030
    %3685 = vmatmul.mubr.bf16.gmra.mrb[0].mxu0 %v3029
    %v3686 = vpop.f32.mrb[0].mxu0
    %v3687 = vadd.f32 %v3148, %v3686
    %v3688 = vpop.f32.mrb[0].mxu0
    %v3689 = vpop.f32.mrb[0].mxu0
    %v3690 = vpop.f32.mrb[0].mxu0
    %3691 = vdwg.mxu0
    %v3692 = vmax.f32 %v3605, 0.0
    %v3693 = vmax.f32 %v3607, 0.0
    %v3694 = vmax.f32 %v3646, 0.0
    %v3695 = vmax.f32 %v3648, 0.0
    %v3696 = vmax.f32 %v3687, 0.0
    %v3697 = vpack.c.bf16 %v3692, %v3692
    %v3698 = vpack.c.bf16 %v3693, %v3693
    %v3699 = vpack.c.bf16 %v3694, %v3694
    %v3700 = vpack.c.bf16 %v3695, %v3695
    %v3701 = vpack.c.bf16 %v3696, %v3696
    %v3702 = vld [vmem:[#allocation16] sm:$0xff]
    %v3703 = vld [vmem:[#allocation16 + $0x8] sm:$0xff]
    %v3704 = vld [vmem:[#allocation16 + $0x10] sm:$0xff]
    %v3705 = vld [vmem:[#allocation16 + $0x18] sm:$0xf]
    %v3706 = vld [vmem:[#allocation16 + $0x1c] sm:$0xff]
    %v3707 = vld [vmem:[#allocation16 + $0x24] sm:$0xff]
    %v3708 = vld [vmem:[#allocation16 + $0x2c] sm:$0xff]
    %v3709 = vld [vmem:[#allocation16 + $0x34] sm:$0xf]
    %v3710 = vld [vmem:[#allocation16 + $0x38] sm:$0xff]
    %v3711 = vld [vmem:[#allocation16 + $0x40] sm:$0xff]
    %v3712 = vld [vmem:[#allocation16 + $0x48] sm:$0xff]
    %v3713 = vld [vmem:[#allocation16 + $0x50] sm:$0xf]
    %v3714 = vld [vmem:[#allocation16 + $0x54] sm:$0xff]
    %v3715 = vld [vmem:[#allocation16 + $0x5c] sm:$0xff]
    %v3716 = vld [vmem:[#allocation16 + $0x64] sm:$0xff]
    %v3717 = vld [vmem:[#allocation16 + $0x6c] sm:$0xf]
    %v3718 = vld [vmem:[#allocation16 + $0x70] sm:$0xff]
    %v3719 = vld [vmem:[#allocation16 + $0x78] sm:$0xff]
    %v3720 = vld [vmem:[#allocation16 + $0x80] sm:$0xff]
    %v3721 = vld [vmem:[#allocation16 + $0x88] sm:$0xf]
    %v3722 = vld [vmem:[#allocation16 + $0x8c] sm:$0xff]
    %v3723 = vld [vmem:[#allocation16 + $0x94] sm:$0xff]
    %v3724 = vld [vmem:[#allocation16 + $0x9c] sm:$0xff]
    %v3725 = vld [vmem:[#allocation16 + $0xa4] sm:$0xf]
    %v3726 = vld [vmem:[#allocation16 + $0xa8] sm:$0xff]
    %v3727 = vld [vmem:[#allocation16 + $0xb0] sm:$0xff]
    %v3728 = vld [vmem:[#allocation16 + $0xb8] sm:$0xff]
    %v3729 = vld [vmem:[#allocation16 + $0xc0] sm:$0xf]
    %v3730 = vld [vmem:[#allocation16 + $0xc4] sm:$0xff]
    %v3731 = vld [vmem:[#allocation16 + $0xcc] sm:$0xff]
    %v3732 = vld [vmem:[#allocation16 + $0xd4] sm:$0xff]
    %v3733 = vld [vmem:[#allocation16 + $0xdc] sm:$0xf]
    %v3734 = vld [vmem:[#allocation16 + $0xe0] sm:$0xff]
    %v3735 = vld [vmem:[#allocation16 + $0xe8] sm:$0xff]
    %v3736 = vld [vmem:[#allocation16 + $0xf0] sm:$0xff]
    %v3737 = vld [vmem:[#allocation16 + $0xf8] sm:$0xf]
    %v3738 = vld [vmem:[#allocation16 + $0xfc] sm:$0xff]
    %v3739 = vld [vmem:[#allocation16 + $0x104] sm:$0xff]
    %v3740 = vld [vmem:[#allocation16 + $0x10c] sm:$0xff]
    %v3741 = vld [vmem:[#allocation16 + $0x114] sm:$0xf]
    %v3742 = vld [vmem:[#allocation16 + $0x118] sm:$0xff]
    %v3743 = vld [vmem:[#allocation16 + $0x120] sm:$0xff]
    %v3744 = vld [vmem:[#allocation16 + $0x128] sm:$0xff]
    %v3745 = vld [vmem:[#allocation16 + $0x130] sm:$0xf]
    %v3746 = vld [vmem:[#allocation16 + $0x134] sm:$0xff]
    %v3747 = vld [vmem:[#allocation16 + $0x13c] sm:$0xff]
    %v3748 = vld [vmem:[#allocation16 + $0x144] sm:$0xff]
    %v3749 = vld [vmem:[#allocation16 + $0x14c] sm:$0xf]
    %v3750 = vld [vmem:[#allocation16 + $0x150] sm:$0xff]
    %v3751 = vld [vmem:[#allocation16 + $0x158] sm:$0xff]
    %v3752 = vld [vmem:[#allocation16 + $0x160] sm:$0xff]
    %v3753 = vld [vmem:[#allocation16 + $0x168] sm:$0xf]
    %v3754 = vld [vmem:[#allocation16 + $0x16c] sm:$0xff]
    %v3755 = vld [vmem:[#allocation16 + $0x174] sm:$0xff]
    %v3756 = vld [vmem:[#allocation16 + $0x17c] sm:$0xff]
    %v3757 = vld [vmem:[#allocation16 + $0x184] sm:$0xf]
    %v3758 = vld [vmem:[#allocation16 + $0x188] sm:$0xff]
    %v3759 = vld [vmem:[#allocation16 + $0x190] sm:$0xff]
    %v3760 = vld [vmem:[#allocation16 + $0x198] sm:$0xff]
    %v3761 = vld [vmem:[#allocation16 + $0x1a0] sm:$0xf]
    %v3762 = vld [vmem:[#allocation16 + $0x1a4] sm:$0xff]
    %v3763 = vld [vmem:[#allocation16 + $0x1ac] sm:$0xff]
    %v3764 = vld [vmem:[#allocation16 + $0x1b4] sm:$0xff]
    %v3765 = vld [vmem:[#allocation16 + $0x1bc] sm:$0xf]
    %v3766 = vld [vmem:[#allocation16 + $0x1c0] sm:$0xff]
    %v3767 = vld [vmem:[#allocation16 + $0x1c8] sm:$0xff]
    %v3768 = vld [vmem:[#allocation16 + $0x1d0] sm:$0xff]
    %v3769 = vld [vmem:[#allocation16 + $0x1d8] sm:$0xf]
    %v3770 = vld [vmem:[#allocation16 + $0x1dc] sm:$0xff]
    %v3771 = vld [vmem:[#allocation16 + $0x1e4] sm:$0xff]
    %v3772 = vld [vmem:[#allocation16 + $0x1ec] sm:$0xff]
    %v3773 = vld [vmem:[#allocation16 + $0x1f4] sm:$0xf]
    %v3774 = vld [vmem:[#allocation16 + $0x1f8] sm:$0xff]
    %v3775 = vld [vmem:[#allocation16 + $0x200] sm:$0xff]
    %v3776 = vld [vmem:[#allocation16 + $0x208] sm:$0xff]
    %v3777 = vld [vmem:[#allocation16 + $0x210] sm:$0xf]
    %v3778 = vld [vmem:[#allocation16 + $0x214] sm:$0xff]
    %v3779 = vld [vmem:[#allocation16 + $0x21c] sm:$0xff]
    %v3780 = vld [vmem:[#allocation16 + $0x224] sm:$0xff]
    %v3781 = vld [vmem:[#allocation16 + $0x22c] sm:$0xf]
    %v3782 = vld [vmem:[#allocation16 + $0x230] sm:$0xff]
    %v3783 = vld [vmem:[#allocation16 + $0x238] sm:$0xff]
    %v3784 = vld [vmem:[#allocation16 + $0x240] sm:$0xff]
    %v3785 = vld [vmem:[#allocation16 + $0x248] sm:$0xf]
    %v3786 = vld [vmem:[#allocation16 + $0x24c] sm:$0xff]
    %v3787 = vld [vmem:[#allocation16 + $0x254] sm:$0xff]
    %v3788 = vld [vmem:[#allocation16 + $0x25c] sm:$0xff]
    %v3789 = vld [vmem:[#allocation16 + $0x264] sm:$0xf]
    %v3790 = vld [vmem:[#allocation16 + $0x268] sm:$0xff]
    %v3791 = vld [vmem:[#allocation16 + $0x270] sm:$0xff]
    %v3792 = vld [vmem:[#allocation16 + $0x278] sm:$0xff]
    %v3793 = vld [vmem:[#allocation16 + $0x280] sm:$0xf]
    %v3794 = vld [vmem:[#allocation16 + $0x284] sm:$0xff]
    %v3795 = vld [vmem:[#allocation16 + $0x28c] sm:$0xff]
    %v3796 = vld [vmem:[#allocation16 + $0x294] sm:$0xff]
    %v3797 = vld [vmem:[#allocation16 + $0x29c] sm:$0xf]
    %v3798 = vld [vmem:[#allocation16 + $0x2a0] sm:$0xff]
    %v3799 = vld [vmem:[#allocation16 + $0x2a8] sm:$0xff]
    %v3800 = vld [vmem:[#allocation16 + $0x2b0] sm:$0xff]
    %v3801 = vld [vmem:[#allocation16 + $0x2b8] sm:$0xf]
    %v3802 = vld [vmem:[#allocation16 + $0x2bc] sm:$0xff]
    %v3803 = vld [vmem:[#allocation16 + $0x2c4] sm:$0xff]
    %v3804 = vld [vmem:[#allocation16 + $0x2cc] sm:$0xff]
    %v3805 = vld [vmem:[#allocation16 + $0x2d4] sm:$0xf]
    %v3806 = vld [vmem:[#allocation16 + $0x2d8] sm:$0xff]
    %v3807 = vld [vmem:[#allocation16 + $0x2e0] sm:$0xff]
    %v3808 = vld [vmem:[#allocation16 + $0x2e8] sm:$0xff]
    %v3809 = vld [vmem:[#allocation16 + $0x2f0] sm:$0xf]
    %v3810 = vld [vmem:[#allocation16 + $0x2f4] sm:$0xff]
    %v3811 = vld [vmem:[#allocation16 + $0x2fc] sm:$0xff]
    %v3812 = vld [vmem:[#allocation16 + $0x304] sm:$0xff]
    %v3813 = vld [vmem:[#allocation16 + $0x30c] sm:$0xf]
    %v3814 = vld [vmem:[#allocation16 + $0x310] sm:$0xff]
    %v3815 = vld [vmem:[#allocation16 + $0x318] sm:$0xff]
    %v3816 = vld [vmem:[#allocation16 + $0x320] sm:$0xff]
    %v3817 = vld [vmem:[#allocation16 + $0x328] sm:$0xf]
    %v3818 = vld [vmem:[#allocation16 + $0x32c] sm:$0xff]
    %v3819 = vld [vmem:[#allocation16 + $0x334] sm:$0xff]
    %v3820 = vld [vmem:[#allocation16 + $0x33c] sm:$0xff]
    %v3821 = vld [vmem:[#allocation16 + $0x344] sm:$0xf]
    %v3822 = vld [vmem:[#allocation16 + $0x348] sm:$0xff]
    %v3823 = vld [vmem:[#allocation16 + $0x350] sm:$0xff]
    %v3824 = vld [vmem:[#allocation16 + $0x358] sm:$0xff]
    %v3825 = vld [vmem:[#allocation16 + $0x360] sm:$0xf]
    %v3826 = vld [vmem:[#allocation16 + $0x364] sm:$0xff]
    %v3827 = vld [vmem:[#allocation16 + $0x36c] sm:$0xff]
    %v3828 = vld [vmem:[#allocation16 + $0x374] sm:$0xff]
    %v3829 = vld [vmem:[#allocation16 + $0x37c] sm:$0xf]
    %v3830 = vld [vmem:[#allocation16 + $0x380] sm:$0xff]
    %v3831 = vld [vmem:[#allocation16 + $0x388] sm:$0xff]
    %v3832 = vld [vmem:[#allocation16 + $0x390] sm:$0xff]
    %v3833 = vld [vmem:[#allocation16 + $0x398] sm:$0xf]
    %v3834 = vld [vmem:[#allocation16 + $0x39c] sm:$0xff]
    %v3835 = vld [vmem:[#allocation16 + $0x3a4] sm:$0xff]
    %v3836 = vld [vmem:[#allocation16 + $0x3ac] sm:$0xff]
    %v3837 = vld [vmem:[#allocation16 + $0x3b4] sm:$0xf]
    %v3838 = vld [vmem:[#allocation16 + $0x3b8] sm:$0xff]
    %v3839 = vld [vmem:[#allocation16 + $0x3c0] sm:$0xff]
    %v3840 = vld [vmem:[#allocation16 + $0x3c8] sm:$0xff]
    %v3841 = vld [vmem:[#allocation16 + $0x3d0] sm:$0xf]
    %v3842 = vld [vmem:[#allocation16 + $0x3d4] sm:$0xff]
    %v3843 = vld [vmem:[#allocation16 + $0x3dc] sm:$0xff]
    %v3844 = vld [vmem:[#allocation16 + $0x3e4] sm:$0xff]
    %v3845 = vld [vmem:[#allocation16 + $0x3ec] sm:$0xf]
    %v3846 = vld [vmem:[#allocation16 + $0x3f0] sm:$0xff]
    %v3847 = vld [vmem:[#allocation16 + $0x3f8] sm:$0xff]
    %v3848 = vld [vmem:[#allocation16 + $0x400] sm:$0xff]
    %v3849 = vld [vmem:[#allocation16 + $0x408] sm:$0xf]
    %v3850 = vld [vmem:[#allocation16 + $0x40c] sm:$0xff]
    %v3851 = vld [vmem:[#allocation16 + $0x414] sm:$0xff]
    %v3852 = vld [vmem:[#allocation16 + $0x41c] sm:$0xff]
    %v3853 = vld [vmem:[#allocation16 + $0x424] sm:$0xf]
    %v3854 = vld [vmem:[#allocation16 + $0x428] sm:$0xff]
    %v3855 = vld [vmem:[#allocation16 + $0x430] sm:$0xff]
    %v3856 = vld [vmem:[#allocation16 + $0x438] sm:$0xff]
    %v3857 = vld [vmem:[#allocation16 + $0x440] sm:$0xf]
    %v3858 = vld [vmem:[#allocation16 + $0x444] sm:$0xff]
    %v3859 = vld [vmem:[#allocation16 + $0x44c] sm:$0xff]
    %v3860 = vld [vmem:[#allocation16 + $0x454] sm:$0xff]
    %v3861 = vld [vmem:[#allocation16 + $0x45c] sm:$0xf]
    %v3862 = vld [vmem:[#allocation16 + $0x460] sm:$0xff]
    %v3863 = vld [vmem:[#allocation16 + $0x468] sm:$0xff]
    %v3864 = vld [vmem:[#allocation16 + $0x470] sm:$0xff]
    %v3865 = vld [vmem:[#allocation16 + $0x478] sm:$0xf]
    %v3866 = vld [vmem:[#allocation16 + $0x47c] sm:$0xff]
    %v3867 = vld [vmem:[#allocation16 + $0x484] sm:$0xff]
    %v3868 = vld [vmem:[#allocation16 + $0x48c] sm:$0xff]
    %v3869 = vld [vmem:[#allocation16 + $0x494] sm:$0xf]
    %v3870 = vld [vmem:[#allocation16 + $0x498] sm:$0xff]
    %v3871 = vld [vmem:[#allocation16 + $0x4a0] sm:$0xff]
    %v3872 = vld [vmem:[#allocation16 + $0x4a8] sm:$0xff]
    %v3873 = vld [vmem:[#allocation16 + $0x4b0] sm:$0xf]
    %v3874 = vld [vmem:[#allocation16 + $0x4b4] sm:$0xff]
    %v3875 = vld [vmem:[#allocation16 + $0x4bc] sm:$0xff]
    %v3876 = vld [vmem:[#allocation16 + $0x4c4] sm:$0xff]
    %v3877 = vld [vmem:[#allocation16 + $0x4cc] sm:$0xf]
    %v3878 = vld [vmem:[#allocation16 + $0x4d0] sm:$0xff]
    %v3879 = vld [vmem:[#allocation16 + $0x4d8] sm:$0xff]
    %v3880 = vld [vmem:[#allocation16 + $0x4e0] sm:$0xff]
    %v3881 = vld [vmem:[#allocation16 + $0x4e8] sm:$0xf]
    %v3882 = vld [vmem:[#allocation16 + $0x4ec] sm:$0xff]
    %v3883 = vld [vmem:[#allocation16 + $0x4f4] sm:$0xff]
    %v3884 = vld [vmem:[#allocation16 + $0x4fc] sm:$0xff]
    %v3885 = vld [vmem:[#allocation16 + $0x504] sm:$0xf]
    %v3886 = vld [vmem:[#allocation16 + $0x508] sm:$0xff]
    %v3887 = vld [vmem:[#allocation16 + $0x510] sm:$0xff]
    %v3888 = vld [vmem:[#allocation16 + $0x518] sm:$0xff]
    %v3889 = vld [vmem:[#allocation16 + $0x520] sm:$0xf]
    %v3890 = vld [vmem:[#allocation16 + $0x524] sm:$0xff]
    %v3891 = vld [vmem:[#allocation16 + $0x52c] sm:$0xff]
    %v3892 = vld [vmem:[#allocation16 + $0x534] sm:$0xff]
    %v3893 = vld [vmem:[#allocation16 + $0x53c] sm:$0xf]
    %v3894 = vld [vmem:[#allocation16 + $0x540] sm:$0xff]
    %v3895 = vld [vmem:[#allocation16 + $0x548] sm:$0xff]
    %v3896 = vld [vmem:[#allocation16 + $0x550] sm:$0xff]
    %v3897 = vld [vmem:[#allocation16 + $0x558] sm:$0xf]
    %v3898 = vld [vmem:[#allocation16 + $0x55c] sm:$0xff]
    %v3899 = vld [vmem:[#allocation16 + $0x564] sm:$0xff]
    %v3900 = vld [vmem:[#allocation16 + $0x56c] sm:$0xff]
    %v3901 = vld [vmem:[#allocation16 + $0x574] sm:$0xf]
    %v3902 = vld [vmem:[#allocation16 + $0x578] sm:$0xff]
    %v3903 = vld [vmem:[#allocation16 + $0x580] sm:$0xff]
    %v3904 = vld [vmem:[#allocation16 + $0x588] sm:$0xff]
    %v3905 = vld [vmem:[#allocation16 + $0x590] sm:$0xf]
    %v3906 = vld [vmem:[#allocation16 + $0x594] sm:$0xff]
    %v3907 = vld [vmem:[#allocation16 + $0x59c] sm:$0xff]
    %v3908 = vld [vmem:[#allocation16 + $0x5a4] sm:$0xff]
    %v3909 = vld [vmem:[#allocation16 + $0x5ac] sm:$0xf]
    %v3910 = vld [vmem:[#allocation16 + $0x5b0] sm:$0xff]
    %v3911 = vld [vmem:[#allocation16 + $0x5b8] sm:$0xff]
    %v3912 = vld [vmem:[#allocation16 + $0x5c0] sm:$0xff]
    %v3913 = vld [vmem:[#allocation16 + $0x5c8] sm:$0xf]
    %v3914 = vld [vmem:[#allocation16 + $0x5cc] sm:$0xff]
    %v3915 = vld [vmem:[#allocation16 + $0x5d4] sm:$0xff]
    %v3916 = vld [vmem:[#allocation16 + $0x5dc] sm:$0xff]
    %v3917 = vld [vmem:[#allocation16 + $0x5e4] sm:$0xf]
    %v3918 = vld [vmem:[#allocation16 + $0x5e8] sm:$0xff]
    %v3919 = vld [vmem:[#allocation16 + $0x5f0] sm:$0xff]
    %v3920 = vld [vmem:[#allocation16 + $0x5f8] sm:$0xff]
    %v3921 = vld [vmem:[#allocation16 + $0x600] sm:$0xf]
    %v3922 = vld [vmem:[#allocation16 + $0x604] sm:$0xff]
    %v3923 = vld [vmem:[#allocation16 + $0x60c] sm:$0xff]
    %v3924 = vld [vmem:[#allocation16 + $0x614] sm:$0xff]
    %v3925 = vld [vmem:[#allocation16 + $0x61c] sm:$0xf]
    %v3926 = vld [vmem:[#allocation16 + $0x620] sm:$0xff]
    %v3927 = vld [vmem:[#allocation16 + $0x628] sm:$0xff]
    %v3928 = vld [vmem:[#allocation16 + $0x630] sm:$0xff]
    %v3929 = vld [vmem:[#allocation16 + $0x638] sm:$0xf]
    %v3930 = vld [vmem:[#allocation16 + $0x63c] sm:$0xff]
    %v3931 = vld [vmem:[#allocation16 + $0x644] sm:$0xff]
    %v3932 = vld [vmem:[#allocation16 + $0x64c] sm:$0xff]
    %v3933 = vld [vmem:[#allocation16 + $0x654] sm:$0xf]
    %v3934 = vld [vmem:[#allocation16 + $0x658] sm:$0xff]
    %v3935 = vld [vmem:[#allocation16 + $0x660] sm:$0xff]
    %v3936 = vld [vmem:[#allocation16 + $0x668] sm:$0xff]
    %v3937 = vld [vmem:[#allocation16 + $0x670] sm:$0xf]
    %v3938 = vld [vmem:[#allocation16 + $0x674] sm:$0xff]
    %v3939 = vld [vmem:[#allocation16 + $0x67c] sm:$0xff]
    %v3940 = vld [vmem:[#allocation16 + $0x684] sm:$0xff]
    %v3941 = vld [vmem:[#allocation16 + $0x68c] sm:$0xf]
    %v3942 = vld [vmem:[#allocation16 + $0x690] sm:$0xff]
    %v3943 = vld [vmem:[#allocation16 + $0x698] sm:$0xff]
    %v3944 = vld [vmem:[#allocation16 + $0x6a0] sm:$0xff]
    %v3945 = vld [vmem:[#allocation16 + $0x6a8] sm:$0xf]
    %v3946 = vld [vmem:[#allocation16 + $0x6ac] sm:$0xff]
    %v3947 = vld [vmem:[#allocation16 + $0x6b4] sm:$0xff]
    %v3948 = vld [vmem:[#allocation16 + $0x6bc] sm:$0xff]
    %v3949 = vld [vmem:[#allocation16 + $0x6c4] sm:$0xf]
    %v3950 = vld [vmem:[#allocation16 + $0x6c8] sm:$0xff]
    %v3951 = vld [vmem:[#allocation16 + $0x6d0] sm:$0xff]
    %v3952 = vld [vmem:[#allocation16 + $0x6d8] sm:$0xff]
    %v3953 = vld [vmem:[#allocation16 + $0x6e0] sm:$0xf]
    %v3954 = vld [vmem:[#allocation16 + $0x6e4] sm:$0xff]
    %v3955 = vld [vmem:[#allocation16 + $0x6ec] sm:$0xff]
    %v3956 = vld [vmem:[#allocation16 + $0x6f4] sm:$0xff]
    %v3957 = vld [vmem:[#allocation16 + $0x6fc] sm:$0xf]
    %v3958 = vld [vmem:[#allocation16 + $0x700] sm:$0xff]
    %v3959 = vld [vmem:[#allocation16 + $0x708] sm:$0xff]
    %v3960 = vld [vmem:[#allocation16 + $0x710] sm:$0xff]
    %v3961 = vld [vmem:[#allocation16 + $0x718] sm:$0xf]
    %v3962 = vld [vmem:[#allocation16 + $0x71c] sm:$0xff]
    %v3963 = vld [vmem:[#allocation16 + $0x724] sm:$0xff]
    %v3964 = vld [vmem:[#allocation16 + $0x72c] sm:$0xff]
    %v3965 = vld [vmem:[#allocation16 + $0x734] sm:$0xf]
    %v3966 = vld [vmem:[#allocation16 + $0x738] sm:$0xff]
    %v3967 = vld [vmem:[#allocation16 + $0x740] sm:$0xff]
    %v3968 = vld [vmem:[#allocation16 + $0x748] sm:$0xff]
    %v3969 = vld [vmem:[#allocation16 + $0x750] sm:$0xf]
    %v3970 = vld [vmem:[#allocation16 + $0x754] sm:$0xff]
    %v3971 = vld [vmem:[#allocation16 + $0x75c] sm:$0xff]
    %v3972 = vld [vmem:[#allocation16 + $0x764] sm:$0xff]
    %v3973 = vld [vmem:[#allocation16 + $0x76c] sm:$0xf]
    %v3974 = vld [vmem:[#allocation16 + $0x770] sm:$0xff]
    %v3975 = vld [vmem:[#allocation16 + $0x778] sm:$0xff]
    %v3976 = vld [vmem:[#allocation16 + $0x780] sm:$0xff]
    %v3977 = vld [vmem:[#allocation16 + $0x788] sm:$0xf]
    %v3978 = vld [vmem:[#allocation16 + $0x78c] sm:$0xff]
    %v3979 = vld [vmem:[#allocation16 + $0x794] sm:$0xff]
    %v3980 = vld [vmem:[#allocation16 + $0x79c] sm:$0xff]
    %v3981 = vld [vmem:[#allocation16 + $0x7a4] sm:$0xf]
    %v3982 = vld [vmem:[#allocation16 + $0x7a8] sm:$0xff]
    %v3983 = vld [vmem:[#allocation16 + $0x7b0] sm:$0xff]
    %v3984 = vld [vmem:[#allocation16 + $0x7b8] sm:$0xff]
    %v3985 = vld [vmem:[#allocation16 + $0x7c0] sm:$0xf]
    %v3986 = vld [vmem:[#allocation16 + $0x7c4] sm:$0xff]
    %v3987 = vld [vmem:[#allocation16 + $0x7cc] sm:$0xff]
    %v3988 = vld [vmem:[#allocation16 + $0x7d4] sm:$0xff]
    %v3989 = vld [vmem:[#allocation16 + $0x7dc] sm:$0xf]
    %v3990 = vld [vmem:[#allocation16 + $0x7e0] sm:$0xff]
    %v3991 = vld [vmem:[#allocation16 + $0x7e8] sm:$0xff]
    %v3992 = vld [vmem:[#allocation16 + $0x7f0] sm:$0xff]
    %v3993 = vld [vmem:[#allocation16 + $0x7f8] sm:$0xf]
    %v3994 = vld [vmem:[#allocation16 + $0x7fc] sm:$0xff]
    %v3995 = vld [vmem:[#allocation16 + $0x804] sm:$0xff]
    %v3996 = vld [vmem:[#allocation16 + $0x80c] sm:$0xff]
    %v3997 = vld [vmem:[#allocation16 + $0x814] sm:$0xf]
    %v3998 = vld [vmem:[#allocation16 + $0x818] sm:$0xff]
    %v3999 = vld [vmem:[#allocation16 + $0x820] sm:$0xff]
    %v4000 = vld [vmem:[#allocation16 + $0x828] sm:$0xff]
    %v4001 = vld [vmem:[#allocation16 + $0x830] sm:$0xf]
    %v4002 = vld [vmem:[#allocation16 + $0x834] sm:$0xff]
    %v4003 = vld [vmem:[#allocation16 + $0x83c] sm:$0xff]
    %v4004 = vld [vmem:[#allocation16 + $0x844] sm:$0xff]
    %v4005 = vld [vmem:[#allocation16 + $0x84c] sm:$0xf]
    %v4006 = vld [vmem:[#allocation16 + $0x850] sm:$0xff]
    %v4007 = vld [vmem:[#allocation16 + $0x858] sm:$0xff]
    %v4008 = vld [vmem:[#allocation16 + $0x860] sm:$0xff]
    %v4009 = vld [vmem:[#allocation16 + $0x868] sm:$0xf]
    %v4010 = vld [vmem:[#allocation16 + $0x86c] sm:$0xff]
    %v4011 = vld [vmem:[#allocation16 + $0x874] sm:$0xff]
    %v4012 = vld [vmem:[#allocation16 + $0x87c] sm:$0xff]
    %v4013 = vld [vmem:[#allocation16 + $0x884] sm:$0xf]
    %v4014 = vld [vmem:[#allocation16 + $0x888] sm:$0xff]
    %v4015 = vld [vmem:[#allocation16 + $0x890] sm:$0xff]
    %v4016 = vld [vmem:[#allocation16 + $0x898] sm:$0xff]
    %v4017 = vld [vmem:[#allocation16 + $0x8a0] sm:$0xf]
    %v4018 = vld [vmem:[#allocation16 + $0x8a4] sm:$0xff]
    %v4019 = vld [vmem:[#allocation16 + $0x8ac] sm:$0xff]
    %v4020 = vld [vmem:[#allocation16 + $0x8b4] sm:$0xff]
    %v4021 = vld [vmem:[#allocation16 + $0x8bc] sm:$0xf]
    %v4022 = vld [vmem:[#allocation17] sm:$0xff]
    %v4024 = vlaneseq
    %v4025 = vshrl.u32 %v4024, 7
    %v4026 = vsub.s32 0, %v4025
    %v4027 = vrot.slane %v4022, %v4026
    %v4028 = vlaneseq
    %v4029 = vshrl.u32 %v4028, 7
    %v4030 = vsub.s32 1, %v4029
    %v4031 = vrot.slane %v4022, %v4030
    %v4032 = vlaneseq
    %v4033 = vshrl.u32 %v4032, 7
    %v4034 = vsub.s32 2, %v4033
    %v4035 = vrot.slane %v4022, %v4034
    %v4036 = vlaneseq
    %v4037 = vshrl.u32 %v4036, 7
    %v4038 = vsub.s32 3, %v4037
    %v4039 = vrot.slane %v4022, %v4038
    %v4040 = vlaneseq
    %v4041 = vshrl.u32 %v4040, 7
    %v4042 = vsub.s32 4, %v4041
    %v4043 = vrot.slane %v4022, %v4042
    %v4044 = vlaneseq
    %v4045 = vshrl.u32 %v4044, 7
    %v4046 = vsub.s32 5, %v4045
    %v4047 = vrot.slane %v4022, %v4046
    %v4048 = vlaneseq
    %v4049 = vshrl.u32 %v4048, 7
    %v4050 = vsub.s32 6, %v4049
    %v4051 = vrot.slane %v4022, %v4050
    %v4379 = vunpack.c.l.b16 %v3702
    %v4380 = vunpack.c.h.b16 %v3702
    %v4381 = vunpack.c.l.b16 %v3703
    %v4382 = vunpack.c.h.b16 %v3703
    %v4383 = vunpack.c.l.b16 %v3704
    %v4384 = vunpack.c.h.b16 %v3704
    %v4385 = vunpack.c.l.b16 %v3705
    %v4386 = vunpack.c.l.b16 %v3706
    %v4387 = vunpack.c.h.b16 %v3706
    %v4388 = vunpack.c.l.b16 %v3707
    %v4389 = vunpack.c.h.b16 %v3707
    %v4390 = vunpack.c.l.b16 %v3708
    %v4391 = vunpack.c.h.b16 %v3708
    %v4392 = vunpack.c.l.b16 %v3709
    %v4393 = vunpack.c.l.b16 %v3710
    %v4394 = vunpack.c.h.b16 %v3710
    %v4395 = vunpack.c.l.b16 %v3711
    %v4396 = vunpack.c.h.b16 %v3711
    %v4397 = vunpack.c.l.b16 %v3712
    %v4398 = vunpack.c.h.b16 %v3712
    %v4399 = vunpack.c.l.b16 %v3713
    %v4400 = vunpack.c.l.b16 %v3714
    %v4401 = vunpack.c.h.b16 %v3714
    %v4402 = vunpack.c.l.b16 %v3715
    %v4403 = vunpack.c.h.b16 %v3715
    %v4404 = vunpack.c.l.b16 %v3716
    %v4405 = vunpack.c.h.b16 %v3716
    %v4406 = vunpack.c.l.b16 %v3717
    %v4407 = vunpack.c.l.b16 %v3718
    %v4408 = vunpack.c.h.b16 %v3718
    %v4409 = vunpack.c.l.b16 %v3719
    %v4410 = vunpack.c.h.b16 %v3719
    %v4411 = vunpack.c.l.b16 %v3720
    %v4412 = vunpack.c.h.b16 %v3720
    %v4413 = vunpack.c.l.b16 %v3721
    %v4414 = vunpack.c.l.b16 %v3722
    %v4415 = vunpack.c.h.b16 %v3722
    %v4416 = vunpack.c.l.b16 %v3723
    %v4417 = vunpack.c.h.b16 %v3723
    %v4418 = vunpack.c.l.b16 %v3724
    %v4419 = vunpack.c.h.b16 %v3724
    %v4420 = vunpack.c.l.b16 %v3725
    %v4421 = vunpack.c.l.b16 %v3726
    %v4422 = vunpack.c.h.b16 %v3726
    %v4423 = vunpack.c.l.b16 %v3727
    %v4424 = vunpack.c.h.b16 %v3727
    %v4425 = vunpack.c.l.b16 %v3728
    %v4426 = vunpack.c.h.b16 %v3728
    %v4427 = vunpack.c.l.b16 %v3729
    %v4428 = vunpack.c.l.b16 %v3730
    %v4429 = vunpack.c.h.b16 %v3730
    %v4430 = vunpack.c.l.b16 %v3731
    %v4431 = vunpack.c.h.b16 %v3731
    %v4432 = vunpack.c.l.b16 %v3732
    %v4433 = vunpack.c.h.b16 %v3732
    %v4434 = vunpack.c.l.b16 %v3733
    %v4435 = vunpack.c.l.b16 %v3734
    %v4436 = vunpack.c.h.b16 %v3734
    %v4437 = vunpack.c.l.b16 %v3735
    %v4438 = vunpack.c.h.b16 %v3735
    %v4439 = vunpack.c.l.b16 %v3736
    %v4440 = vunpack.c.h.b16 %v3736
    %v4441 = vunpack.c.l.b16 %v3737
    %v4442 = vunpack.c.l.b16 %v3738
    %v4443 = vunpack.c.h.b16 %v3738
    %v4444 = vunpack.c.l.b16 %v3739
    %v4445 = vunpack.c.h.b16 %v3739
    %v4446 = vunpack.c.l.b16 %v3740
    %v4447 = vunpack.c.h.b16 %v3740
    %v4448 = vunpack.c.l.b16 %v3741
    %v4449 = vunpack.c.l.b16 %v3742
    %v4450 = vunpack.c.h.b16 %v3742
    %v4451 = vunpack.c.l.b16 %v3743
    %v4452 = vunpack.c.h.b16 %v3743
    %v4453 = vunpack.c.l.b16 %v3744
    %v4454 = vunpack.c.h.b16 %v3744
    %v4455 = vunpack.c.l.b16 %v3745
    %v4456 = vunpack.c.l.b16 %v3746
    %v4457 = vunpack.c.h.b16 %v3746
    %v4458 = vunpack.c.l.b16 %v3747
    %v4459 = vunpack.c.h.b16 %v3747
    %v4460 = vunpack.c.l.b16 %v3748
    %v4461 = vunpack.c.h.b16 %v3748
    %v4462 = vunpack.c.l.b16 %v3749
    %v4463 = vunpack.c.l.b16 %v3750
    %v4464 = vunpack.c.h.b16 %v3750
    %v4465 = vunpack.c.l.b16 %v3751
    %v4466 = vunpack.c.h.b16 %v3751
    %v4467 = vunpack.c.l.b16 %v3752
    %v4468 = vunpack.c.h.b16 %v3752
    %v4469 = vunpack.c.l.b16 %v3753
    %v4470 = vunpack.c.l.b16 %v3754
    %v4471 = vunpack.c.h.b16 %v3754
    %v4472 = vunpack.c.l.b16 %v3755
    %v4473 = vunpack.c.h.b16 %v3755
    %v4474 = vunpack.c.l.b16 %v3756
    %v4475 = vunpack.c.h.b16 %v3756
    %v4476 = vunpack.c.l.b16 %v3757
    %v4477 = vunpack.c.l.b16 %v3758
    %v4478 = vunpack.c.h.b16 %v3758
    %v4479 = vunpack.c.l.b16 %v3759
    %v4480 = vunpack.c.h.b16 %v3759
    %v4481 = vunpack.c.l.b16 %v3760
    %v4482 = vunpack.c.h.b16 %v3760
    %v4483 = vunpack.c.l.b16 %v3761
    %v4484 = vunpack.c.l.b16 %v3762
    %v4485 = vunpack.c.h.b16 %v3762
    %v4486 = vunpack.c.l.b16 %v3763
    %v4487 = vunpack.c.h.b16 %v3763
    %v4488 = vunpack.c.l.b16 %v3764
    %v4489 = vunpack.c.h.b16 %v3764
    %v4490 = vunpack.c.l.b16 %v3765
    %v4491 = vunpack.c.l.b16 %v3766
    %v4492 = vunpack.c.h.b16 %v3766
    %v4493 = vunpack.c.l.b16 %v3767
    %v4494 = vunpack.c.h.b16 %v3767
    %v4495 = vunpack.c.l.b16 %v3768
    %v4496 = vunpack.c.h.b16 %v3768
    %v4497 = vunpack.c.l.b16 %v3769
    %v4498 = vunpack.c.l.b16 %v3770
    %v4499 = vunpack.c.h.b16 %v3770
    %v4500 = vunpack.c.l.b16 %v3771
    %v4501 = vunpack.c.h.b16 %v3771
    %v4502 = vunpack.c.l.b16 %v3772
    %v4503 = vunpack.c.h.b16 %v3772
    %v4504 = vunpack.c.l.b16 %v3773
    %v4505 = vunpack.c.l.b16 %v3774
    %v4506 = vunpack.c.h.b16 %v3774
    %v4507 = vunpack.c.l.b16 %v3775
    %v4508 = vunpack.c.h.b16 %v3775
    %v4509 = vunpack.c.l.b16 %v3776
    %v4510 = vunpack.c.h.b16 %v3776
    %v4511 = vunpack.c.l.b16 %v3777
    %v4512 = vunpack.c.l.b16 %v3778
    %v4513 = vunpack.c.h.b16 %v3778
    %v4514 = vunpack.c.l.b16 %v3779
    %v4515 = vunpack.c.h.b16 %v3779
    %v4516 = vunpack.c.l.b16 %v3780
    %v4517 = vunpack.c.h.b16 %v3780
    %v4518 = vunpack.c.l.b16 %v3781
    %v4519 = vunpack.c.l.b16 %v3782
    %v4520 = vunpack.c.h.b16 %v3782
    %v4521 = vunpack.c.l.b16 %v3783
    %v4522 = vunpack.c.h.b16 %v3783
    %v4523 = vunpack.c.l.b16 %v3784
    %v4524 = vunpack.c.h.b16 %v3784
    %v4525 = vunpack.c.l.b16 %v3785
    %v4526 = vunpack.c.l.b16 %v3786
    %v4527 = vunpack.c.h.b16 %v3786
    %v4528 = vunpack.c.l.b16 %v3787
    %v4529 = vunpack.c.h.b16 %v3787
    %v4530 = vunpack.c.l.b16 %v3788
    %v4531 = vunpack.c.h.b16 %v3788
    %v4532 = vunpack.c.l.b16 %v3789
    %v4533 = vunpack.c.l.b16 %v3790
    %v4534 = vunpack.c.h.b16 %v3790
    %v4535 = vunpack.c.l.b16 %v3791
    %v4536 = vunpack.c.h.b16 %v3791
    %v4537 = vunpack.c.l.b16 %v3792
    %v4538 = vunpack.c.h.b16 %v3792
    %v4539 = vunpack.c.l.b16 %v3793
    %v4540 = vunpack.c.l.b16 %v3794
    %v4541 = vunpack.c.h.b16 %v3794
    %v4542 = vunpack.c.l.b16 %v3795
    %v4543 = vunpack.c.h.b16 %v3795
    %v4544 = vunpack.c.l.b16 %v3796
    %v4545 = vunpack.c.h.b16 %v3796
    %v4546 = vunpack.c.l.b16 %v3797
    %v4547 = vunpack.c.l.b16 %v3798
    %v4548 = vunpack.c.h.b16 %v3798
    %v4549 = vunpack.c.l.b16 %v3799
    %v4550 = vunpack.c.h.b16 %v3799
    %v4551 = vunpack.c.l.b16 %v3800
    %v4552 = vunpack.c.h.b16 %v3800
    %v4553 = vunpack.c.l.b16 %v3801
    %v4554 = vunpack.c.l.b16 %v3802
    %v4555 = vunpack.c.h.b16 %v3802
    %v4556 = vunpack.c.l.b16 %v3803
    %v4557 = vunpack.c.h.b16 %v3803
    %v4558 = vunpack.c.l.b16 %v3804
    %v4559 = vunpack.c.h.b16 %v3804
    %v4560 = vunpack.c.l.b16 %v3805
    %v4561 = vunpack.c.l.b16 %v3806
    %v4562 = vunpack.c.h.b16 %v3806
    %v4563 = vunpack.c.l.b16 %v3807
    %v4564 = vunpack.c.h.b16 %v3807
    %v4565 = vunpack.c.l.b16 %v3808
    %v4566 = vunpack.c.h.b16 %v3808
    %v4567 = vunpack.c.l.b16 %v3809
    %v4568 = vunpack.c.l.b16 %v3810
    %v4569 = vunpack.c.h.b16 %v3810
    %v4570 = vunpack.c.l.b16 %v3811
    %v4571 = vunpack.c.h.b16 %v3811
    %v4572 = vunpack.c.l.b16 %v3812
    %v4573 = vunpack.c.h.b16 %v3812
    %v4574 = vunpack.c.l.b16 %v3813
    %v4575 = vunpack.c.l.b16 %v3814
    %v4576 = vunpack.c.h.b16 %v3814
    %v4577 = vunpack.c.l.b16 %v3815
    %v4578 = vunpack.c.h.b16 %v3815
    %v4579 = vunpack.c.l.b16 %v3816
    %v4580 = vunpack.c.h.b16 %v3816
    %v4581 = vunpack.c.l.b16 %v3817
    %v4582 = vunpack.c.l.b16 %v3818
    %v4583 = vunpack.c.h.b16 %v3818
    %v4584 = vunpack.c.l.b16 %v3819
    %v4585 = vunpack.c.h.b16 %v3819
    %v4586 = vunpack.c.l.b16 %v3820
    %v4587 = vunpack.c.h.b16 %v3820
    %v4588 = vunpack.c.l.b16 %v3821
    %v4589 = vunpack.c.l.b16 %v3822
    %v4590 = vunpack.c.h.b16 %v3822
    %v4591 = vunpack.c.l.b16 %v3823
    %v4592 = vunpack.c.h.b16 %v3823
    %v4593 = vunpack.c.l.b16 %v3824
    %v4594 = vunpack.c.h.b16 %v3824
    %v4595 = vunpack.c.l.b16 %v3825
    %v4596 = vunpack.c.l.b16 %v3826
    %v4597 = vunpack.c.h.b16 %v3826
    %v4598 = vunpack.c.l.b16 %v3827
    %v4599 = vunpack.c.h.b16 %v3827
    %v4600 = vunpack.c.l.b16 %v3828
    %v4601 = vunpack.c.h.b16 %v3828
    %v4602 = vunpack.c.l.b16 %v3829
    %v4603 = vunpack.c.l.b16 %v3830
    %v4604 = vunpack.c.h.b16 %v3830
    %v4605 = vunpack.c.l.b16 %v3831
    %v4606 = vunpack.c.h.b16 %v3831
    %v4607 = vunpack.c.l.b16 %v3832
    %v4608 = vunpack.c.h.b16 %v3832
    %v4609 = vunpack.c.l.b16 %v3833
    %v4610 = vunpack.c.l.b16 %v3834
    %v4611 = vunpack.c.h.b16 %v3834
    %v4612 = vunpack.c.l.b16 %v3835
    %v4613 = vunpack.c.h.b16 %v3835
    %v4614 = vunpack.c.l.b16 %v3836
    %v4615 = vunpack.c.h.b16 %v3836
    %v4616 = vunpack.c.l.b16 %v3837
    %v4617 = vunpack.c.l.b16 %v3838
    %v4618 = vunpack.c.h.b16 %v3838
    %v4619 = vunpack.c.l.b16 %v3839
    %v4620 = vunpack.c.h.b16 %v3839
    %v4621 = vunpack.c.l.b16 %v3840
    %v4622 = vunpack.c.h.b16 %v3840
    %v4623 = vunpack.c.l.b16 %v3841
    %v4624 = vunpack.c.l.b16 %v3842
    %v4625 = vunpack.c.h.b16 %v3842
    %v4626 = vunpack.c.l.b16 %v3843
    %v4627 = vunpack.c.h.b16 %v3843
    %v4628 = vunpack.c.l.b16 %v3844
    %v4629 = vunpack.c.h.b16 %v3844
    %v4630 = vunpack.c.l.b16 %v3845
    %v4631 = vunpack.c.l.b16 %v3846
    %v4632 = vunpack.c.h.b16 %v3846
    %v4633 = vunpack.c.l.b16 %v3847
    %v4634 = vunpack.c.h.b16 %v3847
    %v4635 = vunpack.c.l.b16 %v3848
    %v4636 = vunpack.c.h.b16 %v3848
    %v4637 = vunpack.c.l.b16 %v3849
    %v4638 = vunpack.c.l.b16 %v3850
    %v4639 = vunpack.c.h.b16 %v3850
    %v4640 = vunpack.c.l.b16 %v3851
    %v4641 = vunpack.c.h.b16 %v3851
    %v4642 = vunpack.c.l.b16 %v3852
    %v4643 = vunpack.c.h.b16 %v3852
    %v4644 = vunpack.c.l.b16 %v3853
    %v4645 = vunpack.c.l.b16 %v3854
    %v4646 = vunpack.c.h.b16 %v3854
    %v4647 = vunpack.c.l.b16 %v3855
    %v4648 = vunpack.c.h.b16 %v3855
    %v4649 = vunpack.c.l.b16 %v3856
    %v4650 = vunpack.c.h.b16 %v3856
    %v4651 = vunpack.c.l.b16 %v3857
    %v4652 = vunpack.c.l.b16 %v3858
    %v4653 = vunpack.c.h.b16 %v3858
    %v4654 = vunpack.c.l.b16 %v3859
    %v4655 = vunpack.c.h.b16 %v3859
    %v4656 = vunpack.c.l.b16 %v3860
    %v4657 = vunpack.c.h.b16 %v3860
    %v4658 = vunpack.c.l.b16 %v3861
    %v4659 = vunpack.c.l.b16 %v3862
    %v4660 = vunpack.c.h.b16 %v3862
    %v4661 = vunpack.c.l.b16 %v3863
    %v4662 = vunpack.c.h.b16 %v3863
    %v4663 = vunpack.c.l.b16 %v3864
    %v4664 = vunpack.c.h.b16 %v3864
    %v4665 = vunpack.c.l.b16 %v3865
    %v4666 = vunpack.c.l.b16 %v3866
    %v4667 = vunpack.c.h.b16 %v3866
    %v4668 = vunpack.c.l.b16 %v3867
    %v4669 = vunpack.c.h.b16 %v3867
    %v4670 = vunpack.c.l.b16 %v3868
    %v4671 = vunpack.c.h.b16 %v3868
    %v4672 = vunpack.c.l.b16 %v3869
    %v4673 = vunpack.c.l.b16 %v3870
    %v4674 = vunpack.c.h.b16 %v3870
    %v4675 = vunpack.c.l.b16 %v3871
    %v4676 = vunpack.c.h.b16 %v3871
    %v4677 = vunpack.c.l.b16 %v3872
    %v4678 = vunpack.c.h.b16 %v3872
    %v4679 = vunpack.c.l.b16 %v3873
    %v4680 = vunpack.c.l.b16 %v3874
    %v4681 = vunpack.c.h.b16 %v3874
    %v4682 = vunpack.c.l.b16 %v3875
    %v4683 = vunpack.c.h.b16 %v3875
    %v4684 = vunpack.c.l.b16 %v3876
    %v4685 = vunpack.c.h.b16 %v3876
    %v4686 = vunpack.c.l.b16 %v3877
    %v4687 = vunpack.c.l.b16 %v3878
    %v4688 = vunpack.c.h.b16 %v3878
    %v4689 = vunpack.c.l.b16 %v3879
    %v4690 = vunpack.c.h.b16 %v3879
    %v4691 = vunpack.c.l.b16 %v3880
    %v4692 = vunpack.c.h.b16 %v3880
    %v4693 = vunpack.c.l.b16 %v3881
    %v4694 = vunpack.c.l.b16 %v3882
    %v4695 = vunpack.c.h.b16 %v3882
    %v4696 = vunpack.c.l.b16 %v3883
    %v4697 = vunpack.c.h.b16 %v3883
    %v4698 = vunpack.c.l.b16 %v3884
    %v4699 = vunpack.c.h.b16 %v3884
    %v4700 = vunpack.c.l.b16 %v3885
    %v4701 = vunpack.c.l.b16 %v3886
    %v4702 = vunpack.c.h.b16 %v3886
    %v4703 = vunpack.c.l.b16 %v3887
    %v4704 = vunpack.c.h.b16 %v3887
    %v4705 = vunpack.c.l.b16 %v3888
    %v4706 = vunpack.c.h.b16 %v3888
    %v4707 = vunpack.c.l.b16 %v3889
    %v4708 = vunpack.c.l.b16 %v3890
    %v4709 = vunpack.c.h.b16 %v3890
    %v4710 = vunpack.c.l.b16 %v3891
    %v4711 = vunpack.c.h.b16 %v3891
    %v4712 = vunpack.c.l.b16 %v3892
    %v4713 = vunpack.c.h.b16 %v3892
    %v4714 = vunpack.c.l.b16 %v3893
    %v4715 = vunpack.c.l.b16 %v3894
    %v4716 = vunpack.c.h.b16 %v3894
    %v4717 = vunpack.c.l.b16 %v3895
    %v4718 = vunpack.c.h.b16 %v3895
    %v4719 = vunpack.c.l.b16 %v3896
    %v4720 = vunpack.c.h.b16 %v3896
    %v4721 = vunpack.c.l.b16 %v3897
    %v4722 = vunpack.c.l.b16 %v3898
    %v4723 = vunpack.c.h.b16 %v3898
    %v4724 = vunpack.c.l.b16 %v3899
    %v4725 = vunpack.c.h.b16 %v3899
    %v4726 = vunpack.c.l.b16 %v3900
    %v4727 = vunpack.c.h.b16 %v3900
    %v4728 = vunpack.c.l.b16 %v3901
    %v4729 = vunpack.c.l.b16 %v3902
    %v4730 = vunpack.c.h.b16 %v3902
    %v4731 = vunpack.c.l.b16 %v3903
    %v4732 = vunpack.c.h.b16 %v3903
    %v4733 = vunpack.c.l.b16 %v3904
    %v4734 = vunpack.c.h.b16 %v3904
    %v4735 = vunpack.c.l.b16 %v3905
    %v4736 = vunpack.c.l.b16 %v3906
    %v4737 = vunpack.c.h.b16 %v3906
    %v4738 = vunpack.c.l.b16 %v3907
    %v4739 = vunpack.c.h.b16 %v3907
    %v4740 = vunpack.c.l.b16 %v3908
    %v4741 = vunpack.c.h.b16 %v3908
    %v4742 = vunpack.c.l.b16 %v3909
    %v4743 = vunpack.c.l.b16 %v3910
    %v4744 = vunpack.c.h.b16 %v3910
    %v4745 = vunpack.c.l.b16 %v3911
    %v4746 = vunpack.c.h.b16 %v3911
    %v4747 = vunpack.c.l.b16 %v3912
    %v4748 = vunpack.c.h.b16 %v3912
    %v4749 = vunpack.c.l.b16 %v3913
    %v4750 = vunpack.c.l.b16 %v3914
    %v4751 = vunpack.c.h.b16 %v3914
    %v4752 = vunpack.c.l.b16 %v3915
    %v4753 = vunpack.c.h.b16 %v3915
    %v4754 = vunpack.c.l.b16 %v3916
    %v4755 = vunpack.c.h.b16 %v3916
    %v4756 = vunpack.c.l.b16 %v3917
    %v4757 = vunpack.c.l.b16 %v3918
    %v4758 = vunpack.c.h.b16 %v3918
    %v4759 = vunpack.c.l.b16 %v3919
    %v4760 = vunpack.c.h.b16 %v3919
    %v4761 = vunpack.c.l.b16 %v3920
    %v4762 = vunpack.c.h.b16 %v3920
    %v4763 = vunpack.c.l.b16 %v3921
    %v4764 = vunpack.c.l.b16 %v3922
    %v4765 = vunpack.c.h.b16 %v3922
    %v4766 = vunpack.c.l.b16 %v3923
    %v4767 = vunpack.c.h.b16 %v3923
    %v4768 = vunpack.c.l.b16 %v3924
    %v4769 = vunpack.c.h.b16 %v3924
    %v4770 = vunpack.c.l.b16 %v3925
    %v4771 = vunpack.c.l.b16 %v3926
    %v4772 = vunpack.c.h.b16 %v3926
    %v4773 = vunpack.c.l.b16 %v3927
    %v4774 = vunpack.c.h.b16 %v3927
    %v4775 = vunpack.c.l.b16 %v3928
    %v4776 = vunpack.c.h.b16 %v3928
    %v4777 = vunpack.c.l.b16 %v3929
    %v4778 = vunpack.c.l.b16 %v3930
    %v4779 = vunpack.c.h.b16 %v3930
    %v4780 = vunpack.c.l.b16 %v3931
    %v4781 = vunpack.c.h.b16 %v3931
    %v4782 = vunpack.c.l.b16 %v3932
    %v4783 = vunpack.c.h.b16 %v3932
    %v4784 = vunpack.c.l.b16 %v3933
    %v4785 = vunpack.c.l.b16 %v3934
    %v4786 = vunpack.c.h.b16 %v3934
    %v4787 = vunpack.c.l.b16 %v3935
    %v4788 = vunpack.c.h.b16 %v3935
    %v4789 = vunpack.c.l.b16 %v3936
    %v4790 = vunpack.c.h.b16 %v3936
    %v4791 = vunpack.c.l.b16 %v3937
    %v4792 = vunpack.c.l.b16 %v3938
    %v4793 = vunpack.c.h.b16 %v3938
    %v4794 = vunpack.c.l.b16 %v3939
    %v4795 = vunpack.c.h.b16 %v3939
    %v4796 = vunpack.c.l.b16 %v3940
    %v4797 = vunpack.c.h.b16 %v3940
    %v4798 = vunpack.c.l.b16 %v3941
    %v4799 = vunpack.c.l.b16 %v3942
    %v4800 = vunpack.c.h.b16 %v3942
    %v4801 = vunpack.c.l.b16 %v3943
    %v4802 = vunpack.c.h.b16 %v3943
    %v4803 = vunpack.c.l.b16 %v3944
    %v4804 = vunpack.c.h.b16 %v3944
    %v4805 = vunpack.c.l.b16 %v3945
    %v4806 = vunpack.c.l.b16 %v3946
    %v4807 = vunpack.c.h.b16 %v3946
    %v4808 = vunpack.c.l.b16 %v3947
    %v4809 = vunpack.c.h.b16 %v3947
    %v4810 = vunpack.c.l.b16 %v3948
    %v4811 = vunpack.c.h.b16 %v3948
    %v4812 = vunpack.c.l.b16 %v3949
    %v4813 = vunpack.c.l.b16 %v3950
    %v4814 = vunpack.c.h.b16 %v3950
    %v4815 = vunpack.c.l.b16 %v3951
    %v4816 = vunpack.c.h.b16 %v3951
    %v4817 = vunpack.c.l.b16 %v3952
    %v4818 = vunpack.c.h.b16 %v3952
    %v4819 = vunpack.c.l.b16 %v3953
    %v4820 = vunpack.c.l.b16 %v3954
    %v4821 = vunpack.c.h.b16 %v3954
    %v4822 = vunpack.c.l.b16 %v3955
    %v4823 = vunpack.c.h.b16 %v3955
    %v4824 = vunpack.c.l.b16 %v3956
    %v4825 = vunpack.c.h.b16 %v3956
    %v4826 = vunpack.c.l.b16 %v3957
    %v4827 = vunpack.c.l.b16 %v3958
    %v4828 = vunpack.c.h.b16 %v3958
    %v4829 = vunpack.c.l.b16 %v3959
    %v4830 = vunpack.c.h.b16 %v3959
    %v4831 = vunpack.c.l.b16 %v3960
    %v4832 = vunpack.c.h.b16 %v3960
    %v4833 = vunpack.c.l.b16 %v3961
    %v4834 = vunpack.c.l.b16 %v3962
    %v4835 = vunpack.c.h.b16 %v3962
    %v4836 = vunpack.c.l.b16 %v3963
    %v4837 = vunpack.c.h.b16 %v3963
    %v4838 = vunpack.c.l.b16 %v3964
    %v4839 = vunpack.c.h.b16 %v3964
    %v4840 = vunpack.c.l.b16 %v3965
    %v4841 = vunpack.c.l.b16 %v3966
    %v4842 = vunpack.c.h.b16 %v3966
    %v4843 = vunpack.c.l.b16 %v3967
    %v4844 = vunpack.c.h.b16 %v3967
    %v4845 = vunpack.c.l.b16 %v3968
    %v4846 = vunpack.c.h.b16 %v3968
    %v4847 = vunpack.c.l.b16 %v3969
    %v4848 = vunpack.c.l.b16 %v3970
    %v4849 = vunpack.c.h.b16 %v3970
    %v4850 = vunpack.c.l.b16 %v3971
    %v4851 = vunpack.c.h.b16 %v3971
    %v4852 = vunpack.c.l.b16 %v3972
    %v4853 = vunpack.c.h.b16 %v3972
    %v4854 = vunpack.c.l.b16 %v3973
    %v4855 = vunpack.c.l.b16 %v3974
    %v4856 = vunpack.c.h.b16 %v3974
    %v4857 = vunpack.c.l.b16 %v3975
    %v4858 = vunpack.c.h.b16 %v3975
    %v4859 = vunpack.c.l.b16 %v3976
    %v4860 = vunpack.c.h.b16 %v3976
    %v4861 = vunpack.c.l.b16 %v3977
    %v4862 = vunpack.c.l.b16 %v3978
    %v4863 = vunpack.c.h.b16 %v3978
    %v4864 = vunpack.c.l.b16 %v3979
    %v4865 = vunpack.c.h.b16 %v3979
    %v4866 = vunpack.c.l.b16 %v3980
    %v4867 = vunpack.c.h.b16 %v3980
    %v4868 = vunpack.c.l.b16 %v3981
    %v4869 = vunpack.c.l.b16 %v3982
    %v4870 = vunpack.c.h.b16 %v3982
    %v4871 = vunpack.c.l.b16 %v3983
    %v4872 = vunpack.c.h.b16 %v3983
    %v4873 = vunpack.c.l.b16 %v3984
    %v4874 = vunpack.c.h.b16 %v3984
    %v4875 = vunpack.c.l.b16 %v3985
    %v4876 = vunpack.c.l.b16 %v3986
    %v4877 = vunpack.c.h.b16 %v3986
    %v4878 = vunpack.c.l.b16 %v3987
    %v4879 = vunpack.c.h.b16 %v3987
    %v4880 = vunpack.c.l.b16 %v3988
    %v4881 = vunpack.c.h.b16 %v3988
    %v4882 = vunpack.c.l.b16 %v3989
    %v4883 = vunpack.c.l.b16 %v3990
    %v4884 = vunpack.c.h.b16 %v3990
    %v4885 = vunpack.c.l.b16 %v3991
    %v4886 = vunpack.c.h.b16 %v3991
    %v4887 = vunpack.c.l.b16 %v3992
    %v4888 = vunpack.c.h.b16 %v3992
    %v4889 = vunpack.c.l.b16 %v3993
    %v4890 = vunpack.c.l.b16 %v3994
    %v4891 = vunpack.c.h.b16 %v3994
    %v4892 = vunpack.c.l.b16 %v3995
    %v4893 = vunpack.c.h.b16 %v3995
    %v4894 = vunpack.c.l.b16 %v3996
    %v4895 = vunpack.c.h.b16 %v3996
    %v4896 = vunpack.c.l.b16 %v3997
    %v4897 = vunpack.c.l.b16 %v3998
    %v4898 = vunpack.c.h.b16 %v3998
    %v4899 = vunpack.c.l.b16 %v3999
    %v4900 = vunpack.c.h.b16 %v3999
    %v4901 = vunpack.c.l.b16 %v4000
    %v4902 = vunpack.c.h.b16 %v4000
    %v4903 = vunpack.c.l.b16 %v4001
    %v4904 = vunpack.c.l.b16 %v4002
    %v4905 = vunpack.c.h.b16 %v4002
    %v4906 = vunpack.c.l.b16 %v4003
    %v4907 = vunpack.c.h.b16 %v4003
    %v4908 = vunpack.c.l.b16 %v4004
    %v4909 = vunpack.c.h.b16 %v4004
    %v4910 = vunpack.c.l.b16 %v4005
    %v4911 = vunpack.c.l.b16 %v4006
    %v4912 = vunpack.c.h.b16 %v4006
    %v4913 = vunpack.c.l.b16 %v4007
    %v4914 = vunpack.c.h.b16 %v4007
    %v4915 = vunpack.c.l.b16 %v4008
    %v4916 = vunpack.c.h.b16 %v4008
    %v4917 = vunpack.c.l.b16 %v4009
    %v4918 = vunpack.c.l.b16 %v4010
    %v4919 = vunpack.c.h.b16 %v4010
    %v4920 = vunpack.c.l.b16 %v4011
    %v4921 = vunpack.c.h.b16 %v4011
    %v4922 = vunpack.c.l.b16 %v4012
    %v4923 = vunpack.c.h.b16 %v4012
    %v4924 = vunpack.c.l.b16 %v4013
    %v4925 = vunpack.c.l.b16 %v4014
    %v4926 = vunpack.c.h.b16 %v4014
    %v4927 = vunpack.c.l.b16 %v4015
    %v4928 = vunpack.c.h.b16 %v4015
    %v4929 = vunpack.c.l.b16 %v4016
    %v4930 = vunpack.c.h.b16 %v4016
    %v4931 = vunpack.c.l.b16 %v4017
    %v4932 = vunpack.c.l.b16 %v4018
    %v4933 = vunpack.c.h.b16 %v4018
    %v4934 = vunpack.c.l.b16 %v4019
    %v4935 = vunpack.c.h.b16 %v4019
    %v4936 = vunpack.c.l.b16 %v4020
    %v4937 = vunpack.c.h.b16 %v4020
    %v4938 = vunpack.c.l.b16 %v4021
    %v4939 = vpack.c.b16 %v4386, %v4379
    %v4940 = vpack.c.b16 %v4387, %v4380
    %v4941 = vpack.c.b16 %v4388, %v4381
    %v4942 = vpack.c.b16 %v4389, %v4382
    %v4943 = vpack.c.b16 %v4390, %v4383
    %v4944 = vpack.c.b16 %v4391, %v4384
    %v4945 = vpack.c.b16 %v4392, %v4385
    %v4946 = vpack.c.b16 %v4400, %v4393
    %v4947 = vpack.c.b16 %v4401, %v4394
    %v4948 = vpack.c.b16 %v4402, %v4395
    %v4949 = vpack.c.b16 %v4403, %v4396
    %v4950 = vpack.c.b16 %v4404, %v4397
    %v4951 = vpack.c.b16 %v4405, %v4398
    %v4952 = vpack.c.b16 %v4406, %v4399
    %v4953 = vpack.c.b16 %v4414, %v4407
    %v4954 = vpack.c.b16 %v4415, %v4408
    %v4955 = vpack.c.b16 %v4416, %v4409
    %v4956 = vpack.c.b16 %v4417, %v4410
    %v4957 = vpack.c.b16 %v4418, %v4411
    %v4958 = vpack.c.b16 %v4419, %v4412
    %v4959 = vpack.c.b16 %v4420, %v4413
    %v4960 = vpack.c.b16 %v4428, %v4421
    %v4961 = vpack.c.b16 %v4429, %v4422
    %v4962 = vpack.c.b16 %v4430, %v4423
    %v4963 = vpack.c.b16 %v4431, %v4424
    %v4964 = vpack.c.b16 %v4432, %v4425
    %v4965 = vpack.c.b16 %v4433, %v4426
    %v4966 = vpack.c.b16 %v4434, %v4427
    %v4967 = vpack.c.b16 %v4442, %v4435
    %v4968 = vpack.c.b16 %v4443, %v4436
    %v4969 = vpack.c.b16 %v4444, %v4437
    %v4970 = vpack.c.b16 %v4445, %v4438
    %v4971 = vpack.c.b16 %v4446, %v4439
    %v4972 = vpack.c.b16 %v4447, %v4440
    %v4973 = vpack.c.b16 %v4448, %v4441
    %v4974 = vpack.c.b16 %v4456, %v4449
    %v4975 = vpack.c.b16 %v4457, %v4450
    %v4976 = vpack.c.b16 %v4458, %v4451
    %v4977 = vpack.c.b16 %v4459, %v4452
    %v4978 = vpack.c.b16 %v4460, %v4453
    %v4979 = vpack.c.b16 %v4461, %v4454
    %v4980 = vpack.c.b16 %v4462, %v4455
    %v4981 = vpack.c.b16 %v4470, %v4463
    %v4982 = vpack.c.b16 %v4471, %v4464
    %v4983 = vpack.c.b16 %v4472, %v4465
    %v4984 = vpack.c.b16 %v4473, %v4466
    %v4985 = vpack.c.b16 %v4474, %v4467
    %v4986 = vpack.c.b16 %v4475, %v4468
    %v4987 = vpack.c.b16 %v4476, %v4469
    %v4988 = vpack.c.b16 %v4484, %v4477
    %v4989 = vpack.c.b16 %v4485, %v4478
    %v4990 = vpack.c.b16 %v4486, %v4479
    %v4991 = vpack.c.b16 %v4487, %v4480
    %v4992 = vpack.c.b16 %v4488, %v4481
    %v4993 = vpack.c.b16 %v4489, %v4482
    %v4994 = vpack.c.b16 %v4490, %v4483
    %v4995 = vpack.c.b16 %v4498, %v4491
    %v4996 = vpack.c.b16 %v4499, %v4492
    %v4997 = vpack.c.b16 %v4500, %v4493
    %v4998 = vpack.c.b16 %v4501, %v4494
    %v4999 = vpack.c.b16 %v4502, %v4495
    %v5000 = vpack.c.b16 %v4503, %v4496
    %v5001 = vpack.c.b16 %v4504, %v4497
    %v5002 = vpack.c.b16 %v4512, %v4505
    %v5003 = vpack.c.b16 %v4513, %v4506
    %v5004 = vpack.c.b16 %v4514, %v4507
    %v5005 = vpack.c.b16 %v4515, %v4508
    %v5006 = vpack.c.b16 %v4516, %v4509
    %v5007 = vpack.c.b16 %v4517, %v4510
    %v5008 = vpack.c.b16 %v4518, %v4511
    %v5009 = vpack.c.b16 %v4526, %v4519
    %v5010 = vpack.c.b16 %v4527, %v4520
    %v5011 = vpack.c.b16 %v4528, %v4521
    %v5012 = vpack.c.b16 %v4529, %v4522
    %v5013 = vpack.c.b16 %v4530, %v4523
    %v5014 = vpack.c.b16 %v4531, %v4524
    %v5015 = vpack.c.b16 %v4532, %v4525
    %v5016 = vpack.c.b16 %v4540, %v4533
    %v5017 = vpack.c.b16 %v4541, %v4534
    %v5018 = vpack.c.b16 %v4542, %v4535
    %v5019 = vpack.c.b16 %v4543, %v4536
    %v5020 = vpack.c.b16 %v4544, %v4537
    %v5021 = vpack.c.b16 %v4545, %v4538
    %v5022 = vpack.c.b16 %v4546, %v4539
    %v5023 = vpack.c.b16 %v4554, %v4547
    %v5024 = vpack.c.b16 %v4555, %v4548
    %v5025 = vpack.c.b16 %v4556, %v4549
    %v5026 = vpack.c.b16 %v4557, %v4550
    %v5027 = vpack.c.b16 %v4558, %v4551
    %v5028 = vpack.c.b16 %v4559, %v4552
    %v5029 = vpack.c.b16 %v4560, %v4553
    %v5030 = vpack.c.b16 %v4568, %v4561
    %v5031 = vpack.c.b16 %v4569, %v4562
    %v5032 = vpack.c.b16 %v4570, %v4563
    %v5033 = vpack.c.b16 %v4571, %v4564
    %v5034 = vpack.c.b16 %v4572, %v4565
    %v5035 = vpack.c.b16 %v4573, %v4566
    %v5036 = vpack.c.b16 %v4574, %v4567
    %v5037 = vpack.c.b16 %v4582, %v4575
    %v5038 = vpack.c.b16 %v4583, %v4576
    %v5039 = vpack.c.b16 %v4584, %v4577
    %v5040 = vpack.c.b16 %v4585, %v4578
    %v5041 = vpack.c.b16 %v4586, %v4579
    %v5042 = vpack.c.b16 %v4587, %v4580
    %v5043 = vpack.c.b16 %v4588, %v4581
    %v5044 = vpack.c.b16 %v4596, %v4589
    %v5045 = vpack.c.b16 %v4597, %v4590
    %v5046 = vpack.c.b16 %v4598, %v4591
    %v5047 = vpack.c.b16 %v4599, %v4592
    %v5048 = vpack.c.b16 %v4600, %v4593
    %v5049 = vpack.c.b16 %v4601, %v4594
    %v5050 = vpack.c.b16 %v4602, %v4595
    %v5051 = vpack.c.b16 %v4610, %v4603
    %v5052 = vpack.c.b16 %v4611, %v4604
    %v5053 = vpack.c.b16 %v4612, %v4605
    %v5054 = vpack.c.b16 %v4613, %v4606
    %v5055 = vpack.c.b16 %v4614, %v4607
    %v5056 = vpack.c.b16 %v4615, %v4608
    %v5057 = vpack.c.b16 %v4616, %v4609
    %v5058 = vpack.c.b16 %v4624, %v4617
    %v5059 = vpack.c.b16 %v4625, %v4618
    %v5060 = vpack.c.b16 %v4626, %v4619
    %v5061 = vpack.c.b16 %v4627, %v4620
    %v5062 = vpack.c.b16 %v4628, %v4621
    %v5063 = vpack.c.b16 %v4629, %v4622
    %v5064 = vpack.c.b16 %v4630, %v4623
    %v5065 = vpack.c.b16 %v4638, %v4631
    %v5066 = vpack.c.b16 %v4639, %v4632
    %v5067 = vpack.c.b16 %v4640, %v4633
    %v5068 = vpack.c.b16 %v4641, %v4634
    %v5069 = vpack.c.b16 %v4642, %v4635
    %v5070 = vpack.c.b16 %v4643, %v4636
    %v5071 = vpack.c.b16 %v4644, %v4637
    %v5072 = vpack.c.b16 %v4652, %v4645
    %v5073 = vpack.c.b16 %v4653, %v4646
    %v5074 = vpack.c.b16 %v4654, %v4647
    %v5075 = vpack.c.b16 %v4655, %v4648
    %v5076 = vpack.c.b16 %v4656, %v4649
    %v5077 = vpack.c.b16 %v4657, %v4650
    %v5078 = vpack.c.b16 %v4658, %v4651
    %v5079 = vpack.c.b16 %v4666, %v4659
    %v5080 = vpack.c.b16 %v4667, %v4660
    %v5081 = vpack.c.b16 %v4668, %v4661
    %v5082 = vpack.c.b16 %v4669, %v4662
    %v5083 = vpack.c.b16 %v4670, %v4663
    %v5084 = vpack.c.b16 %v4671, %v4664
    %v5085 = vpack.c.b16 %v4672, %v4665
    %v5086 = vpack.c.b16 %v4680, %v4673
    %v5087 = vpack.c.b16 %v4681, %v4674
    %v5088 = vpack.c.b16 %v4682, %v4675
    %v5089 = vpack.c.b16 %v4683, %v4676
    %v5090 = vpack.c.b16 %v4684, %v4677
    %v5091 = vpack.c.b16 %v4685, %v4678
    %v5092 = vpack.c.b16 %v4686, %v4679
    %v5093 = vpack.c.b16 %v4694, %v4687
    %v5094 = vpack.c.b16 %v4695, %v4688
    %v5095 = vpack.c.b16 %v4696, %v4689
    %v5096 = vpack.c.b16 %v4697, %v4690
    %v5097 = vpack.c.b16 %v4698, %v4691
    %v5098 = vpack.c.b16 %v4699, %v4692
    %v5099 = vpack.c.b16 %v4700, %v4693
    %v5100 = vpack.c.b16 %v4708, %v4701
    %v5101 = vpack.c.b16 %v4709, %v4702
    %v5102 = vpack.c.b16 %v4710, %v4703
    %v5103 = vpack.c.b16 %v4711, %v4704
    %v5104 = vpack.c.b16 %v4712, %v4705
    %v5105 = vpack.c.b16 %v4713, %v4706
    %v5106 = vpack.c.b16 %v4714, %v4707
    %v5107 = vpack.c.b16 %v4722, %v4715
    %v5108 = vpack.c.b16 %v4723, %v4716
    %v5109 = vpack.c.b16 %v4724, %v4717
    %v5110 = vpack.c.b16 %v4725, %v4718
    %v5111 = vpack.c.b16 %v4726, %v4719
    %v5112 = vpack.c.b16 %v4727, %v4720
    %v5113 = vpack.c.b16 %v4728, %v4721
    %v5114 = vpack.c.b16 %v4736, %v4729
    %v5115 = vpack.c.b16 %v4737, %v4730
    %v5116 = vpack.c.b16 %v4738, %v4731
    %v5117 = vpack.c.b16 %v4739, %v4732
    %v5118 = vpack.c.b16 %v4740, %v4733
    %v5119 = vpack.c.b16 %v4741, %v4734
    %v5120 = vpack.c.b16 %v4742, %v4735
    %v5121 = vpack.c.b16 %v4750, %v4743
    %v5122 = vpack.c.b16 %v4751, %v4744
    %v5123 = vpack.c.b16 %v4752, %v4745
    %v5124 = vpack.c.b16 %v4753, %v4746
    %v5125 = vpack.c.b16 %v4754, %v4747
    %v5126 = vpack.c.b16 %v4755, %v4748
    %v5127 = vpack.c.b16 %v4756, %v4749
    %v5128 = vpack.c.b16 %v4764, %v4757
    %v5129 = vpack.c.b16 %v4765, %v4758
    %v5130 = vpack.c.b16 %v4766, %v4759
    %v5131 = vpack.c.b16 %v4767, %v4760
    %v5132 = vpack.c.b16 %v4768, %v4761
    %v5133 = vpack.c.b16 %v4769, %v4762
    %v5134 = vpack.c.b16 %v4770, %v4763
    %v5135 = vpack.c.b16 %v4778, %v4771
    %v5136 = vpack.c.b16 %v4779, %v4772
    %v5137 = vpack.c.b16 %v4780, %v4773
    %v5138 = vpack.c.b16 %v4781, %v4774
    %v5139 = vpack.c.b16 %v4782, %v4775
    %v5140 = vpack.c.b16 %v4783, %v4776
    %v5141 = vpack.c.b16 %v4784, %v4777
    %v5142 = vpack.c.b16 %v4792, %v4785
    %v5143 = vpack.c.b16 %v4793, %v4786
    %v5144 = vpack.c.b16 %v4794, %v4787
    %v5145 = vpack.c.b16 %v4795, %v4788
    %v5146 = vpack.c.b16 %v4796, %v4789
    %v5147 = vpack.c.b16 %v4797, %v4790
    %v5148 = vpack.c.b16 %v4798, %v4791
    %v5149 = vpack.c.b16 %v4806, %v4799
    %v5150 = vpack.c.b16 %v4807, %v4800
    %v5151 = vpack.c.b16 %v4808, %v4801
    %v5152 = vpack.c.b16 %v4809, %v4802
    %v5153 = vpack.c.b16 %v4810, %v4803
    %v5154 = vpack.c.b16 %v4811, %v4804
    %v5155 = vpack.c.b16 %v4812, %v4805
    %v5156 = vpack.c.b16 %v4820, %v4813
    %v5157 = vpack.c.b16 %v4821, %v4814
    %v5158 = vpack.c.b16 %v4822, %v4815
    %v5159 = vpack.c.b16 %v4823, %v4816
    %v5160 = vpack.c.b16 %v4824, %v4817
    %v5161 = vpack.c.b16 %v4825, %v4818
    %v5162 = vpack.c.b16 %v4826, %v4819
    %v5163 = vpack.c.b16 %v4834, %v4827
    %v5164 = vpack.c.b16 %v4835, %v4828
    %v5165 = vpack.c.b16 %v4836, %v4829
    %v5166 = vpack.c.b16 %v4837, %v4830
    %v5167 = vpack.c.b16 %v4838, %v4831
    %v5168 = vpack.c.b16 %v4839, %v4832
    %v5169 = vpack.c.b16 %v4840, %v4833
    %v5170 = vpack.c.b16 %v4848, %v4841
    %v5171 = vpack.c.b16 %v4849, %v4842
    %v5172 = vpack.c.b16 %v4850, %v4843
    %v5173 = vpack.c.b16 %v4851, %v4844
    %v5174 = vpack.c.b16 %v4852, %v4845
    %v5175 = vpack.c.b16 %v4853, %v4846
    %v5176 = vpack.c.b16 %v4854, %v4847
    %v5177 = vpack.c.b16 %v4862, %v4855
    %v5178 = vpack.c.b16 %v4863, %v4856
    %v5179 = vpack.c.b16 %v4864, %v4857
    %v5180 = vpack.c.b16 %v4865, %v4858
    %v5181 = vpack.c.b16 %v4866, %v4859
    %v5182 = vpack.c.b16 %v4867, %v4860
    %v5183 = vpack.c.b16 %v4868, %v4861
    %v5184 = vpack.c.b16 %v4876, %v4869
    %v5185 = vpack.c.b16 %v4877, %v4870
    %v5186 = vpack.c.b16 %v4878, %v4871
    %v5187 = vpack.c.b16 %v4879, %v4872
    %v5188 = vpack.c.b16 %v4880, %v4873
    %v5189 = vpack.c.b16 %v4881, %v4874
    %v5190 = vpack.c.b16 %v4882, %v4875
    %v5191 = vpack.c.b16 %v4890, %v4883
    %v5192 = vpack.c.b16 %v4891, %v4884
    %v5193 = vpack.c.b16 %v4892, %v4885
    %v5194 = vpack.c.b16 %v4893, %v4886
    %v5195 = vpack.c.b16 %v4894, %v4887
    %v5196 = vpack.c.b16 %v4895, %v4888
    %v5197 = vpack.c.b16 %v4896, %v4889
    %v5198 = vpack.c.b16 %v4904, %v4897
    %v5199 = vpack.c.b16 %v4905, %v4898
    %v5200 = vpack.c.b16 %v4906, %v4899
    %v5201 = vpack.c.b16 %v4907, %v4900
    %v5202 = vpack.c.b16 %v4908, %v4901
    %v5203 = vpack.c.b16 %v4909, %v4902
    %v5204 = vpack.c.b16 %v4910, %v4903
    %v5205 = vpack.c.b16 %v4918, %v4911
    %v5206 = vpack.c.b16 %v4919, %v4912
    %v5207 = vpack.c.b16 %v4920, %v4913
    %v5208 = vpack.c.b16 %v4921, %v4914
    %v5209 = vpack.c.b16 %v4922, %v4915
    %v5210 = vpack.c.b16 %v4923, %v4916
    %v5211 = vpack.c.b16 %v4924, %v4917
    %v5212 = vpack.c.b16 %v4932, %v4925
    %v5213 = vpack.c.b16 %v4933, %v4926
    %v5214 = vpack.c.b16 %v4934, %v4927
    %v5215 = vpack.c.b16 %v4935, %v4928
    %v5216 = vpack.c.b16 %v4936, %v4929
    %v5217 = vpack.c.b16 %v4937, %v4930
    %v5218 = vpack.c.b16 %v4938, %v4931
    %5499 = vmatprep.subr.bf16.mxu0 %v4940
    %5500 = vmatpush1.bf16.msra.mxu0 %v4939
    %5501 = vmatprep.subr.bf16.mxu0 %v4947
    %5502 = vmatpush1.bf16.msra.mxu0 %v4946
    %5503 = vmatprep.subr.bf16.mxu0 %v4954
    %5504 = vmatpush1.bf16.msra.mxu0 %v4953
    %5505 = vmatprep.subr.bf16.mxu0 %v4961
    %5506 = vmatpush1.bf16.msra.mxu0 %v4960
    %5507 = vmatprep.subr.bf16.mxu0 %v4968
    %5508 = vmatpush1.bf16.msra.mxu0 %v4967
    %5509 = vmatprep.subr.bf16.mxu0 %v4975
    %5510 = vmatpush1.bf16.msra.mxu0 %v4974
    %5511 = vmatprep.subr.bf16.mxu0 %v4982
    %5512 = vmatpush1.bf16.msra.mxu0 %v4981
    %5513 = vmatprep.subr.bf16.mxu0 %v4989
    %5514 = vmatpush1.bf16.msra.mxu0 %v4988
    %5515 = vmatprep.subr.bf16.mxu0 %v4996
    %5516 = vmatpush1.bf16.msra.mxu0 %v4995
    %5517 = vmatprep.subr.bf16.mxu0 %v5003
    %5518 = vmatpush1.bf16.msra.mxu0 %v5002
    %5519 = vmatprep.subr.bf16.mxu0 %v5010
    %5520 = vmatpush1.bf16.msra.mxu0 %v5009
    %5521 = vmatprep.subr.bf16.mxu0 %v5017
    %5522 = vmatpush1.bf16.msra.mxu0 %v5016
    %5523 = vmatprep.subr.bf16.mxu0 %v5024
    %5524 = vmatpush1.bf16.msra.mxu0 %v5023
    %5525 = vmatprep.subr.bf16.mxu0 %v5031
    %5526 = vmatpush1.bf16.msra.mxu0 %v5030
    %5527 = vmatprep.subr.bf16.mxu0 %v5038
    %5528 = vmatpush1.bf16.msra.mxu0 %v5037
    %5529 = vmatprep.subr.bf16.mxu0 %v5045
    %5530 = vmatpush1.bf16.msra.mxu0 %v5044
    %5531 = vmatprep.mubr.bf16.mxu0 %v3698
    %5532 = vmatmul.mubr.bf16.gmra.mrb[0].mxu0 %v3697
    %v5533 = vpop.f32.mrb[0].mxu0
    %v5534 = vadd.f32 %v4027, %v5533
    %v5535 = vpop.f32.mrb[0].mxu0
    %v5536 = vadd.f32 %v4031, %v5535
    %v5537 = vpop.f32.mrb[0].mxu0
    %v5538 = vpop.f32.mrb[0].mxu0
    %5539 = vdwg.mxu0
    %5540 = vmatprep.subr.bf16.mxu0 %v5052
    %5541 = vmatpush1.bf16.msra.mxu0 %v5051
    %5542 = vmatprep.subr.bf16.mxu0 %v5059
    %5543 = vmatpush1.bf16.msra.mxu0 %v5058
    %5544 = vmatprep.subr.bf16.mxu0 %v5066
    %5545 = vmatpush1.bf16.msra.mxu0 %v5065
    %5546 = vmatprep.subr.bf16.mxu0 %v5073
    %5547 = vmatpush1.bf16.msra.mxu0 %v5072
    %5548 = vmatprep.subr.bf16.mxu0 %v5080
    %5549 = vmatpush1.bf16.msra.mxu0 %v5079
    %5550 = vmatprep.subr.bf16.mxu0 %v5087
    %5551 = vmatpush1.bf16.msra.mxu0 %v5086
    %5552 = vmatprep.subr.bf16.mxu0 %v5094
    %5553 = vmatpush1.bf16.msra.mxu0 %v5093
    %5554 = vmatprep.subr.bf16.mxu0 %v5101
    %5555 = vmatpush1.bf16.msra.mxu0 %v5100
    %5556 = vmatprep.subr.bf16.mxu0 %v5108
    %5557 = vmatpush1.bf16.msra.mxu0 %v5107
    %5558 = vmatprep.subr.bf16.mxu0 %v5115
    %5559 = vmatpush1.bf16.msra.mxu0 %v5114
    %5560 = vmatprep.subr.bf16.mxu0 %v5122
    %5561 = vmatpush1.bf16.msra.mxu0 %v5121
    %5562 = vmatprep.subr.bf16.mxu0 %v5129
    %5563 = vmatpush1.bf16.msra.mxu0 %v5128
    %5564 = vmatprep.subr.bf16.mxu0 %v5136
    %5565 = vmatpush1.bf16.msra.mxu0 %v5135
    %5566 = vmatprep.subr.bf16.mxu0 %v5143
    %5567 = vmatpush1.bf16.msra.mxu0 %v5142
    %5568 = vmatprep.subr.bf16.mxu0 %v5150
    %5569 = vmatpush1.bf16.msra.mxu0 %v5149
    %5570 = vmatprep.subr.bf16.mxu0 %v5157
    %5571 = vmatpush1.bf16.msra.mxu0 %v5156
    %5572 = vmatprep.mubr.bf16.mxu0 %v3700
    %5573 = vmatmul.mubr.bf16.gmra.mrb[0].mxu0 %v3699
    %v5574 = vpop.f32.mrb[0].mxu0
    %v5575 = vadd.f32 %v5534, %v5574
    %v5576 = vpop.f32.mrb[0].mxu0
    %v5577 = vadd.f32 %v5536, %v5576
    %v5578 = vpop.f32.mrb[0].mxu0
    %v5579 = vpop.f32.mrb[0].mxu0
    %5580 = vdwg.mxu0
    %5581 = vmatprep.subr.bf16.mxu0 %v5164
    %5582 = vmatpush1.bf16.msra.mxu0 %v5163
    %5583 = vmatprep.subr.bf16.mxu0 %v5171
    %5584 = vmatpush1.bf16.msra.mxu0 %v5170
    %5585 = vmatprep.subr.bf16.mxu0 %v5178
    %5586 = vmatpush1.bf16.msra.mxu0 %v5177
    %5587 = vmatprep.subr.bf16.mxu0 %v5185
    %5588 = vmatpush1.bf16.msra.mxu0 %v5184
    %5589 = vmatprep.subr.bf16.mxu0 %v5192
    %5590 = vmatpush1.bf16.msra.mxu0 %v5191
    %5591 = vmatprep.subr.bf16.mxu0 %v5199
    %5592 = vmatpush1.bf16.msra.mxu0 %v5198
    %5593 = vmatprep.subr.bf16.mxu0 %v5206
    %5594 = vmatpush1.bf16.msra.mxu0 %v5205
    %5595 = vmatprep.subr.bf16.mxu0 %v5213
    %5596 = vmatpush1.bf16.msra.mxu0 %v5212
    %5597 = vmatprep.subr.bf16.mxu0 0
    %5598 = vmatpush1.bf16.msra.mxu0 0
    %5599 = vmatprep.subr.bf16.mxu0 0
    %5600 = vmatpush1.bf16.msra.mxu0 0
    %5601 = vmatprep.subr.bf16.mxu0 0
    %5602 = vmatpush1.bf16.msra.mxu0 0
    %5603 = vmatprep.subr.bf16.mxu0 0
    %5604 = vmatpush1.bf16.msra.mxu0 0
    %5605 = vmatprep.subr.bf16.mxu0 0
    %5606 = vmatpush1.bf16.msra.mxu0 0
    %5607 = vmatprep.subr.bf16.mxu0 0
    %5608 = vmatpush1.bf16.msra.mxu0 0
    %5609 = vmatprep.subr.bf16.mxu0 0
    %5610 = vmatpush1.bf16.msra.mxu0 0
    %5611 = vmatprep.subr.bf16.mxu0 0
    %5612 = vmatpush1.bf16.msra.mxu0 0
    %5613 = vmatprep.mubr.bf16.mxu0 0
    %5614 = vmatmul.mubr.bf16.gmra.mrb[0].mxu0 %v3701
    %v5615 = vpop.f32.mrb[0].mxu0
    %v5616 = vadd.f32 %v5575, %v5615
    %v5617 = vpop.f32.mrb[0].mxu0
    %v5618 = vadd.f32 %v5577, %v5617
    %v5619 = vpop.f32.mrb[0].mxu0
    %v5620 = vpop.f32.mrb[0].mxu0
    %5621 = vdwg.mxu0
    %5622 = vmatprep.subr.bf16.mxu0 %v4942
    %5623 = vmatpush1.bf16.msra.mxu0 %v4941
    %5624 = vmatprep.subr.bf16.mxu0 %v4949
    %5625 = vmatpush1.bf16.msra.mxu0 %v4948
    %5626 = vmatprep.subr.bf16.mxu0 %v4956
    %5627 = vmatpush1.bf16.msra.mxu0 %v4955
    %5628 = vmatprep.subr.bf16.mxu0 %v4963
    %5629 = vmatpush1.bf16.msra.mxu0 %v4962
    %5630 = vmatprep.subr.bf16.mxu0 %v4970
    %5631 = vmatpush1.bf16.msra.mxu0 %v4969
    %5632 = vmatprep.subr.bf16.mxu0 %v4977
    %5633 = vmatpush1.bf16.msra.mxu0 %v4976
    %5634 = vmatprep.subr.bf16.mxu0 %v4984
    %5635 = vmatpush1.bf16.msra.mxu0 %v4983
    %5636 = vmatprep.subr.bf16.mxu0 %v4991
    %5637 = vmatpush1.bf16.msra.mxu0 %v4990
    %5638 = vmatprep.subr.bf16.mxu0 %v4998
    %5639 = vmatpush1.bf16.msra.mxu0 %v4997
    %5640 = vmatprep.subr.bf16.mxu0 %v5005
    %5641 = vmatpush1.bf16.msra.mxu0 %v5004
    %5642 = vmatprep.subr.bf16.mxu0 %v5012
    %5643 = vmatpush1.bf16.msra.mxu0 %v5011
    %5644 = vmatprep.subr.bf16.mxu0 %v5019
    %5645 = vmatpush1.bf16.msra.mxu0 %v5018
    %5646 = vmatprep.subr.bf16.mxu0 %v5026
    %5647 = vmatpush1.bf16.msra.mxu0 %v5025
    %5648 = vmatprep.subr.bf16.mxu0 %v5033
    %5649 = vmatpush1.bf16.msra.mxu0 %v5032
    %5650 = vmatprep.subr.bf16.mxu0 %v5040
    %5651 = vmatpush1.bf16.msra.mxu0 %v5039
    %5652 = vmatprep.subr.bf16.mxu0 %v5047
    %5653 = vmatpush1.bf16.msra.mxu0 %v5046
    %5654 = vmatprep.mubr.bf16.mxu0 %v3698
    %5655 = vmatmul.mubr.bf16.gmra.mrb[0].mxu0 %v3697
    %v5656 = vpop.f32.mrb[0].mxu0
    %v5657 = vadd.f32 %v4035, %v5656
    %v5658 = vpop.f32.mrb[0].mxu0
    %v5659 = vadd.f32 %v4039, %v5658
    %v5660 = vpop.f32.mrb[0].mxu0
    %v5661 = vpop.f32.mrb[0].mxu0
    %5662 = vdwg.mxu0
    %5663 = vmatprep.subr.bf16.mxu0 %v5054
    %5664 = vmatpush1.bf16.msra.mxu0 %v5053
    %5665 = vmatprep.subr.bf16.mxu0 %v5061
    %5666 = vmatpush1.bf16.msra.mxu0 %v5060
    %5667 = vmatprep.subr.bf16.mxu0 %v5068
    %5668 = vmatpush1.bf16.msra.mxu0 %v5067
    %5669 = vmatprep.subr.bf16.mxu0 %v5075
    %5670 = vmatpush1.bf16.msra.mxu0 %v5074
    %5671 = vmatprep.subr.bf16.mxu0 %v5082
    %5672 = vmatpush1.bf16.msra.mxu0 %v5081
    %5673 = vmatprep.subr.bf16.mxu0 %v5089
    %5674 = vmatpush1.bf16.msra.mxu0 %v5088
    %5675 = vmatprep.subr.bf16.mxu0 %v5096
    %5676 = vmatpush1.bf16.msra.mxu0 %v5095
    %5677 = vmatprep.subr.bf16.mxu0 %v5103
    %5678 = vmatpush1.bf16.msra.mxu0 %v5102
    %5679 = vmatprep.subr.bf16.mxu0 %v5110
    %5680 = vmatpush1.bf16.msra.mxu0 %v5109
    %5681 = vmatprep.subr.bf16.mxu0 %v5117
    %5682 = vmatpush1.bf16.msra.mxu0 %v5116
    %5683 = vmatprep.subr.bf16.mxu0 %v5124
    %5684 = vmatpush1.bf16.msra.mxu0 %v5123
    %5685 = vmatprep.subr.bf16.mxu0 %v5131
    %5686 = vmatpush1.bf16.msra.mxu0 %v5130
    %5687 = vmatprep.subr.bf16.mxu0 %v5138
    %5688 = vmatpush1.bf16.msra.mxu0 %v5137
    %5689 = vmatprep.subr.bf16.mxu0 %v5145
    %5690 = vmatpush1.bf16.msra.mxu0 %v5144
    %5691 = vmatprep.subr.bf16.mxu0 %v5152
    %5692 = vmatpush1.bf16.msra.mxu0 %v5151
    %5693 = vmatprep.subr.bf16.mxu0 %v5159
    %5694 = vmatpush1.bf16.msra.mxu0 %v5158
    %5695 = vmatprep.mubr.bf16.mxu0 %v3700
    %5696 = vmatmul.mubr.bf16.gmra.mrb[0].mxu0 %v3699
    %v5697 = vpop.f32.mrb[0].mxu0
    %v5698 = vadd.f32 %v5657, %v5697
    %v5699 = vpop.f32.mrb[0].mxu0
    %v5700 = vadd.f32 %v5659, %v5699
    %v5701 = vpop.f32.mrb[0].mxu0
    %v5702 = vpop.f32.mrb[0].mxu0
    %5703 = vdwg.mxu0
    %5704 = vmatprep.subr.bf16.mxu0 %v5166
    %5705 = vmatpush1.bf16.msra.mxu0 %v5165
    %5706 = vmatprep.subr.bf16.mxu0 %v5173
    %5707 = vmatpush1.bf16.msra.mxu0 %v5172
    %5708 = vmatprep.subr.bf16.mxu0 %v5180
    %5709 = vmatpush1.bf16.msra.mxu0 %v5179
    %5710 = vmatprep.subr.bf16.mxu0 %v5187
    %5711 = vmatpush1.bf16.msra.mxu0 %v5186
    %5712 = vmatprep.subr.bf16.mxu0 %v5194
    %5713 = vmatpush1.bf16.msra.mxu0 %v5193
    %5714 = vmatprep.subr.bf16.mxu0 %v5201
    %5715 = vmatpush1.bf16.msra.mxu0 %v5200
    %5716 = vmatprep.subr.bf16.mxu0 %v5208
    %5717 = vmatpush1.bf16.msra.mxu0 %v5207
    %5718 = vmatprep.subr.bf16.mxu0 %v5215
    %5719 = vmatpush1.bf16.msra.mxu0 %v5214
    %5720 = vmatprep.subr.bf16.mxu0 0
    %5721 = vmatpush1.bf16.msra.mxu0 0
    %5722 = vmatprep.subr.bf16.mxu0 0
    %5723 = vmatpush1.bf16.msra.mxu0 0
    %5724 = vmatprep.subr.bf16.mxu0 0
    %5725 = vmatpush1.bf16.msra.mxu0 0
    %5726 = vmatprep.subr.bf16.mxu0 0
    %5727 = vmatpush1.bf16.msra.mxu0 0
    %5728 = vmatprep.subr.bf16.mxu0 0
    %5729 = vmatpush1.bf16.msra.mxu0 0
    %5730 = vmatprep.subr.bf16.mxu0 0
    %5731 = vmatpush1.bf16.msra.mxu0 0
    %5732 = vmatprep.subr.bf16.mxu0 0
    %5733 = vmatpush1.bf16.msra.mxu0 0
    %5734 = vmatprep.subr.bf16.mxu0 0
    %5735 = vmatpush1.bf16.msra.mxu0 0
    %5736 = vmatprep.mubr.bf16.mxu0 0
    %5737 = vmatmul.mubr.bf16.gmra.mrb[0].mxu0 %v3701
    %v5738 = vpop.f32.mrb[0].mxu0
    %v5739 = vadd.f32 %v5698, %v5738
    %v5740 = vpop.f32.mrb[0].mxu0
    %v5741 = vadd.f32 %v5700, %v5740
    %v5742 = vpop.f32.mrb[0].mxu0
    %v5743 = vpop.f32.mrb[0].mxu0
    %5744 = vdwg.mxu0
    %5745 = vmatprep.subr.bf16.mxu0 %v4944
    %5746 = vmatpush1.bf16.msra.mxu0 %v4943
    %5747 = vmatprep.subr.bf16.mxu0 %v4951
    %5748 = vmatpush1.bf16.msra.mxu0 %v4950
    %5749 = vmatprep.subr.bf16.mxu0 %v4958
    %5750 = vmatpush1.bf16.msra.mxu0 %v4957
    %5751 = vmatprep.subr.bf16.mxu0 %v4965
    %5752 = vmatpush1.bf16.msra.mxu0 %v4964
    %5753 = vmatprep.subr.bf16.mxu0 %v4972
    %5754 = vmatpush1.bf16.msra.mxu0 %v4971
    %5755 = vmatprep.subr.bf16.mxu0 %v4979
    %5756 = vmatpush1.bf16.msra.mxu0 %v4978
    %5757 = vmatprep.subr.bf16.mxu0 %v4986
    %5758 = vmatpush1.bf16.msra.mxu0 %v4985
    %5759 = vmatprep.subr.bf16.mxu0 %v4993
    %5760 = vmatpush1.bf16.msra.mxu0 %v4992
    %5761 = vmatprep.subr.bf16.mxu0 %v5000
    %5762 = vmatpush1.bf16.msra.mxu0 %v4999
    %5763 = vmatprep.subr.bf16.mxu0 %v5007
    %5764 = vmatpush1.bf16.msra.mxu0 %v5006
    %5765 = vmatprep.subr.bf16.mxu0 %v5014
    %5766 = vmatpush1.bf16.msra.mxu0 %v5013
    %5767 = vmatprep.subr.bf16.mxu0 %v5021
    %5768 = vmatpush1.bf16.msra.mxu0 %v5020
    %5769 = vmatprep.subr.bf16.mxu0 %v5028
    %5770 = vmatpush1.bf16.msra.mxu0 %v5027
    %5771 = vmatprep.subr.bf16.mxu0 %v5035
    %5772 = vmatpush1.bf16.msra.mxu0 %v5034
    %5773 = vmatprep.subr.bf16.mxu0 %v5042
    %5774 = vmatpush1.bf16.msra.mxu0 %v5041
    %5775 = vmatprep.subr.bf16.mxu0 %v5049
    %5776 = vmatpush1.bf16.msra.mxu0 %v5048
    %5777 = vmatprep.mubr.bf16.mxu0 %v3698
    %5778 = vmatmul.mubr.bf16.gmra.mrb[0].mxu0 %v3697
    %v5779 = vpop.f32.mrb[0].mxu0
    %v5780 = vadd.f32 %v4043, %v5779
    %v5781 = vpop.f32.mrb[0].mxu0
    %v5782 = vadd.f32 %v4047, %v5781
    %v5783 = vpop.f32.mrb[0].mxu0
    %v5784 = vpop.f32.mrb[0].mxu0
    %5785 = vdwg.mxu0
    %5786 = vmatprep.subr.bf16.mxu0 %v5056
    %5787 = vmatpush1.bf16.msra.mxu0 %v5055
    %5788 = vmatprep.subr.bf16.mxu0 %v5063
    %5789 = vmatpush1.bf16.msra.mxu0 %v5062
    %5790 = vmatprep.subr.bf16.mxu0 %v5070
    %5791 = vmatpush1.bf16.msra.mxu0 %v5069
    %5792 = vmatprep.subr.bf16.mxu0 %v5077
    %5793 = vmatpush1.bf16.msra.mxu0 %v5076
    %5794 = vmatprep.subr.bf16.mxu0 %v5084
    %5795 = vmatpush1.bf16.msra.mxu0 %v5083
    %5796 = vmatprep.subr.bf16.mxu0 %v5091
    %5797 = vmatpush1.bf16.msra.mxu0 %v5090
    %5798 = vmatprep.subr.bf16.mxu0 %v5098
    %5799 = vmatpush1.bf16.msra.mxu0 %v5097
    %5800 = vmatprep.subr.bf16.mxu0 %v5105
    %5801 = vmatpush1.bf16.msra.mxu0 %v5104
    %5802 = vmatprep.subr.bf16.mxu0 %v5112
    %5803 = vmatpush1.bf16.msra.mxu0 %v5111
    %5804 = vmatprep.subr.bf16.mxu0 %v5119
    %5805 = vmatpush1.bf16.msra.mxu0 %v5118
    %5806 = vmatprep.subr.bf16.mxu0 %v5126
    %5807 = vmatpush1.bf16.msra.mxu0 %v5125
    %5808 = vmatprep.subr.bf16.mxu0 %v5133
    %5809 = vmatpush1.bf16.msra.mxu0 %v5132
    %5810 = vmatprep.subr.bf16.mxu0 %v5140
    %5811 = vmatpush1.bf16.msra.mxu0 %v5139
    %5812 = vmatprep.subr.bf16.mxu0 %v5147
    %5813 = vmatpush1.bf16.msra.mxu0 %v5146
    %5814 = vmatprep.subr.bf16.mxu0 %v5154
    %5815 = vmatpush1.bf16.msra.mxu0 %v5153
    %5816 = vmatprep.subr.bf16.mxu0 %v5161
    %5817 = vmatpush1.bf16.msra.mxu0 %v5160
    %5818 = vmatprep.mubr.bf16.mxu0 %v3700
    %5819 = vmatmul.mubr.bf16.gmra.mrb[0].mxu0 %v3699
    %v5820 = vpop.f32.mrb[0].mxu0
    %v5821 = vadd.f32 %v5780, %v5820
    %v5822 = vpop.f32.mrb[0].mxu0
    %v5823 = vadd.f32 %v5782, %v5822
    %v5824 = vpop.f32.mrb[0].mxu0
    %v5825 = vpop.f32.mrb[0].mxu0
    %5826 = vdwg.mxu0
    %5827 = vmatprep.subr.bf16.mxu0 %v5168
    %5828 = vmatpush1.bf16.msra.mxu0 %v5167
    %5829 = vmatprep.subr.bf16.mxu0 %v5175
    %5830 = vmatpush1.bf16.msra.mxu0 %v5174
    %5831 = vmatprep.subr.bf16.mxu0 %v5182
    %5832 = vmatpush1.bf16.msra.mxu0 %v5181
    %5833 = vmatprep.subr.bf16.mxu0 %v5189
    %5834 = vmatpush1.bf16.msra.mxu0 %v5188
    %5835 = vmatprep.subr.bf16.mxu0 %v5196
    %5836 = vmatpush1.bf16.msra.mxu0 %v5195
    %5837 = vmatprep.subr.bf16.mxu0 %v5203
    %5838 = vmatpush1.bf16.msra.mxu0 %v5202
    %5839 = vmatprep.subr.bf16.mxu0 %v5210
    %5840 = vmatpush1.bf16.msra.mxu0 %v5209
    %5841 = vmatprep.subr.bf16.mxu0 %v5217
    %5842 = vmatpush1.bf16.msra.mxu0 %v5216
    %5843 = vmatprep.subr.bf16.mxu0 0
    %5844 = vmatpush1.bf16.msra.mxu0 0
    %5845 = vmatprep.subr.bf16.mxu0 0
    %5846 = vmatpush1.bf16.msra.mxu0 0
    %5847 = vmatprep.subr.bf16.mxu0 0
    %5848 = vmatpush1.bf16.msra.mxu0 0
    %5849 = vmatprep.subr.bf16.mxu0 0
    %5850 = vmatpush1.bf16.msra.mxu0 0
    %5851 = vmatprep.subr.bf16.mxu0 0
    %5852 = vmatpush1.bf16.msra.mxu0 0
    %5853 = vmatprep.subr.bf16.mxu0 0
    %5854 = vmatpush1.bf16.msra.mxu0 0
    %5855 = vmatprep.subr.bf16.mxu0 0
    %5856 = vmatpush1.bf16.msra.mxu0 0
    %5857 = vmatprep.subr.bf16.mxu0 0
    %5858 = vmatpush1.bf16.msra.mxu0 0
    %5859 = vmatprep.mubr.bf16.mxu0 0
    %5860 = vmatmul.mubr.bf16.gmra.mrb[0].mxu0 %v3701
    %v5861 = vpop.f32.mrb[0].mxu0
    %v5862 = vadd.f32 %v5821, %v5861
    %v5863 = vpop.f32.mrb[0].mxu0
    %v5864 = vadd.f32 %v5823, %v5863
    %v5865 = vpop.f32.mrb[0].mxu0
    %v5866 = vpop.f32.mrb[0].mxu0
    %5867 = vdwg.mxu0
    %5868 = vmatprep.subr.bf16.mxu0 0
    %5869 = vmatpush1.bf16.msra.mxu0 %v4945
    %5870 = vmatprep.subr.bf16.mxu0 0
    %5871 = vmatpush1.bf16.msra.mxu0 %v4952
    %5872 = vmatprep.subr.bf16.mxu0 0
    %5873 = vmatpush1.bf16.msra.mxu0 %v4959
    %5874 = vmatprep.subr.bf16.mxu0 0
    %5875 = vmatpush1.bf16.msra.mxu0 %v4966
    %5876 = vmatprep.subr.bf16.mxu0 0
    %5877 = vmatpush1.bf16.msra.mxu0 %v4973
    %5878 = vmatprep.subr.bf16.mxu0 0
    %5879 = vmatpush1.bf16.msra.mxu0 %v4980
    %5880 = vmatprep.subr.bf16.mxu0 0
    %5881 = vmatpush1.bf16.msra.mxu0 %v4987
    %5882 = vmatprep.subr.bf16.mxu0 0
    %5883 = vmatpush1.bf16.msra.mxu0 %v4994
    %5884 = vmatprep.subr.bf16.mxu0 0
    %5885 = vmatpush1.bf16.msra.mxu0 %v5001
    %5886 = vmatprep.subr.bf16.mxu0 0
    %5887 = vmatpush1.bf16.msra.mxu0 %v5008
    %5888 = vmatprep.subr.bf16.mxu0 0
    %5889 = vmatpush1.bf16.msra.mxu0 %v5015
    %5890 = vmatprep.subr.bf16.mxu0 0
    %5891 = vmatpush1.bf16.msra.mxu0 %v5022
    %5892 = vmatprep.subr.bf16.mxu0 0
    %5893 = vmatpush1.bf16.msra.mxu0 %v5029
    %5894 = vmatprep.subr.bf16.mxu0 0
    %5895 = vmatpush1.bf16.msra.mxu0 %v5036
    %5896 = vmatprep.subr.bf16.mxu0 0
    %5897 = vmatpush1.bf16.msra.mxu0 %v5043
    %5898 = vmatprep.subr.bf16.mxu0 0
    %5899 = vmatpush1.bf16.msra.mxu0 %v5050
    %5900 = vmatprep.mubr.bf16.mxu0 %v3698
    %5901 = vmatmul.mubr.bf16.gmra.mrb[0].mxu0 %v3697
    %v5902 = vpop.f32.mrb[0].mxu0
    %v5903 = vadd.f32 %v4051, %v5902
    %v5904 = vpop.f32.mrb[0].mxu0
    %v5905 = vpop.f32.mrb[0].mxu0
    %v5906 = vpop.f32.mrb[0].mxu0
    %5907 = vdwg.mxu0
    %5908 = vmatprep.subr.bf16.mxu0 0
    %5909 = vmatpush1.bf16.msra.mxu0 %v5057
    %5910 = vmatprep.subr.bf16.mxu0 0
    %5911 = vmatpush1.bf16.msra.mxu0 %v5064
    %5912 = vmatprep.subr.bf16.mxu0 0
    %5913 = vmatpush1.bf16.msra.mxu0 %v5071
    %5914 = vmatprep.subr.bf16.mxu0 0
    %5915 = vmatpush1.bf16.msra.mxu0 %v5078
    %5916 = vmatprep.subr.bf16.mxu0 0
    %5917 = vmatpush1.bf16.msra.mxu0 %v5085
    %5918 = vmatprep.subr.bf16.mxu0 0
    %5919 = vmatpush1.bf16.msra.mxu0 %v5092
    %5920 = vmatprep.subr.bf16.mxu0 0
    %5921 = vmatpush1.bf16.msra.mxu0 %v5099
    %5922 = vmatprep.subr.bf16.mxu0 0
    %5923 = vmatpush1.bf16.msra.mxu0 %v5106
    %5924 = vmatprep.subr.bf16.mxu0 0
    %5925 = vmatpush1.bf16.msra.mxu0 %v5113
    %5926 = vmatprep.subr.bf16.mxu0 0
    %5927 = vmatpush1.bf16.msra.mxu0 %v5120
    %5928 = vmatprep.subr.bf16.mxu0 0
    %5929 = vmatpush1.bf16.msra.mxu0 %v5127
    %5930 = vmatprep.subr.bf16.mxu0 0
    %5931 = vmatpush1.bf16.msra.mxu0 %v5134
    %5932 = vmatprep.subr.bf16.mxu0 0
    %5933 = vmatpush1.bf16.msra.mxu0 %v5141
    %5934 = vmatprep.subr.bf16.mxu0 0
    %5935 = vmatpush1.bf16.msra.mxu0 %v5148
    %5936 = vmatprep.subr.bf16.mxu0 0
    %5937 = vmatpush1.bf16.msra.mxu0 %v5155
    %5938 = vmatprep.subr.bf16.mxu0 0
    %5939 = vmatpush1.bf16.msra.mxu0 %v5162
    %5940 = vmatprep.mubr.bf16.mxu0 %v3700
    %5941 = vmatmul.mubr.bf16.gmra.mrb[0].mxu0 %v3699
    %v5942 = vpop.f32.mrb[0].mxu0
    %v5943 = vadd.f32 %v5903, %v5942
    %v5944 = vpop.f32.mrb[0].mxu0
    %v5945 = vpop.f32.mrb[0].mxu0
    %v5946 = vpop.f32.mrb[0].mxu0
    %5947 = vdwg.mxu0
    %5948 = vmatprep.subr.bf16.mxu0 0
    %5949 = vmatpush1.bf16.msra.mxu0 %v5169
    %5950 = vmatprep.subr.bf16.mxu0 0
    %5951 = vmatpush1.bf16.msra.mxu0 %v5176
    %5952 = vmatprep.subr.bf16.mxu0 0
    %5953 = vmatpush1.bf16.msra.mxu0 %v5183
    %5954 = vmatprep.subr.bf16.mxu0 0
    %5955 = vmatpush1.bf16.msra.mxu0 %v5190
    %5956 = vmatprep.subr.bf16.mxu0 0
    %5957 = vmatpush1.bf16.msra.mxu0 %v5197
    %5958 = vmatprep.subr.bf16.mxu0 0
    %5959 = vmatpush1.bf16.msra.mxu0 %v5204
    %5960 = vmatprep.subr.bf16.mxu0 0
    %5961 = vmatpush1.bf16.msra.mxu0 %v5211
    %5962 = vmatprep.subr.bf16.mxu0 0
    %5963 = vmatpush1.bf16.msra.mxu0 %v5218
    %5964 = vmatprep.subr.bf16.mxu0 0
    %5965 = vmatpush1.bf16.msra.mxu0 0
    %5966 = vmatprep.subr.bf16.mxu0 0
    %5967 = vmatpush1.bf16.msra.mxu0 0
    %5968 = vmatprep.subr.bf16.mxu0 0
    %5969 = vmatpush1.bf16.msra.mxu0 0
    %5970 = vmatprep.subr.bf16.mxu0 0
    %5971 = vmatpush1.bf16.msra.mxu0 0
    %5972 = vmatprep.subr.bf16.mxu0 0
    %5973 = vmatpush1.bf16.msra.mxu0 0
    %5974 = vmatprep.subr.bf16.mxu0 0
    %5975 = vmatpush1.bf16.msra.mxu0 0
    %5976 = vmatprep.subr.bf16.mxu0 0
    %5977 = vmatpush1.bf16.msra.mxu0 0
    %5978 = vmatprep.subr.bf16.mxu0 0
    %5979 = vmatpush1.bf16.msra.mxu0 0
    %5980 = vmatprep.mubr.bf16.mxu0 0
    %5981 = vmatmul.mubr.bf16.gmra.mrb[0].mxu0 %v3701
    %v5982 = vpop.f32.mrb[0].mxu0
    %v5983 = vadd.f32 %v5943, %v5982
    %v5984 = vpop.f32.mrb[0].mxu0
    %v5985 = vpop.f32.mrb[0].mxu0
    %v5986 = vpop.f32.mrb[0].mxu0
    %5987 = vdwg.mxu0
    %v5988 = vtanh.pop %v5616
    %v5989 = vtanh.pop %v5618
    %v5990 = vtanh.pop %v5739
    %v5991 = vtanh.pop %v5741
    %v5992 = vtanh.pop %v5862
    %v5993 = vtanh.pop %v5864
    %v5994 = vtanh.pop %v5983
    %5995 = vst [vmem:[#allocation19] sm:$0xff] %v5988
    %5996 = vst [vmem:[#allocation19 + $0x8] sm:$0xff] %v5989
    %5997 = vst [vmem:[#allocation19 + $0x10] sm:$0xff] %v5990
    %5998 = vst [vmem:[#allocation19 + $0x18] sm:$0xff] %v5991
    %5999 = vst [vmem:[#allocation19 + $0x20] sm:$0xff] %v5992
    %6000 = vst [vmem:[#allocation19 + $0x28] sm:$0xff] %v5993
    %6001 = vst [vmem:[#allocation19 + $0x30] sm:$0xff] %v5994
    // Predicated region
    $region86: #{tpu_custom_call.1} parent=1 // pred_check
      _
    $region87: #{tpu_custom_call.1} parent=1 // pred_check_branch
      %6003 = sbr.rel (0) target = $region89
    $region88: #{tpu_custom_call.1} parent=1 // pred_region
      %s6005 = ssub.s32 896, 896
      %6006 = vsyncadd [#allocation4], %s6005
      %s6008 = sshll.u32 [#allocation19], 4
      %s6009 = int_to_ptr.vmem [resolvable:$true] %s6008
      %6011 = dma.vmem_to_hbm [thread:$0]  %s6009, 896, %s11, [#allocation4]
    $region89: #{tpu_custom_call.1} parent=1 // pred_fallthru
      _
    // Predicated region
    $region90: #{tpu_custom_call.1} parent=1 // pred_check
      _
    $region91: #{tpu_custom_call.1} parent=1 // pred_check_branch
      %6013 = sbr.rel (0) target = $region93
    $region92: #{tpu_custom_call.1} parent=1 // pred_region
      %6014 = dma.done [#allocation4], 896
    $region93: #{tpu_custom_call.1} parent=1 // pred_fallthru
      _
    %6015 = vsyncpa [#allocation3], 1
    %6016 = vsyncpa [#allocation6], 1
    %6017 = vsyncpa [#allocation9], 1
    %6018 = vsyncpa [#allocation12], 1
    %6019 = vsyncpa [#allocation15], 1
    %6020 = vsyncpa [#allocation18], 1
    %6021 = vsyncpa [#allocation4], 1

</llo_original>
